<compile_context>
chip_gen: v7x
topology: tpu7x:2x2x1
jax: 0.10.0
libtpu: 0.0.40
codegen_flags: <defaults>
</compile_context>

<pallas_src>
import functools

import numpy as np
import jax
import jax.numpy as jnp
from jax.experimental import pallas as pl
from jax.experimental.pallas import tpu as pltpu

# ------------------------- model hyper-params (small) -------------------------
EMBED = 32
HEADS = 4
HEAD_DIM = EMBED // HEADS
FWD_EXP = 4
HIDDEN = FWD_EXP * EMBED
BATCH = 2
SEQ = 8
TOKENS = BATCH * SEQ
QKV_PAD = 128                       # lane-dense packed Wq|Wk|Wv RHS (3*E=96 -> 128)
EPS = 1e-5                          # torch.nn.LayerNorm default


# ============================== in-kernel helpers =============================

def _layernorm(x, gamma, beta):
    """LayerNorm over last dim with affine; x: (T, E), gamma/beta: (1, E)."""
    mean = jnp.mean(x, axis=-1, keepdims=True)
    var = jnp.mean((x - mean) ** 2, axis=-1, keepdims=True)
    return (x - mean) * jax.lax.rsqrt(var + EPS) * gamma + beta


def _project_qkv(q_src, k_src, v_src, wqkv, bqkv):
    """Single packed projection matmul; q/k/v recovered by static slices."""
    t = q_src.shape[0]
    if q_src is k_src and q_src is v_src:
        # Self-attention: one (T, E) @ (E, 128) lane-dense matmul.
        proj = jnp.dot(q_src, wqkv, preferred_element_type=jnp.float32) + bqkv
        q = proj[:, 0:EMBED]
        k = proj[:, EMBED:2 * EMBED]
        v = proj[:, 2 * EMBED:3 * EMBED]
    else:
        # Cross-attention (distinct query/key/value sources): row-stack them so
        # the packed weight is still applied with a single MXU push, then slice
        # the relevant (row-block, column-block) of the result.
        stacked = jnp.concatenate([q_src, k_src, v_src], axis=0)        # (3T, E)
        proj = jnp.dot(stacked, wqkv, preferred_element_type=jnp.float32) + bqkv
        q = proj[0:t, 0:EMBED]
        k = proj[t:2 * t, EMBED:2 * EMBED]
        v = proj[2 * t:3 * t, 2 * EMBED:3 * EMBED]
    return q, k, v


def _attention(q_src, k_src, v_src, is_masked, wqkv, bqkv, wo, bo):
    """Multi-head attention on the flattened (N*L, E) token slab.

    is_masked: (N, L, L) bool (True where scores are masked out), hoisted.
    Only the (L, L) score/softmax/PV core stays per batch / per head; all
    per-token work is batch-fused.
    """
    q, k, v = _project_qkv(q_src, k_src, v_src, wqkv, bqkv)
    kT = k.T                                        # ONE XLU transpose per attention
    scale = jnp.float32(1.0 / (EMBED ** 0.5))       # reference scales by sqrt(embed)

    ctx_rows = []
    for n in range(BATCH):                          # static unroll, N = 2
        r0, r1 = n * SEQ, (n + 1) * SEQ
        mask_n = is_masked[n]                       # (L, L)
        head_outs = []
        for h in range(HEADS):                      # static unroll, H = 4
            c0, c1 = h * HEAD_DIM, (h + 1) * HEAD_DIM
            qh = q[r0:r1, c0:c1]                    # (L, D)
            kTh = kT[c0:c1, r0:r1]                  # (D, L)
            vh = v[r0:r1, c0:c1]                    # (L, D)

            energy = jnp.dot(qh, kTh, preferred_element_type=jnp.float32)
            # masked_fill(mask == 0, -1e20) BEFORE the scale, as in PyTorch.
            energy = jnp.where(mask_n, jnp.float32(-1e20), energy)
            scores = energy * scale

            m = jnp.max(scores, axis=-1, keepdims=True)
            p = jnp.exp(scores - m)
            attn = p / jnp.sum(p, axis=-1, keepdims=True)   # exact divide
            head_outs.append(
                jnp.dot(attn, vh, preferred_element_type=jnp.float32))  # (L, D)
        ctx_rows.append(jnp.concatenate(head_outs, axis=-1))            # (L, E)
    ctx = jnp.concatenate(ctx_rows, axis=0)                             # (T, E)
    # Single fc_out projection over all tokens / heads.
    return jnp.dot(ctx, wo, preferred_element_type=jnp.float32) + bo


# ================================ fused kernel ================================

def _decoder_block_kernel(
        x_ref, val_ref, key_ref, trg_ref, src_ref,
        # masked self-attention (DecoderBlock.attention), packed QKV
        s_wqkv_ref, s_bqkv_ref, s_wo_ref, s_bo_ref,
        n0_g_ref, n0_b_ref,                          # DecoderBlock.norm
        # cross-attention (TransformerBlock.attention), packed QKV
        c_wqkv_ref, c_bqkv_ref, c_wo_ref, c_bo_ref,
        n1_g_ref, n1_b_ref,                          # TransformerBlock.norm1
        f_w1_ref, f_b1_ref, f_w2_ref, f_b2_ref,      # feed_forward
        n2_g_ref, n2_b_ref,                          # TransformerBlock.norm2
        o_ref):
    # ---- hoisted loads & mask compares (done once; loops below are unrolled) --
    x = x_ref[...]                      # (T, E) flattened tokens
    val = val_ref[...]
    key = key_ref[...]
    trg_masked = trg_ref[...] == 0.0    # (N, L, L) bool
    src_masked = src_ref[...] == 0.0

    s_wqkv = s_wqkv_ref[...]; s_bqkv = s_bqkv_ref[...]
    s_wo = s_wo_ref[...];     s_bo = s_bo_ref[...]
    n0_g = n0_g_ref[...];     n0_b = n0_b_ref[...]
    c_wqkv = c_wqkv_ref[...]; c_bqkv = c_bqkv_ref[...]
    c_wo = c_wo_ref[...];     c_bo = c_bo_ref[...]
    n1_g = n1_g_ref[...];     n1_b = n1_b_ref[...]
    f_w1 = f_w1_ref[...];     f_b1 = f_b1_ref[...]
    f_w2 = f_w2_ref[...];     f_b2 = f_b2_ref[...]
    n2_g = n2_g_ref[...];     n2_b = n2_b_ref[...]

    # ---- masked self-attention + Add&Norm (values=keys=queries=x, mask=trg) ---
    attn = _attention(x, x, x, trg_masked, s_wqkv, s_bqkv, s_wo, s_bo)
    query = _layernorm(attn + x, n0_g, n0_b)

    # ---- TransformerBlock(value, key, query, src_mask) ------------------------
    attn2 = _attention(query, key, val, src_masked, c_wqkv, c_bqkv, c_wo, c_bo)
    x2 = _layernorm(attn2 + query, n1_g, n1_b)

    # ---- feed-forward (Linear -> ReLU -> Linear) + Add&Norm -------------------
    hdn = jnp.maximum(
        jnp.dot(x2, f_w1, preferred_element_type=jnp.float32) + f_b1, 0.0)
    ff = jnp.dot(hdn, f_w2, preferred_element_type=jnp.float32) + f_b2

    # TODO(synk): if SEQ/EMBED are scaled up, present this output lane-dense
    # (last dim a multiple of 128) instead of E=32-wide rows.
    o_ref[...] = _layernorm(ff + x2, n2_g, n2_b)


# ================================== wrapper ===================================

def decoder_block(params, x, value, key, src_mask, trg_mask):
    """Single fused pallas_call mirroring DecoderBlock.forward (eval mode)."""
    N, L, E = x.shape
    T = N * L
    sa, ca = params['self_attn'], params['tb_attn']

    def row(v):                      # biases / LN params as (1, F) rows
        return v.reshape(1, -1)

    def pack_qkv(p):                 # [Wq | Wk | Wv] padded to 128 lanes
        w = jnp.concatenate([p['wq'], p['wk'], p['wv']], axis=1)    # (E, 3E)
        b = jnp.concatenate([p['bq'], p['bk'], p['bv']], axis=0)    # (3E,)
        w = jnp.pad(w, ((0, 0), (0, QKV_PAD - 3 * E)))
        b = jnp.pad(b, (0, QKV_PAD - 3 * E))
        return w, row(b)

    s_wqkv, s_bqkv = pack_qkv(sa)
    c_wqkv, c_bqkv = pack_qkv(ca)

    args = (
        x.reshape(T, E), value.reshape(T, E), key.reshape(T, E),
        trg_mask.reshape(N, L, L), src_mask.reshape(N, L, L),
        s_wqkv, s_bqkv, sa['wo'], row(sa['bo']),
        row(params['norm_g']), row(params['norm_b']),
        c_wqkv, c_bqkv, ca['wo'], row(ca['bo']),
        row(params['tb_norm1_g']), row(params['tb_norm1_b']),
        params['ff_w1'], row(params['ff_b1']),
        params['ff_w2'], row(params['ff_b2']),
        row(params['tb_norm2_g']), row(params['tb_norm2_b']),
    )

    vmem_spec = pl.BlockSpec(memory_space=pltpu.MemorySpace.VMEM)
    out = pl.pallas_call(
        _decoder_block_kernel,
        out_shape=jax.ShapeDtypeStruct((T, E), jnp.float32),
        in_specs=[vmem_spec] * len(args),
        out_specs=vmem_spec,
        compiler_params=pltpu.CompilerParams(),
        # No grid: whole problem is one VMEM-resident block (optimal on the
        # single-TC v5e/v6e).  TODO(synk): on v7x, a grid=(BATCH,) with
        # dimension_semantics=("parallel",) would shard batches over the 2 TCs.
    )(*args)
    return out.reshape(N, L, E)


# =============================== parameter init ===============================

def _init_linear(key, fan_in, fan_out):
    kw, kb = jax.random.split(key)
    # weights stored in (in, out) layout (i.e. W^T of torch.nn.Linear.weight)
    w = jax.random.normal(kw, (fan_in, fan_out), jnp.float32) * 0.05
    b = jax.random.normal(kb, (fan_out,), jnp.float32) * 0.05
    return w, b


def _init_attention_params(key):
    k1, k2, k3, k4 = jax.random.split(key, 4)
    wv, bv = _init_linear(k1, EMBED, EMBED)
    wk, bk = _init_linear(k2, EMBED, EMBED)
    wq, bq = _init_linear(k3, EMBED, EMBED)
    wo, bo = _init_linear(k4, EMBED, EMBED)
    return dict(wv=wv, bv=bv, wk=wk, bk=bk, wq=wq, bq=bq, wo=wo, bo=bo)


def init_params(key):
    keys = jax.random.split(key, 4)
    ff1_w, ff1_b = _init_linear(keys[2], EMBED, HIDDEN)
    ff2_w, ff2_b = _init_linear(keys[3], HIDDEN, EMBED)
    return dict(
        self_attn=_init_attention_params(keys[0]),
        norm_g=jnp.ones((EMBED,), jnp.float32),
        norm_b=jnp.zeros((EMBED,), jnp.float32),
        tb_attn=_init_attention_params(keys[1]),
        tb_norm1_g=jnp.ones((EMBED,), jnp.float32),
        tb_norm1_b=jnp.zeros((EMBED,), jnp.float32),
        tb_norm2_g=jnp.ones((EMBED,), jnp.float32),
        tb_norm2_b=jnp.zeros((EMBED,), jnp.float32),
        ff_w1=ff1_w, ff_b1=ff1_b, ff_w2=ff2_w, ff_b2=ff2_b,
    )


# ============================ numpy reference (f64) ============================

def _reference(params, x, value, key, src_mask, trg_mask):
    p = jax.tree_util.tree_map(lambda a: np.asarray(a, np.float64), params)
    x, value, key = (np.asarray(a, np.float64) for a in (x, value, key))
    src_mask = np.asarray(src_mask); trg_mask = np.asarray(trg_mask)

    def ln(a, g, b):
        mu = a.mean(-1, keepdims=True)
        var = ((a - mu) ** 2).mean(-1, keepdims=True)
        return (a - mu) / np.sqrt(var + EPS) * g + b

    def mha(values, keys, query, mask, w):
        n, lq, e = query.shape
        lk = keys.shape[1]
        v = (values @ w['wv'] + w['bv']).reshape(n, lk, HEADS, HEAD_DIM)
        k = (keys @ w['wk'] + w['bk']).reshape(n, lk, HEADS, HEAD_DIM)
        q = (query @ w['wq'] + w['bq']).reshape(n, lq, HEADS, HEAD_DIM)
        energy = np.einsum('nqhd,nkhd->nhqk', q, k)
        energy = np.where(mask == 0, -1e20, energy)
        s = energy / np.sqrt(e)
        s = s - s.max(-1, keepdims=True)
        ex = np.exp(s)
        attn = ex / ex.sum(-1, keepdims=True)
        out = np.einsum('nhqk,nkhd->nqhd', attn, v).reshape(n, lq, e)
        return out @ w['wo'] + w['bo']

    attn = mha(x, x, x, trg_mask, p['self_attn'])
    query = ln(attn + x, p['norm_g'], p['norm_b'])
    attn2 = mha(value, key, query, src_mask, p['tb_attn'])
    xx = ln(attn2 + query, p['tb_norm1_g'], p['tb_norm1_b'])
    hdn = np.maximum(xx @ p['ff_w1'] + p['ff_b1'], 0.0)
    ff = hdn @ p['ff_w2'] + p['ff_b2']
    return ln(ff + xx, p['tb_norm2_g'], p['tb_norm2_b'])


# ==================================== main ====================================

if __name__ == "__main__":
    root = jax.random.PRNGKey(0)
    k_param, kx, kv, kk = jax.random.split(root, 4)

    params = init_params(k_param)

    x = jax.random.normal(kx, (BATCH, SEQ, EMBED), jnp.float32)
    value = jax.random.normal(kv, (BATCH, SEQ, EMBED), jnp.float32)
    key = jax.random.normal(kk, (BATCH, SEQ, EMBED), jnp.float32)

    # trg_mask: causal lower-triangular (N, 1, L, L); src_mask: all ones.
    trg_mask = jnp.tril(jnp.ones((SEQ, SEQ), jnp.float32))[None, None, :, :]
    trg_mask = jnp.broadcast_to(trg_mask, (BATCH, 1, SEQ, SEQ))
    src_mask = jnp.ones((BATCH, 1, SEQ, SEQ), jnp.float32)

    out = jax.jit(functools.partial(decoder_block, params))(
        x, value, key, src_mask, trg_mask)
    out = jax.block_until_ready(out)

    assert out.shape == (BATCH, SEQ, EMBED)
    assert bool(jnp.all(jnp.isfinite(out)))

    ref = _reference(params, x, value, key, src_mask, trg_mask)
    np.testing.assert_allclose(np.asarray(out, np.float64), ref,
                               rtol=5e-2, atol=5e-2)

    print("KERNEL_OK")
</pallas_src>

<mosaic_0001>
module attributes {stable_mosaic.version = 11 : i64} {
  func.func @_decoder_block_kernel(%arg0: memref<16x32xf32, #tpu.memory_space<vmem>>, %arg1: memref<16x32xf32, #tpu.memory_space<vmem>>, %arg2: memref<16x32xf32, #tpu.memory_space<vmem>>, %arg3: memref<2x8x8xf32, #tpu.memory_space<vmem>>, %arg4: memref<2x8x8xf32, #tpu.memory_space<vmem>>, %arg5: memref<32x128xf32, #tpu.memory_space<vmem>>, %arg6: memref<1x128xf32, #tpu.memory_space<vmem>>, %arg7: memref<32x32xf32, #tpu.memory_space<vmem>>, %arg8: memref<1x32xf32, #tpu.memory_space<vmem>>, %arg9: memref<1x32xf32, #tpu.memory_space<vmem>>, %arg10: memref<1x32xf32, #tpu.memory_space<vmem>>, %arg11: memref<32x128xf32, #tpu.memory_space<vmem>>, %arg12: memref<1x128xf32, #tpu.memory_space<vmem>>, %arg13: memref<32x32xf32, #tpu.memory_space<vmem>>, %arg14: memref<1x32xf32, #tpu.memory_space<vmem>>, %arg15: memref<1x32xf32, #tpu.memory_space<vmem>>, %arg16: memref<1x32xf32, #tpu.memory_space<vmem>>, %arg17: memref<32x128xf32, #tpu.memory_space<vmem>>, %arg18: memref<1x128xf32, #tpu.memory_space<vmem>>, %arg19: memref<128x32xf32, #tpu.memory_space<vmem>>, %arg20: memref<1x32xf32, #tpu.memory_space<vmem>>, %arg21: memref<1x32xf32, #tpu.memory_space<vmem>>, %arg22: memref<1x32xf32, #tpu.memory_space<vmem>>, %arg23: memref<16x32xf32, #tpu.memory_space<vmem>>) attributes {dimension_semantics = [], scalar_prefetch = 0 : i64, scratch_operands = 0 : i64, tpu.core_type = #tpu.core_type<tc>} {
    %c0 = arith.constant 0 : index
    %c0_0 = arith.constant 0 : index
    %0 = vector.load %arg0[%c0, %c0_0] : memref<16x32xf32, #tpu.memory_space<vmem>>, vector<16x32xf32>
    %c0_1 = arith.constant 0 : index
    %c0_2 = arith.constant 0 : index
    %1 = vector.load %arg1[%c0_1, %c0_2] : memref<16x32xf32, #tpu.memory_space<vmem>>, vector<16x32xf32>
    %c0_3 = arith.constant 0 : index
    %c0_4 = arith.constant 0 : index
    %2 = vector.load %arg2[%c0_3, %c0_4] : memref<16x32xf32, #tpu.memory_space<vmem>>, vector<16x32xf32>
    %c0_5 = arith.constant 0 : index
    %c0_6 = arith.constant 0 : index
    %c0_7 = arith.constant 0 : index
    %3 = vector.load %arg3[%c0_5, %c0_6, %c0_7] : memref<2x8x8xf32, #tpu.memory_space<vmem>>, vector<2x8x8xf32>
    %cst = arith.constant 0.000000e+00 : f32
    %4 = vector.broadcast %cst : f32 to vector<2x8x8xf32>
    %5 = arith.cmpf oeq, %3, %4 : vector<2x8x8xf32>
    %c0_8 = arith.constant 0 : index
    %c0_9 = arith.constant 0 : index
    %c0_10 = arith.constant 0 : index
    %6 = vector.load %arg4[%c0_8, %c0_9, %c0_10] : memref<2x8x8xf32, #tpu.memory_space<vmem>>, vector<2x8x8xf32>
    %cst_11 = arith.constant 0.000000e+00 : f32
    %7 = vector.broadcast %cst_11 : f32 to vector<2x8x8xf32>
    %8 = arith.cmpf oeq, %6, %7 : vector<2x8x8xf32>
    %c0_12 = arith.constant 0 : index
    %c0_13 = arith.constant 0 : index
    %9 = vector.load %arg5[%c0_12, %c0_13] : memref<32x128xf32, #tpu.memory_space<vmem>>, vector<32x128xf32>
    %c0_14 = arith.constant 0 : index
    %c0_15 = arith.constant 0 : index
    %10 = vector.load %arg6[%c0_14, %c0_15] : memref<1x128xf32, #tpu.memory_space<vmem>>, vector<1x128xf32>
    %c0_16 = arith.constant 0 : index
    %c0_17 = arith.constant 0 : index
    %11 = vector.load %arg7[%c0_16, %c0_17] : memref<32x32xf32, #tpu.memory_space<vmem>>, vector<32x32xf32>
    %c0_18 = arith.constant 0 : index
    %c0_19 = arith.constant 0 : index
    %12 = vector.load %arg8[%c0_18, %c0_19] : memref<1x32xf32, #tpu.memory_space<vmem>>, vector<1x32xf32>
    %c0_20 = arith.constant 0 : index
    %c0_21 = arith.constant 0 : index
    %13 = vector.load %arg9[%c0_20, %c0_21] : memref<1x32xf32, #tpu.memory_space<vmem>>, vector<1x32xf32>
    %c0_22 = arith.constant 0 : index
    %c0_23 = arith.constant 0 : index
    %14 = vector.load %arg10[%c0_22, %c0_23] : memref<1x32xf32, #tpu.memory_space<vmem>>, vector<1x32xf32>
    %c0_24 = arith.constant 0 : index
    %c0_25 = arith.constant 0 : index
    %15 = vector.load %arg11[%c0_24, %c0_25] : memref<32x128xf32, #tpu.memory_space<vmem>>, vector<32x128xf32>
    %c0_26 = arith.constant 0 : index
    %c0_27 = arith.constant 0 : index
    %16 = vector.load %arg12[%c0_26, %c0_27] : memref<1x128xf32, #tpu.memory_space<vmem>>, vector<1x128xf32>
    %c0_28 = arith.constant 0 : index
    %c0_29 = arith.constant 0 : index
    %17 = vector.load %arg13[%c0_28, %c0_29] : memref<32x32xf32, #tpu.memory_space<vmem>>, vector<32x32xf32>
    %c0_30 = arith.constant 0 : index
    %c0_31 = arith.constant 0 : index
    %18 = vector.load %arg14[%c0_30, %c0_31] : memref<1x32xf32, #tpu.memory_space<vmem>>, vector<1x32xf32>
    %c0_32 = arith.constant 0 : index
    %c0_33 = arith.constant 0 : index
    %19 = vector.load %arg15[%c0_32, %c0_33] : memref<1x32xf32, #tpu.memory_space<vmem>>, vector<1x32xf32>
    %c0_34 = arith.constant 0 : index
    %c0_35 = arith.constant 0 : index
    %20 = vector.load %arg16[%c0_34, %c0_35] : memref<1x32xf32, #tpu.memory_space<vmem>>, vector<1x32xf32>
    %c0_36 = arith.constant 0 : index
    %c0_37 = arith.constant 0 : index
    %21 = vector.load %arg17[%c0_36, %c0_37] : memref<32x128xf32, #tpu.memory_space<vmem>>, vector<32x128xf32>
    %c0_38 = arith.constant 0 : index
    %c0_39 = arith.constant 0 : index
    %22 = vector.load %arg18[%c0_38, %c0_39] : memref<1x128xf32, #tpu.memory_space<vmem>>, vector<1x128xf32>
    %c0_40 = arith.constant 0 : index
    %c0_41 = arith.constant 0 : index
    %23 = vector.load %arg19[%c0_40, %c0_41] : memref<128x32xf32, #tpu.memory_space<vmem>>, vector<128x32xf32>
    %c0_42 = arith.constant 0 : index
    %c0_43 = arith.constant 0 : index
    %24 = vector.load %arg20[%c0_42, %c0_43] : memref<1x32xf32, #tpu.memory_space<vmem>>, vector<1x32xf32>
    %c0_44 = arith.constant 0 : index
    %c0_45 = arith.constant 0 : index
    %25 = vector.load %arg21[%c0_44, %c0_45] : memref<1x32xf32, #tpu.memory_space<vmem>>, vector<1x32xf32>
    %c0_46 = arith.constant 0 : index
    %c0_47 = arith.constant 0 : index
    %26 = vector.load %arg22[%c0_46, %c0_47] : memref<1x32xf32, #tpu.memory_space<vmem>>, vector<1x32xf32>
    %cst_48 = arith.constant dense<0.000000e+00> : vector<16x128xf32>
    %27 = tpu.matmul %0, %9, %cst_48 {dimension_numbers = #tpu.dot_dimension_numbers<[1], [0], [0], [1], [0, 0, 1, 1], [], []>} : vector<16x32xf32>, vector<32x128xf32>, vector<16x128xf32> -> vector<16x128xf32>
    %28 = vector.broadcast %10 : vector<1x128xf32> to vector<16x128xf32>
    %29 = arith.addf %27, %28 : vector<16x128xf32>
    %30 = vector.extract_strided_slice %29 {offsets = [0, 0], sizes = [16, 32], strides = [1, 1]} : vector<16x128xf32> to vector<16x32xf32>
    %31 = vector.extract_strided_slice %29 {offsets = [0, 32], sizes = [16, 32], strides = [1, 1]} : vector<16x128xf32> to vector<16x32xf32>
    %32 = vector.extract_strided_slice %29 {offsets = [0, 64], sizes = [16, 32], strides = [1, 1]} : vector<16x128xf32> to vector<16x32xf32>
    %33 = tpu.transpose %31, [1, 0] : vector<16x32xf32> -> vector<32x16xf32>
    %34 = vector.extract_strided_slice %5 {offsets = [0, 0, 0], sizes = [1, 8, 8], strides = [1, 1, 1]} : vector<2x8x8xi1> to vector<1x8x8xi1>
    %35 = vector.shape_cast %34 : vector<1x8x8xi1> to vector<8x8xi1>
    %36 = vector.extract_strided_slice %30 {offsets = [0, 0], sizes = [8, 8], strides = [1, 1]} : vector<16x32xf32> to vector<8x8xf32>
    %37 = vector.extract_strided_slice %33 {offsets = [0, 0], sizes = [8, 8], strides = [1, 1]} : vector<32x16xf32> to vector<8x8xf32>
    %38 = vector.extract_strided_slice %32 {offsets = [0, 0], sizes = [8, 8], strides = [1, 1]} : vector<16x32xf32> to vector<8x8xf32>
    %cst_49 = arith.constant dense<0.000000e+00> : vector<8x8xf32>
    %39 = tpu.matmul %36, %37, %cst_49 {dimension_numbers = #tpu.dot_dimension_numbers<[1], [0], [0], [1], [0, 0, 1, 1], [], []>} : vector<8x8xf32>, vector<8x8xf32>, vector<8x8xf32> -> vector<8x8xf32>
    %cst_50 = arith.constant -1.000000e+20 : f32
    %40 = vector.broadcast %cst_50 : f32 to vector<8x8xf32>
    %41 = arith.select %35, %40, %39 : vector<8x8xi1>, vector<8x8xf32>
    %cst_51 = arith.constant 0.176776692 : f32
    %42 = vector.broadcast %cst_51 : f32 to vector<8x8xf32>
    %43 = arith.mulf %41, %42 : vector<8x8xf32>
    %cst_52 = arith.constant dense<0xFF800000> : vector<8xf32>
    %44 = vector.multi_reduction <maximumf>, %43, %cst_52 [1] : vector<8x8xf32> to vector<8xf32>
    %45 = vector.shape_cast %44 : vector<8xf32> to vector<8x1xf32>
    %46 = vector.broadcast %45 : vector<8x1xf32> to vector<8x8xf32>
    %47 = arith.subf %43, %46 : vector<8x8xf32>
    %48 = math.exp %47 : vector<8x8xf32>
    %cst_53 = arith.constant dense<0.000000e+00> : vector<8xf32>
    %49 = vector.multi_reduction <add>, %48, %cst_53 [1] : vector<8x8xf32> to vector<8xf32>
    %50 = vector.shape_cast %49 : vector<8xf32> to vector<8x1xf32>
    %51 = vector.broadcast %50 : vector<8x1xf32> to vector<8x8xf32>
    %52 = arith.divf %48, %51 : vector<8x8xf32>
    %cst_54 = arith.constant dense<0.000000e+00> : vector<8x8xf32>
    %53 = tpu.matmul %52, %38, %cst_54 {dimension_numbers = #tpu.dot_dimension_numbers<[1], [0], [0], [1], [0, 0, 1, 1], [], []>} : vector<8x8xf32>, vector<8x8xf32>, vector<8x8xf32> -> vector<8x8xf32>
    %54 = vector.extract_strided_slice %30 {offsets = [0, 8], sizes = [8, 8], strides = [1, 1]} : vector<16x32xf32> to vector<8x8xf32>
    %55 = vector.extract_strided_slice %33 {offsets = [8, 0], sizes = [8, 8], strides = [1, 1]} : vector<32x16xf32> to vector<8x8xf32>
    %56 = vector.extract_strided_slice %32 {offsets = [0, 8], sizes = [8, 8], strides = [1, 1]} : vector<16x32xf32> to vector<8x8xf32>
    %cst_55 = arith.constant dense<0.000000e+00> : vector<8x8xf32>
    %57 = tpu.matmul %54, %55, %cst_55 {dimension_numbers = #tpu.dot_dimension_numbers<[1], [0], [0], [1], [0, 0, 1, 1], [], []>} : vector<8x8xf32>, vector<8x8xf32>, vector<8x8xf32> -> vector<8x8xf32>
    %cst_56 = arith.constant -1.000000e+20 : f32
    %58 = vector.broadcast %cst_56 : f32 to vector<8x8xf32>
    %59 = arith.select %35, %58, %57 : vector<8x8xi1>, vector<8x8xf32>
    %cst_57 = arith.constant 0.176776692 : f32
    %60 = vector.broadcast %cst_57 : f32 to vector<8x8xf32>
    %61 = arith.mulf %59, %60 : vector<8x8xf32>
    %cst_58 = arith.constant dense<0xFF800000> : vector<8xf32>
    %62 = vector.multi_reduction <maximumf>, %61, %cst_58 [1] : vector<8x8xf32> to vector<8xf32>
    %63 = vector.shape_cast %62 : vector<8xf32> to vector<8x1xf32>
    %64 = vector.broadcast %63 : vector<8x1xf32> to vector<8x8xf32>
    %65 = arith.subf %61, %64 : vector<8x8xf32>
    %66 = math.exp %65 : vector<8x8xf32>
    %cst_59 = arith.constant dense<0.000000e+00> : vector<8xf32>
    %67 = vector.multi_reduction <add>, %66, %cst_59 [1] : vector<8x8xf32> to vector<8xf32>
    %68 = vector.shape_cast %67 : vector<8xf32> to vector<8x1xf32>
    %69 = vector.broadcast %68 : vector<8x1xf32> to vector<8x8xf32>
    %70 = arith.divf %66, %69 : vector<8x8xf32>
    %cst_60 = arith.constant dense<0.000000e+00> : vector<8x8xf32>
    %71 = tpu.matmul %70, %56, %cst_60 {dimension_numbers = #tpu.dot_dimension_numbers<[1], [0], [0], [1], [0, 0, 1, 1], [], []>} : vector<8x8xf32>, vector<8x8xf32>, vector<8x8xf32> -> vector<8x8xf32>
    %72 = vector.extract_strided_slice %30 {offsets = [0, 16], sizes = [8, 8], strides = [1, 1]} : vector<16x32xf32> to vector<8x8xf32>
    %73 = vector.extract_strided_slice %33 {offsets = [16, 0], sizes = [8, 8], strides = [1, 1]} : vector<32x16xf32> to vector<8x8xf32>
    %74 = vector.extract_strided_slice %32 {offsets = [0, 16], sizes = [8, 8], strides = [1, 1]} : vector<16x32xf32> to vector<8x8xf32>
    %cst_61 = arith.constant dense<0.000000e+00> : vector<8x8xf32>
    %75 = tpu.matmul %72, %73, %cst_61 {dimension_numbers = #tpu.dot_dimension_numbers<[1], [0], [0], [1], [0, 0, 1, 1], [], []>} : vector<8x8xf32>, vector<8x8xf32>, vector<8x8xf32> -> vector<8x8xf32>
    %cst_62 = arith.constant -1.000000e+20 : f32
    %76 = vector.broadcast %cst_62 : f32 to vector<8x8xf32>
    %77 = arith.select %35, %76, %75 : vector<8x8xi1>, vector<8x8xf32>
    %cst_63 = arith.constant 0.176776692 : f32
    %78 = vector.broadcast %cst_63 : f32 to vector<8x8xf32>
    %79 = arith.mulf %77, %78 : vector<8x8xf32>
    %cst_64 = arith.constant dense<0xFF800000> : vector<8xf32>
    %80 = vector.multi_reduction <maximumf>, %79, %cst_64 [1] : vector<8x8xf32> to vector<8xf32>
    %81 = vector.shape_cast %80 : vector<8xf32> to vector<8x1xf32>
    %82 = vector.broadcast %81 : vector<8x1xf32> to vector<8x8xf32>
    %83 = arith.subf %79, %82 : vector<8x8xf32>
    %84 = math.exp %83 : vector<8x8xf32>
    %cst_65 = arith.constant dense<0.000000e+00> : vector<8xf32>
    %85 = vector.multi_reduction <add>, %84, %cst_65 [1] : vector<8x8xf32> to vector<8xf32>
    %86 = vector.shape_cast %85 : vector<8xf32> to vector<8x1xf32>
    %87 = vector.broadcast %86 : vector<8x1xf32> to vector<8x8xf32>
    %88 = arith.divf %84, %87 : vector<8x8xf32>
    %cst_66 = arith.constant dense<0.000000e+00> : vector<8x8xf32>
    %89 = tpu.matmul %88, %74, %cst_66 {dimension_numbers = #tpu.dot_dimension_numbers<[1], [0], [0], [1], [0, 0, 1, 1], [], []>} : vector<8x8xf32>, vector<8x8xf32>, vector<8x8xf32> -> vector<8x8xf32>
    %90 = vector.extract_strided_slice %30 {offsets = [0, 24], sizes = [8, 8], strides = [1, 1]} : vector<16x32xf32> to vector<8x8xf32>
    %91 = vector.extract_strided_slice %33 {offsets = [24, 0], sizes = [8, 8], strides = [1, 1]} : vector<32x16xf32> to vector<8x8xf32>
    %92 = vector.extract_strided_slice %32 {offsets = [0, 24], sizes = [8, 8], strides = [1, 1]} : vector<16x32xf32> to vector<8x8xf32>
    %cst_67 = arith.constant dense<0.000000e+00> : vector<8x8xf32>
    %93 = tpu.matmul %90, %91, %cst_67 {dimension_numbers = #tpu.dot_dimension_numbers<[1], [0], [0], [1], [0, 0, 1, 1], [], []>} : vector<8x8xf32>, vector<8x8xf32>, vector<8x8xf32> -> vector<8x8xf32>
    %cst_68 = arith.constant -1.000000e+20 : f32
    %94 = vector.broadcast %cst_68 : f32 to vector<8x8xf32>
    %95 = arith.select %35, %94, %93 : vector<8x8xi1>, vector<8x8xf32>
    %cst_69 = arith.constant 0.176776692 : f32
    %96 = vector.broadcast %cst_69 : f32 to vector<8x8xf32>
    %97 = arith.mulf %95, %96 : vector<8x8xf32>
    %cst_70 = arith.constant dense<0xFF800000> : vector<8xf32>
    %98 = vector.multi_reduction <maximumf>, %97, %cst_70 [1] : vector<8x8xf32> to vector<8xf32>
    %99 = vector.shape_cast %98 : vector<8xf32> to vector<8x1xf32>
    %100 = vector.broadcast %99 : vector<8x1xf32> to vector<8x8xf32>
    %101 = arith.subf %97, %100 : vector<8x8xf32>
    %102 = math.exp %101 : vector<8x8xf32>
    %cst_71 = arith.constant dense<0.000000e+00> : vector<8xf32>
    %103 = vector.multi_reduction <add>, %102, %cst_71 [1] : vector<8x8xf32> to vector<8xf32>
    %104 = vector.shape_cast %103 : vector<8xf32> to vector<8x1xf32>
    %105 = vector.broadcast %104 : vector<8x1xf32> to vector<8x8xf32>
    %106 = arith.divf %102, %105 : vector<8x8xf32>
    %cst_72 = arith.constant dense<0.000000e+00> : vector<8x8xf32>
    %107 = tpu.matmul %106, %92, %cst_72 {dimension_numbers = #tpu.dot_dimension_numbers<[1], [0], [0], [1], [0, 0, 1, 1], [], []>} : vector<8x8xf32>, vector<8x8xf32>, vector<8x8xf32> -> vector<8x8xf32>
    %108 = tpu.concatenate %53, %71, %89, %107 in 1 : vector<8x8xf32>, vector<8x8xf32>, vector<8x8xf32>, vector<8x8xf32> -> vector<8x32xf32>
    %109 = vector.extract_strided_slice %5 {offsets = [1, 0, 0], sizes = [1, 8, 8], strides = [1, 1, 1]} : vector<2x8x8xi1> to vector<1x8x8xi1>
    %110 = vector.shape_cast %109 : vector<1x8x8xi1> to vector<8x8xi1>
    %111 = vector.extract_strided_slice %30 {offsets = [8, 0], sizes = [8, 8], strides = [1, 1]} : vector<16x32xf32> to vector<8x8xf32>
    %112 = vector.extract_strided_slice %33 {offsets = [0, 8], sizes = [8, 8], strides = [1, 1]} : vector<32x16xf32> to vector<8x8xf32>
    %113 = vector.extract_strided_slice %32 {offsets = [8, 0], sizes = [8, 8], strides = [1, 1]} : vector<16x32xf32> to vector<8x8xf32>
    %cst_73 = arith.constant dense<0.000000e+00> : vector<8x8xf32>
    %114 = tpu.matmul %111, %112, %cst_73 {dimension_numbers = #tpu.dot_dimension_numbers<[1], [0], [0], [1], [0, 0, 1, 1], [], []>} : vector<8x8xf32>, vector<8x8xf32>, vector<8x8xf32> -> vector<8x8xf32>
    %cst_74 = arith.constant -1.000000e+20 : f32
    %115 = vector.broadcast %cst_74 : f32 to vector<8x8xf32>
    %116 = arith.select %110, %115, %114 : vector<8x8xi1>, vector<8x8xf32>
    %cst_75 = arith.constant 0.176776692 : f32
    %117 = vector.broadcast %cst_75 : f32 to vector<8x8xf32>
    %118 = arith.mulf %116, %117 : vector<8x8xf32>
    %cst_76 = arith.constant dense<0xFF800000> : vector<8xf32>
    %119 = vector.multi_reduction <maximumf>, %118, %cst_76 [1] : vector<8x8xf32> to vector<8xf32>
    %120 = vector.shape_cast %119 : vector<8xf32> to vector<8x1xf32>
    %121 = vector.broadcast %120 : vector<8x1xf32> to vector<8x8xf32>
    %122 = arith.subf %118, %121 : vector<8x8xf32>
    %123 = math.exp %122 : vector<8x8xf32>
    %cst_77 = arith.constant dense<0.000000e+00> : vector<8xf32>
    %124 = vector.multi_reduction <add>, %123, %cst_77 [1] : vector<8x8xf32> to vector<8xf32>
    %125 = vector.shape_cast %124 : vector<8xf32> to vector<8x1xf32>
    %126 = vector.broadcast %125 : vector<8x1xf32> to vector<8x8xf32>
    %127 = arith.divf %123, %126 : vector<8x8xf32>
    %cst_78 = arith.constant dense<0.000000e+00> : vector<8x8xf32>
    %128 = tpu.matmul %127, %113, %cst_78 {dimension_numbers = #tpu.dot_dimension_numbers<[1], [0], [0], [1], [0, 0, 1, 1], [], []>} : vector<8x8xf32>, vector<8x8xf32>, vector<8x8xf32> -> vector<8x8xf32>
    %129 = vector.extract_strided_slice %30 {offsets = [8, 8], sizes = [8, 8], strides = [1, 1]} : vector<16x32xf32> to vector<8x8xf32>
    %130 = vector.extract_strided_slice %33 {offsets = [8, 8], sizes = [8, 8], strides = [1, 1]} : vector<32x16xf32> to vector<8x8xf32>
    %131 = vector.extract_strided_slice %32 {offsets = [8, 8], sizes = [8, 8], strides = [1, 1]} : vector<16x32xf32> to vector<8x8xf32>
    %cst_79 = arith.constant dense<0.000000e+00> : vector<8x8xf32>
    %132 = tpu.matmul %129, %130, %cst_79 {dimension_numbers = #tpu.dot_dimension_numbers<[1], [0], [0], [1], [0, 0, 1, 1], [], []>} : vector<8x8xf32>, vector<8x8xf32>, vector<8x8xf32> -> vector<8x8xf32>
    %cst_80 = arith.constant -1.000000e+20 : f32
    %133 = vector.broadcast %cst_80 : f32 to vector<8x8xf32>
    %134 = arith.select %110, %133, %132 : vector<8x8xi1>, vector<8x8xf32>
    %cst_81 = arith.constant 0.176776692 : f32
    %135 = vector.broadcast %cst_81 : f32 to vector<8x8xf32>
    %136 = arith.mulf %134, %135 : vector<8x8xf32>
    %cst_82 = arith.constant dense<0xFF800000> : vector<8xf32>
    %137 = vector.multi_reduction <maximumf>, %136, %cst_82 [1] : vector<8x8xf32> to vector<8xf32>
    %138 = vector.shape_cast %137 : vector<8xf32> to vector<8x1xf32>
    %139 = vector.broadcast %138 : vector<8x1xf32> to vector<8x8xf32>
    %140 = arith.subf %136, %139 : vector<8x8xf32>
    %141 = math.exp %140 : vector<8x8xf32>
    %cst_83 = arith.constant dense<0.000000e+00> : vector<8xf32>
    %142 = vector.multi_reduction <add>, %141, %cst_83 [1] : vector<8x8xf32> to vector<8xf32>
    %143 = vector.shape_cast %142 : vector<8xf32> to vector<8x1xf32>
    %144 = vector.broadcast %143 : vector<8x1xf32> to vector<8x8xf32>
    %145 = arith.divf %141, %144 : vector<8x8xf32>
    %cst_84 = arith.constant dense<0.000000e+00> : vector<8x8xf32>
    %146 = tpu.matmul %145, %131, %cst_84 {dimension_numbers = #tpu.dot_dimension_numbers<[1], [0], [0], [1], [0, 0, 1, 1], [], []>} : vector<8x8xf32>, vector<8x8xf32>, vector<8x8xf32> -> vector<8x8xf32>
    %147 = vector.extract_strided_slice %30 {offsets = [8, 16], sizes = [8, 8], strides = [1, 1]} : vector<16x32xf32> to vector<8x8xf32>
    %148 = vector.extract_strided_slice %33 {offsets = [16, 8], sizes = [8, 8], strides = [1, 1]} : vector<32x16xf32> to vector<8x8xf32>
    %149 = vector.extract_strided_slice %32 {offsets = [8, 16], sizes = [8, 8], strides = [1, 1]} : vector<16x32xf32> to vector<8x8xf32>
    %cst_85 = arith.constant dense<0.000000e+00> : vector<8x8xf32>
    %150 = tpu.matmul %147, %148, %cst_85 {dimension_numbers = #tpu.dot_dimension_numbers<[1], [0], [0], [1], [0, 0, 1, 1], [], []>} : vector<8x8xf32>, vector<8x8xf32>, vector<8x8xf32> -> vector<8x8xf32>
    %cst_86 = arith.constant -1.000000e+20 : f32
    %151 = vector.broadcast %cst_86 : f32 to vector<8x8xf32>
    %152 = arith.select %110, %151, %150 : vector<8x8xi1>, vector<8x8xf32>
    %cst_87 = arith.constant 0.176776692 : f32
    %153 = vector.broadcast %cst_87 : f32 to vector<8x8xf32>
    %154 = arith.mulf %152, %153 : vector<8x8xf32>
    %cst_88 = arith.constant dense<0xFF800000> : vector<8xf32>
    %155 = vector.multi_reduction <maximumf>, %154, %cst_88 [1] : vector<8x8xf32> to vector<8xf32>
    %156 = vector.shape_cast %155 : vector<8xf32> to vector<8x1xf32>
    %157 = vector.broadcast %156 : vector<8x1xf32> to vector<8x8xf32>
    %158 = arith.subf %154, %157 : vector<8x8xf32>
    %159 = math.exp %158 : vector<8x8xf32>
    %cst_89 = arith.constant dense<0.000000e+00> : vector<8xf32>
    %160 = vector.multi_reduction <add>, %159, %cst_89 [1] : vector<8x8xf32> to vector<8xf32>
    %161 = vector.shape_cast %160 : vector<8xf32> to vector<8x1xf32>
    %162 = vector.broadcast %161 : vector<8x1xf32> to vector<8x8xf32>
    %163 = arith.divf %159, %162 : vector<8x8xf32>
    %cst_90 = arith.constant dense<0.000000e+00> : vector<8x8xf32>
    %164 = tpu.matmul %163, %149, %cst_90 {dimension_numbers = #tpu.dot_dimension_numbers<[1], [0], [0], [1], [0, 0, 1, 1], [], []>} : vector<8x8xf32>, vector<8x8xf32>, vector<8x8xf32> -> vector<8x8xf32>
    %165 = vector.extract_strided_slice %30 {offsets = [8, 24], sizes = [8, 8], strides = [1, 1]} : vector<16x32xf32> to vector<8x8xf32>
    %166 = vector.extract_strided_slice %33 {offsets = [24, 8], sizes = [8, 8], strides = [1, 1]} : vector<32x16xf32> to vector<8x8xf32>
    %167 = vector.extract_strided_slice %32 {offsets = [8, 24], sizes = [8, 8], strides = [1, 1]} : vector<16x32xf32> to vector<8x8xf32>
    %cst_91 = arith.constant dense<0.000000e+00> : vector<8x8xf32>
    %168 = tpu.matmul %165, %166, %cst_91 {dimension_numbers = #tpu.dot_dimension_numbers<[1], [0], [0], [1], [0, 0, 1, 1], [], []>} : vector<8x8xf32>, vector<8x8xf32>, vector<8x8xf32> -> vector<8x8xf32>
    %cst_92 = arith.constant -1.000000e+20 : f32
    %169 = vector.broadcast %cst_92 : f32 to vector<8x8xf32>
    %170 = arith.select %110, %169, %168 : vector<8x8xi1>, vector<8x8xf32>
    %cst_93 = arith.constant 0.176776692 : f32
    %171 = vector.broadcast %cst_93 : f32 to vector<8x8xf32>
    %172 = arith.mulf %170, %171 : vector<8x8xf32>
    %cst_94 = arith.constant dense<0xFF800000> : vector<8xf32>
    %173 = vector.multi_reduction <maximumf>, %172, %cst_94 [1] : vector<8x8xf32> to vector<8xf32>
    %174 = vector.shape_cast %173 : vector<8xf32> to vector<8x1xf32>
    %175 = vector.broadcast %174 : vector<8x1xf32> to vector<8x8xf32>
    %176 = arith.subf %172, %175 : vector<8x8xf32>
    %177 = math.exp %176 : vector<8x8xf32>
    %cst_95 = arith.constant dense<0.000000e+00> : vector<8xf32>
    %178 = vector.multi_reduction <add>, %177, %cst_95 [1] : vector<8x8xf32> to vector<8xf32>
    %179 = vector.shape_cast %178 : vector<8xf32> to vector<8x1xf32>
    %180 = vector.broadcast %179 : vector<8x1xf32> to vector<8x8xf32>
    %181 = arith.divf %177, %180 : vector<8x8xf32>
    %cst_96 = arith.constant dense<0.000000e+00> : vector<8x8xf32>
    %182 = tpu.matmul %181, %167, %cst_96 {dimension_numbers = #tpu.dot_dimension_numbers<[1], [0], [0], [1], [0, 0, 1, 1], [], []>} : vector<8x8xf32>, vector<8x8xf32>, vector<8x8xf32> -> vector<8x8xf32>
    %183 = tpu.concatenate %128, %146, %164, %182 in 1 : vector<8x8xf32>, vector<8x8xf32>, vector<8x8xf32>, vector<8x8xf32> -> vector<8x32xf32>
    %184 = tpu.concatenate %108, %183 in 0 : vector<8x32xf32>, vector<8x32xf32> -> vector<16x32xf32>
    %cst_97 = arith.constant dense<0.000000e+00> : vector<16x32xf32>
    %185 = tpu.matmul %184, %11, %cst_97 {dimension_numbers = #tpu.dot_dimension_numbers<[1], [0], [0], [1], [0, 0, 1, 1], [], []>} : vector<16x32xf32>, vector<32x32xf32>, vector<16x32xf32> -> vector<16x32xf32>
    %186 = vector.broadcast %12 : vector<1x32xf32> to vector<16x32xf32>
    %187 = arith.addf %185, %186 : vector<16x32xf32>
    %188 = arith.addf %187, %0 : vector<16x32xf32>
    %cst_98 = arith.constant dense<0.000000e+00> : vector<16xf32>
    %189 = vector.multi_reduction <add>, %188, %cst_98 [1] : vector<16x32xf32> to vector<16xf32>
    %190 = vector.shape_cast %189 : vector<16xf32> to vector<16x1xf32>
    %cst_99 = arith.constant 3.200000e+01 : f32
    %191 = vector.broadcast %cst_99 : f32 to vector<16x1xf32>
    %192 = arith.divf %190, %191 : vector<16x1xf32>
    %193 = vector.broadcast %192 : vector<16x1xf32> to vector<16x32xf32>
    %194 = arith.subf %188, %193 : vector<16x32xf32>
    %195 = arith.mulf %194, %194 : vector<16x32xf32>
    %cst_100 = arith.constant dense<0.000000e+00> : vector<16xf32>
    %196 = vector.multi_reduction <add>, %195, %cst_100 [1] : vector<16x32xf32> to vector<16xf32>
    %197 = vector.shape_cast %196 : vector<16xf32> to vector<16x1xf32>
    %cst_101 = arith.constant 3.200000e+01 : f32
    %198 = vector.broadcast %cst_101 : f32 to vector<16x1xf32>
    %199 = arith.divf %197, %198 : vector<16x1xf32>
    %200 = vector.broadcast %192 : vector<16x1xf32> to vector<16x32xf32>
    %201 = arith.subf %188, %200 : vector<16x32xf32>
    %cst_102 = arith.constant 9.99999974E-6 : f32
    %202 = vector.broadcast %cst_102 : f32 to vector<16x1xf32>
    %203 = arith.addf %199, %202 : vector<16x1xf32>
    %204 = math.rsqrt %203 : vector<16x1xf32>
    %205 = vector.broadcast %204 : vector<16x1xf32> to vector<16x32xf32>
    %206 = arith.mulf %201, %205 : vector<16x32xf32>
    %207 = vector.broadcast %13 : vector<1x32xf32> to vector<16x32xf32>
    %208 = arith.mulf %206, %207 : vector<16x32xf32>
    %209 = vector.broadcast %14 : vector<1x32xf32> to vector<16x32xf32>
    %210 = arith.addf %208, %209 : vector<16x32xf32>
    %211 = tpu.concatenate %210, %2, %1 in 0 : vector<16x32xf32>, vector<16x32xf32>, vector<16x32xf32> -> vector<48x32xf32>
    %cst_103 = arith.constant dense<0.000000e+00> : vector<48x128xf32>
    %212 = tpu.matmul %211, %15, %cst_103 {dimension_numbers = #tpu.dot_dimension_numbers<[1], [0], [0], [1], [0, 0, 1, 1], [], []>} : vector<48x32xf32>, vector<32x128xf32>, vector<48x128xf32> -> vector<48x128xf32>
    %213 = vector.broadcast %16 : vector<1x128xf32> to vector<48x128xf32>
    %214 = arith.addf %212, %213 : vector<48x128xf32>
    %215 = vector.extract_strided_slice %214 {offsets = [0, 0], sizes = [16, 32], strides = [1, 1]} : vector<48x128xf32> to vector<16x32xf32>
    %216 = vector.extract_strided_slice %214 {offsets = [16, 32], sizes = [16, 32], strides = [1, 1]} : vector<48x128xf32> to vector<16x32xf32>
    %217 = vector.extract_strided_slice %214 {offsets = [32, 64], sizes = [16, 32], strides = [1, 1]} : vector<48x128xf32> to vector<16x32xf32>
    %218 = tpu.transpose %216, [1, 0] : vector<16x32xf32> -> vector<32x16xf32>
    %219 = vector.extract_strided_slice %8 {offsets = [0, 0, 0], sizes = [1, 8, 8], strides = [1, 1, 1]} : vector<2x8x8xi1> to vector<1x8x8xi1>
    %220 = vector.shape_cast %219 : vector<1x8x8xi1> to vector<8x8xi1>
    %221 = vector.extract_strided_slice %215 {offsets = [0, 0], sizes = [8, 8], strides = [1, 1]} : vector<16x32xf32> to vector<8x8xf32>
    %222 = vector.extract_strided_slice %218 {offsets = [0, 0], sizes = [8, 8], strides = [1, 1]} : vector<32x16xf32> to vector<8x8xf32>
    %223 = vector.extract_strided_slice %217 {offsets = [0, 0], sizes = [8, 8], strides = [1, 1]} : vector<16x32xf32> to vector<8x8xf32>
    %cst_104 = arith.constant dense<0.000000e+00> : vector<8x8xf32>
    %224 = tpu.matmul %221, %222, %cst_104 {dimension_numbers = #tpu.dot_dimension_numbers<[1], [0], [0], [1], [0, 0, 1, 1], [], []>} : vector<8x8xf32>, vector<8x8xf32>, vector<8x8xf32> -> vector<8x8xf32>
    %cst_105 = arith.constant -1.000000e+20 : f32
    %225 = vector.broadcast %cst_105 : f32 to vector<8x8xf32>
    %226 = arith.select %220, %225, %224 : vector<8x8xi1>, vector<8x8xf32>
    %cst_106 = arith.constant 0.176776692 : f32
    %227 = vector.broadcast %cst_106 : f32 to vector<8x8xf32>
    %228 = arith.mulf %226, %227 : vector<8x8xf32>
    %cst_107 = arith.constant dense<0xFF800000> : vector<8xf32>
    %229 = vector.multi_reduction <maximumf>, %228, %cst_107 [1] : vector<8x8xf32> to vector<8xf32>
    %230 = vector.shape_cast %229 : vector<8xf32> to vector<8x1xf32>
    %231 = vector.broadcast %230 : vector<8x1xf32> to vector<8x8xf32>
    %232 = arith.subf %228, %231 : vector<8x8xf32>
    %233 = math.exp %232 : vector<8x8xf32>
    %cst_108 = arith.constant dense<0.000000e+00> : vector<8xf32>
    %234 = vector.multi_reduction <add>, %233, %cst_108 [1] : vector<8x8xf32> to vector<8xf32>
    %235 = vector.shape_cast %234 : vector<8xf32> to vector<8x1xf32>
    %236 = vector.broadcast %235 : vector<8x1xf32> to vector<8x8xf32>
    %237 = arith.divf %233, %236 : vector<8x8xf32>
    %cst_109 = arith.constant dense<0.000000e+00> : vector<8x8xf32>
    %238 = tpu.matmul %237, %223, %cst_109 {dimension_numbers = #tpu.dot_dimension_numbers<[1], [0], [0], [1], [0, 0, 1, 1], [], []>} : vector<8x8xf32>, vector<8x8xf32>, vector<8x8xf32> -> vector<8x8xf32>
    %239 = vector.extract_strided_slice %215 {offsets = [0, 8], sizes = [8, 8], strides = [1, 1]} : vector<16x32xf32> to vector<8x8xf32>
    %240 = vector.extract_strided_slice %218 {offsets = [8, 0], sizes = [8, 8], strides = [1, 1]} : vector<32x16xf32> to vector<8x8xf32>
    %241 = vector.extract_strided_slice %217 {offsets = [0, 8], sizes = [8, 8], strides = [1, 1]} : vector<16x32xf32> to vector<8x8xf32>
    %cst_110 = arith.constant dense<0.000000e+00> : vector<8x8xf32>
    %242 = tpu.matmul %239, %240, %cst_110 {dimension_numbers = #tpu.dot_dimension_numbers<[1], [0], [0], [1], [0, 0, 1, 1], [], []>} : vector<8x8xf32>, vector<8x8xf32>, vector<8x8xf32> -> vector<8x8xf32>
    %cst_111 = arith.constant -1.000000e+20 : f32
    %243 = vector.broadcast %cst_111 : f32 to vector<8x8xf32>
    %244 = arith.select %220, %243, %242 : vector<8x8xi1>, vector<8x8xf32>
    %cst_112 = arith.constant 0.176776692 : f32
    %245 = vector.broadcast %cst_112 : f32 to vector<8x8xf32>
    %246 = arith.mulf %244, %245 : vector<8x8xf32>
    %cst_113 = arith.constant dense<0xFF800000> : vector<8xf32>
    %247 = vector.multi_reduction <maximumf>, %246, %cst_113 [1] : vector<8x8xf32> to vector<8xf32>
    %248 = vector.shape_cast %247 : vector<8xf32> to vector<8x1xf32>
    %249 = vector.broadcast %248 : vector<8x1xf32> to vector<8x8xf32>
    %250 = arith.subf %246, %249 : vector<8x8xf32>
    %251 = math.exp %250 : vector<8x8xf32>
    %cst_114 = arith.constant dense<0.000000e+00> : vector<8xf32>
    %252 = vector.multi_reduction <add>, %251, %cst_114 [1] : vector<8x8xf32> to vector<8xf32>
    %253 = vector.shape_cast %252 : vector<8xf32> to vector<8x1xf32>
    %254 = vector.broadcast %253 : vector<8x1xf32> to vector<8x8xf32>
    %255 = arith.divf %251, %254 : vector<8x8xf32>
    %cst_115 = arith.constant dense<0.000000e+00> : vector<8x8xf32>
    %256 = tpu.matmul %255, %241, %cst_115 {dimension_numbers = #tpu.dot_dimension_numbers<[1], [0], [0], [1], [0, 0, 1, 1], [], []>} : vector<8x8xf32>, vector<8x8xf32>, vector<8x8xf32> -> vector<8x8xf32>
    %257 = vector.extract_strided_slice %215 {offsets = [0, 16], sizes = [8, 8], strides = [1, 1]} : vector<16x32xf32> to vector<8x8xf32>
    %258 = vector.extract_strided_slice %218 {offsets = [16, 0], sizes = [8, 8], strides = [1, 1]} : vector<32x16xf32> to vector<8x8xf32>
    %259 = vector.extract_strided_slice %217 {offsets = [0, 16], sizes = [8, 8], strides = [1, 1]} : vector<16x32xf32> to vector<8x8xf32>
    %cst_116 = arith.constant dense<0.000000e+00> : vector<8x8xf32>
    %260 = tpu.matmul %257, %258, %cst_116 {dimension_numbers = #tpu.dot_dimension_numbers<[1], [0], [0], [1], [0, 0, 1, 1], [], []>} : vector<8x8xf32>, vector<8x8xf32>, vector<8x8xf32> -> vector<8x8xf32>
    %cst_117 = arith.constant -1.000000e+20 : f32
    %261 = vector.broadcast %cst_117 : f32 to vector<8x8xf32>
    %262 = arith.select %220, %261, %260 : vector<8x8xi1>, vector<8x8xf32>
    %cst_118 = arith.constant 0.176776692 : f32
    %263 = vector.broadcast %cst_118 : f32 to vector<8x8xf32>
    %264 = arith.mulf %262, %263 : vector<8x8xf32>
    %cst_119 = arith.constant dense<0xFF800000> : vector<8xf32>
    %265 = vector.multi_reduction <maximumf>, %264, %cst_119 [1] : vector<8x8xf32> to vector<8xf32>
    %266 = vector.shape_cast %265 : vector<8xf32> to vector<8x1xf32>
    %267 = vector.broadcast %266 : vector<8x1xf32> to vector<8x8xf32>
    %268 = arith.subf %264, %267 : vector<8x8xf32>
    %269 = math.exp %268 : vector<8x8xf32>
    %cst_120 = arith.constant dense<0.000000e+00> : vector<8xf32>
    %270 = vector.multi_reduction <add>, %269, %cst_120 [1] : vector<8x8xf32> to vector<8xf32>
    %271 = vector.shape_cast %270 : vector<8xf32> to vector<8x1xf32>
    %272 = vector.broadcast %271 : vector<8x1xf32> to vector<8x8xf32>
    %273 = arith.divf %269, %272 : vector<8x8xf32>
    %cst_121 = arith.constant dense<0.000000e+00> : vector<8x8xf32>
    %274 = tpu.matmul %273, %259, %cst_121 {dimension_numbers = #tpu.dot_dimension_numbers<[1], [0], [0], [1], [0, 0, 1, 1], [], []>} : vector<8x8xf32>, vector<8x8xf32>, vector<8x8xf32> -> vector<8x8xf32>
    %275 = vector.extract_strided_slice %215 {offsets = [0, 24], sizes = [8, 8], strides = [1, 1]} : vector<16x32xf32> to vector<8x8xf32>
    %276 = vector.extract_strided_slice %218 {offsets = [24, 0], sizes = [8, 8], strides = [1, 1]} : vector<32x16xf32> to vector<8x8xf32>
    %277 = vector.extract_strided_slice %217 {offsets = [0, 24], sizes = [8, 8], strides = [1, 1]} : vector<16x32xf32> to vector<8x8xf32>
    %cst_122 = arith.constant dense<0.000000e+00> : vector<8x8xf32>
    %278 = tpu.matmul %275, %276, %cst_122 {dimension_numbers = #tpu.dot_dimension_numbers<[1], [0], [0], [1], [0, 0, 1, 1], [], []>} : vector<8x8xf32>, vector<8x8xf32>, vector<8x8xf32> -> vector<8x8xf32>
    %cst_123 = arith.constant -1.000000e+20 : f32
    %279 = vector.broadcast %cst_123 : f32 to vector<8x8xf32>
    %280 = arith.select %220, %279, %278 : vector<8x8xi1>, vector<8x8xf32>
    %cst_124 = arith.constant 0.176776692 : f32
    %281 = vector.broadcast %cst_124 : f32 to vector<8x8xf32>
    %282 = arith.mulf %280, %281 : vector<8x8xf32>
    %cst_125 = arith.constant dense<0xFF800000> : vector<8xf32>
    %283 = vector.multi_reduction <maximumf>, %282, %cst_125 [1] : vector<8x8xf32> to vector<8xf32>
    %284 = vector.shape_cast %283 : vector<8xf32> to vector<8x1xf32>
    %285 = vector.broadcast %284 : vector<8x1xf32> to vector<8x8xf32>
    %286 = arith.subf %282, %285 : vector<8x8xf32>
    %287 = math.exp %286 : vector<8x8xf32>
    %cst_126 = arith.constant dense<0.000000e+00> : vector<8xf32>
    %288 = vector.multi_reduction <add>, %287, %cst_126 [1] : vector<8x8xf32> to vector<8xf32>
    %289 = vector.shape_cast %288 : vector<8xf32> to vector<8x1xf32>
    %290 = vector.broadcast %289 : vector<8x1xf32> to vector<8x8xf32>
    %291 = arith.divf %287, %290 : vector<8x8xf32>
    %cst_127 = arith.constant dense<0.000000e+00> : vector<8x8xf32>
    %292 = tpu.matmul %291, %277, %cst_127 {dimension_numbers = #tpu.dot_dimension_numbers<[1], [0], [0], [1], [0, 0, 1, 1], [], []>} : vector<8x8xf32>, vector<8x8xf32>, vector<8x8xf32> -> vector<8x8xf32>
    %293 = tpu.concatenate %238, %256, %274, %292 in 1 : vector<8x8xf32>, vector<8x8xf32>, vector<8x8xf32>, vector<8x8xf32> -> vector<8x32xf32>
    %294 = vector.extract_strided_slice %8 {offsets = [1, 0, 0], sizes = [1, 8, 8], strides = [1, 1, 1]} : vector<2x8x8xi1> to vector<1x8x8xi1>
    %295 = vector.shape_cast %294 : vector<1x8x8xi1> to vector<8x8xi1>
    %296 = vector.extract_strided_slice %215 {offsets = [8, 0], sizes = [8, 8], strides = [1, 1]} : vector<16x32xf32> to vector<8x8xf32>
    %297 = vector.extract_strided_slice %218 {offsets = [0, 8], sizes = [8, 8], strides = [1, 1]} : vector<32x16xf32> to vector<8x8xf32>
    %298 = vector.extract_strided_slice %217 {offsets = [8, 0], sizes = [8, 8], strides = [1, 1]} : vector<16x32xf32> to vector<8x8xf32>
    %cst_128 = arith.constant dense<0.000000e+00> : vector<8x8xf32>
    %299 = tpu.matmul %296, %297, %cst_128 {dimension_numbers = #tpu.dot_dimension_numbers<[1], [0], [0], [1], [0, 0, 1, 1], [], []>} : vector<8x8xf32>, vector<8x8xf32>, vector<8x8xf32> -> vector<8x8xf32>
    %cst_129 = arith.constant -1.000000e+20 : f32
    %300 = vector.broadcast %cst_129 : f32 to vector<8x8xf32>
    %301 = arith.select %295, %300, %299 : vector<8x8xi1>, vector<8x8xf32>
    %cst_130 = arith.constant 0.176776692 : f32
    %302 = vector.broadcast %cst_130 : f32 to vector<8x8xf32>
    %303 = arith.mulf %301, %302 : vector<8x8xf32>
    %cst_131 = arith.constant dense<0xFF800000> : vector<8xf32>
    %304 = vector.multi_reduction <maximumf>, %303, %cst_131 [1] : vector<8x8xf32> to vector<8xf32>
    %305 = vector.shape_cast %304 : vector<8xf32> to vector<8x1xf32>
    %306 = vector.broadcast %305 : vector<8x1xf32> to vector<8x8xf32>
    %307 = arith.subf %303, %306 : vector<8x8xf32>
    %308 = math.exp %307 : vector<8x8xf32>
    %cst_132 = arith.constant dense<0.000000e+00> : vector<8xf32>
    %309 = vector.multi_reduction <add>, %308, %cst_132 [1] : vector<8x8xf32> to vector<8xf32>
    %310 = vector.shape_cast %309 : vector<8xf32> to vector<8x1xf32>
    %311 = vector.broadcast %310 : vector<8x1xf32> to vector<8x8xf32>
    %312 = arith.divf %308, %311 : vector<8x8xf32>
    %cst_133 = arith.constant dense<0.000000e+00> : vector<8x8xf32>
    %313 = tpu.matmul %312, %298, %cst_133 {dimension_numbers = #tpu.dot_dimension_numbers<[1], [0], [0], [1], [0, 0, 1, 1], [], []>} : vector<8x8xf32>, vector<8x8xf32>, vector<8x8xf32> -> vector<8x8xf32>
    %314 = vector.extract_strided_slice %215 {offsets = [8, 8], sizes = [8, 8], strides = [1, 1]} : vector<16x32xf32> to vector<8x8xf32>
    %315 = vector.extract_strided_slice %218 {offsets = [8, 8], sizes = [8, 8], strides = [1, 1]} : vector<32x16xf32> to vector<8x8xf32>
    %316 = vector.extract_strided_slice %217 {offsets = [8, 8], sizes = [8, 8], strides = [1, 1]} : vector<16x32xf32> to vector<8x8xf32>
    %cst_134 = arith.constant dense<0.000000e+00> : vector<8x8xf32>
    %317 = tpu.matmul %314, %315, %cst_134 {dimension_numbers = #tpu.dot_dimension_numbers<[1], [0], [0], [1], [0, 0, 1, 1], [], []>} : vector<8x8xf32>, vector<8x8xf32>, vector<8x8xf32> -> vector<8x8xf32>
    %cst_135 = arith.constant -1.000000e+20 : f32
    %318 = vector.broadcast %cst_135 : f32 to vector<8x8xf32>
    %319 = arith.select %295, %318, %317 : vector<8x8xi1>, vector<8x8xf32>
    %cst_136 = arith.constant 0.176776692 : f32
    %320 = vector.broadcast %cst_136 : f32 to vector<8x8xf32>
    %321 = arith.mulf %319, %320 : vector<8x8xf32>
    %cst_137 = arith.constant dense<0xFF800000> : vector<8xf32>
    %322 = vector.multi_reduction <maximumf>, %321, %cst_137 [1] : vector<8x8xf32> to vector<8xf32>
    %323 = vector.shape_cast %322 : vector<8xf32> to vector<8x1xf32>
    %324 = vector.broadcast %323 : vector<8x1xf32> to vector<8x8xf32>
    %325 = arith.subf %321, %324 : vector<8x8xf32>
    %326 = math.exp %325 : vector<8x8xf32>
    %cst_138 = arith.constant dense<0.000000e+00> : vector<8xf32>
    %327 = vector.multi_reduction <add>, %326, %cst_138 [1] : vector<8x8xf32> to vector<8xf32>
    %328 = vector.shape_cast %327 : vector<8xf32> to vector<8x1xf32>
    %329 = vector.broadcast %328 : vector<8x1xf32> to vector<8x8xf32>
    %330 = arith.divf %326, %329 : vector<8x8xf32>
    %cst_139 = arith.constant dense<0.000000e+00> : vector<8x8xf32>
    %331 = tpu.matmul %330, %316, %cst_139 {dimension_numbers = #tpu.dot_dimension_numbers<[1], [0], [0], [1], [0, 0, 1, 1], [], []>} : vector<8x8xf32>, vector<8x8xf32>, vector<8x8xf32> -> vector<8x8xf32>
    %332 = vector.extract_strided_slice %215 {offsets = [8, 16], sizes = [8, 8], strides = [1, 1]} : vector<16x32xf32> to vector<8x8xf32>
    %333 = vector.extract_strided_slice %218 {offsets = [16, 8], sizes = [8, 8], strides = [1, 1]} : vector<32x16xf32> to vector<8x8xf32>
    %334 = vector.extract_strided_slice %217 {offsets = [8, 16], sizes = [8, 8], strides = [1, 1]} : vector<16x32xf32> to vector<8x8xf32>
    %cst_140 = arith.constant dense<0.000000e+00> : vector<8x8xf32>
    %335 = tpu.matmul %332, %333, %cst_140 {dimension_numbers = #tpu.dot_dimension_numbers<[1], [0], [0], [1], [0, 0, 1, 1], [], []>} : vector<8x8xf32>, vector<8x8xf32>, vector<8x8xf32> -> vector<8x8xf32>
    %cst_141 = arith.constant -1.000000e+20 : f32
    %336 = vector.broadcast %cst_141 : f32 to vector<8x8xf32>
    %337 = arith.select %295, %336, %335 : vector<8x8xi1>, vector<8x8xf32>
    %cst_142 = arith.constant 0.176776692 : f32
    %338 = vector.broadcast %cst_142 : f32 to vector<8x8xf32>
    %339 = arith.mulf %337, %338 : vector<8x8xf32>
    %cst_143 = arith.constant dense<0xFF800000> : vector<8xf32>
    %340 = vector.multi_reduction <maximumf>, %339, %cst_143 [1] : vector<8x8xf32> to vector<8xf32>
    %341 = vector.shape_cast %340 : vector<8xf32> to vector<8x1xf32>
    %342 = vector.broadcast %341 : vector<8x1xf32> to vector<8x8xf32>
    %343 = arith.subf %339, %342 : vector<8x8xf32>
    %344 = math.exp %343 : vector<8x8xf32>
    %cst_144 = arith.constant dense<0.000000e+00> : vector<8xf32>
    %345 = vector.multi_reduction <add>, %344, %cst_144 [1] : vector<8x8xf32> to vector<8xf32>
    %346 = vector.shape_cast %345 : vector<8xf32> to vector<8x1xf32>
    %347 = vector.broadcast %346 : vector<8x1xf32> to vector<8x8xf32>
    %348 = arith.divf %344, %347 : vector<8x8xf32>
    %cst_145 = arith.constant dense<0.000000e+00> : vector<8x8xf32>
    %349 = tpu.matmul %348, %334, %cst_145 {dimension_numbers = #tpu.dot_dimension_numbers<[1], [0], [0], [1], [0, 0, 1, 1], [], []>} : vector<8x8xf32>, vector<8x8xf32>, vector<8x8xf32> -> vector<8x8xf32>
    %350 = vector.extract_strided_slice %215 {offsets = [8, 24], sizes = [8, 8], strides = [1, 1]} : vector<16x32xf32> to vector<8x8xf32>
    %351 = vector.extract_strided_slice %218 {offsets = [24, 8], sizes = [8, 8], strides = [1, 1]} : vector<32x16xf32> to vector<8x8xf32>
    %352 = vector.extract_strided_slice %217 {offsets = [8, 24], sizes = [8, 8], strides = [1, 1]} : vector<16x32xf32> to vector<8x8xf32>
    %cst_146 = arith.constant dense<0.000000e+00> : vector<8x8xf32>
    %353 = tpu.matmul %350, %351, %cst_146 {dimension_numbers = #tpu.dot_dimension_numbers<[1], [0], [0], [1], [0, 0, 1, 1], [], []>} : vector<8x8xf32>, vector<8x8xf32>, vector<8x8xf32> -> vector<8x8xf32>
    %cst_147 = arith.constant -1.000000e+20 : f32
    %354 = vector.broadcast %cst_147 : f32 to vector<8x8xf32>
    %355 = arith.select %295, %354, %353 : vector<8x8xi1>, vector<8x8xf32>
    %cst_148 = arith.constant 0.176776692 : f32
    %356 = vector.broadcast %cst_148 : f32 to vector<8x8xf32>
    %357 = arith.mulf %355, %356 : vector<8x8xf32>
    %cst_149 = arith.constant dense<0xFF800000> : vector<8xf32>
    %358 = vector.multi_reduction <maximumf>, %357, %cst_149 [1] : vector<8x8xf32> to vector<8xf32>
    %359 = vector.shape_cast %358 : vector<8xf32> to vector<8x1xf32>
    %360 = vector.broadcast %359 : vector<8x1xf32> to vector<8x8xf32>
    %361 = arith.subf %357, %360 : vector<8x8xf32>
    %362 = math.exp %361 : vector<8x8xf32>
    %cst_150 = arith.constant dense<0.000000e+00> : vector<8xf32>
    %363 = vector.multi_reduction <add>, %362, %cst_150 [1] : vector<8x8xf32> to vector<8xf32>
    %364 = vector.shape_cast %363 : vector<8xf32> to vector<8x1xf32>
    %365 = vector.broadcast %364 : vector<8x1xf32> to vector<8x8xf32>
    %366 = arith.divf %362, %365 : vector<8x8xf32>
    %cst_151 = arith.constant dense<0.000000e+00> : vector<8x8xf32>
    %367 = tpu.matmul %366, %352, %cst_151 {dimension_numbers = #tpu.dot_dimension_numbers<[1], [0], [0], [1], [0, 0, 1, 1], [], []>} : vector<8x8xf32>, vector<8x8xf32>, vector<8x8xf32> -> vector<8x8xf32>
    %368 = tpu.concatenate %313, %331, %349, %367 in 1 : vector<8x8xf32>, vector<8x8xf32>, vector<8x8xf32>, vector<8x8xf32> -> vector<8x32xf32>
    %369 = tpu.concatenate %293, %368 in 0 : vector<8x32xf32>, vector<8x32xf32> -> vector<16x32xf32>
    %cst_152 = arith.constant dense<0.000000e+00> : vector<16x32xf32>
    %370 = tpu.matmul %369, %17, %cst_152 {dimension_numbers = #tpu.dot_dimension_numbers<[1], [0], [0], [1], [0, 0, 1, 1], [], []>} : vector<16x32xf32>, vector<32x32xf32>, vector<16x32xf32> -> vector<16x32xf32>
    %371 = vector.broadcast %18 : vector<1x32xf32> to vector<16x32xf32>
    %372 = arith.addf %370, %371 : vector<16x32xf32>
    %373 = arith.addf %372, %210 : vector<16x32xf32>
    %cst_153 = arith.constant dense<0.000000e+00> : vector<16xf32>
    %374 = vector.multi_reduction <add>, %373, %cst_153 [1] : vector<16x32xf32> to vector<16xf32>
    %375 = vector.shape_cast %374 : vector<16xf32> to vector<16x1xf32>
    %cst_154 = arith.constant 3.200000e+01 : f32
    %376 = vector.broadcast %cst_154 : f32 to vector<16x1xf32>
    %377 = arith.divf %375, %376 : vector<16x1xf32>
    %378 = vector.broadcast %377 : vector<16x1xf32> to vector<16x32xf32>
    %379 = arith.subf %373, %378 : vector<16x32xf32>
    %380 = arith.mulf %379, %379 : vector<16x32xf32>
    %cst_155 = arith.constant dense<0.000000e+00> : vector<16xf32>
    %381 = vector.multi_reduction <add>, %380, %cst_155 [1] : vector<16x32xf32> to vector<16xf32>
    %382 = vector.shape_cast %381 : vector<16xf32> to vector<16x1xf32>
    %cst_156 = arith.constant 3.200000e+01 : f32
    %383 = vector.broadcast %cst_156 : f32 to vector<16x1xf32>
    %384 = arith.divf %382, %383 : vector<16x1xf32>
    %385 = vector.broadcast %377 : vector<16x1xf32> to vector<16x32xf32>
    %386 = arith.subf %373, %385 : vector<16x32xf32>
    %cst_157 = arith.constant 9.99999974E-6 : f32
    %387 = vector.broadcast %cst_157 : f32 to vector<16x1xf32>
    %388 = arith.addf %384, %387 : vector<16x1xf32>
    %389 = math.rsqrt %388 : vector<16x1xf32>
    %390 = vector.broadcast %389 : vector<16x1xf32> to vector<16x32xf32>
    %391 = arith.mulf %386, %390 : vector<16x32xf32>
    %392 = vector.broadcast %19 : vector<1x32xf32> to vector<16x32xf32>
    %393 = arith.mulf %391, %392 : vector<16x32xf32>
    %394 = vector.broadcast %20 : vector<1x32xf32> to vector<16x32xf32>
    %395 = arith.addf %393, %394 : vector<16x32xf32>
    %cst_158 = arith.constant dense<0.000000e+00> : vector<16x128xf32>
    %396 = tpu.matmul %395, %21, %cst_158 {dimension_numbers = #tpu.dot_dimension_numbers<[1], [0], [0], [1], [0, 0, 1, 1], [], []>} : vector<16x32xf32>, vector<32x128xf32>, vector<16x128xf32> -> vector<16x128xf32>
    %397 = vector.broadcast %22 : vector<1x128xf32> to vector<16x128xf32>
    %398 = arith.addf %396, %397 : vector<16x128xf32>
    %cst_159 = arith.constant 0.000000e+00 : f32
    %399 = vector.broadcast %cst_159 : f32 to vector<16x128xf32>
    %400 = arith.maximumf %398, %399 : vector<16x128xf32>
    %cst_160 = arith.constant dense<0.000000e+00> : vector<16x32xf32>
    %401 = tpu.matmul %400, %23, %cst_160 {dimension_numbers = #tpu.dot_dimension_numbers<[1], [0], [0], [1], [0, 0, 1, 1], [], []>} : vector<16x128xf32>, vector<128x32xf32>, vector<16x32xf32> -> vector<16x32xf32>
    %402 = vector.broadcast %24 : vector<1x32xf32> to vector<16x32xf32>
    %403 = arith.addf %401, %402 : vector<16x32xf32>
    %404 = arith.addf %403, %395 : vector<16x32xf32>
    %cst_161 = arith.constant dense<0.000000e+00> : vector<16xf32>
    %405 = vector.multi_reduction <add>, %404, %cst_161 [1] : vector<16x32xf32> to vector<16xf32>
    %406 = vector.shape_cast %405 : vector<16xf32> to vector<16x1xf32>
    %cst_162 = arith.constant 3.200000e+01 : f32
    %407 = vector.broadcast %cst_162 : f32 to vector<16x1xf32>
    %408 = arith.divf %406, %407 : vector<16x1xf32>
    %409 = vector.broadcast %408 : vector<16x1xf32> to vector<16x32xf32>
    %410 = arith.subf %404, %409 : vector<16x32xf32>
    %411 = arith.mulf %410, %410 : vector<16x32xf32>
    %cst_163 = arith.constant dense<0.000000e+00> : vector<16xf32>
    %412 = vector.multi_reduction <add>, %411, %cst_163 [1] : vector<16x32xf32> to vector<16xf32>
    %413 = vector.shape_cast %412 : vector<16xf32> to vector<16x1xf32>
    %cst_164 = arith.constant 3.200000e+01 : f32
    %414 = vector.broadcast %cst_164 : f32 to vector<16x1xf32>
    %415 = arith.divf %413, %414 : vector<16x1xf32>
    %416 = vector.broadcast %408 : vector<16x1xf32> to vector<16x32xf32>
    %417 = arith.subf %404, %416 : vector<16x32xf32>
    %cst_165 = arith.constant 9.99999974E-6 : f32
    %418 = vector.broadcast %cst_165 : f32 to vector<16x1xf32>
    %419 = arith.addf %415, %418 : vector<16x1xf32>
    %420 = math.rsqrt %419 : vector<16x1xf32>
    %421 = vector.broadcast %420 : vector<16x1xf32> to vector<16x32xf32>
    %422 = arith.mulf %417, %421 : vector<16x32xf32>
    %423 = vector.broadcast %25 : vector<1x32xf32> to vector<16x32xf32>
    %424 = arith.mulf %422, %423 : vector<16x32xf32>
    %425 = vector.broadcast %26 : vector<1x32xf32> to vector<16x32xf32>
    %426 = arith.addf %424, %425 : vector<16x32xf32>
    %c0_166 = arith.constant 0 : index
    %c0_167 = arith.constant 0 : index
    %427 = vector.load %arg23[%c0_166, %c0_167] : memref<16x32xf32, #tpu.memory_space<vmem>>, vector<16x32xf32>
    tpu.vector_store %arg23[%c0_166, %c0_167], %426 {strides = array<i32>} : memref<16x32xf32, #tpu.memory_space<vmem>>, vector<16x32xf32>,
    return
  }
}

</mosaic_0001>

<llo_original>
// kernel: decoder_block.1
$region0: #{decoder_block.1}
  #allocation0 [shape = 'u32[]', space=smem, size = 0x4, offset = 0x4, fixed_abs, tag = 'smem constant byte address 0x4 - core index']
  #allocation1 [shape = 'u32[144,128]{1,0:T(1,128)}', space=vmem, size = 0x12000, scoped, tag = 'internal scratch']
  %s0 = inlined_call_operand.hbm [shape: f32[16,32], index: 0, kind: input, shape index: {}]
  %s1 = inlined_call_operand.hbm [shape: f32[16,32], index: 1, kind: input, shape index: {}]
  %s2 = inlined_call_operand.hbm [shape: f32[16,32], index: 2, kind: input, shape index: {}]
  %s3 = inlined_call_operand.hbm [shape: f32[2,8,8], index: 3, kind: input, shape index: {}]
  %s4 = inlined_call_operand.hbm [shape: f32[2,8,8], index: 4, kind: input, shape index: {}]
  %s5 = inlined_call_operand.vmem [shape: f32[32,128], index: 5, kind: input, shape index: {}]
  %s6 = inlined_call_operand.vmem [shape: f32[1,128], index: 6, kind: input, shape index: {}]
  %s7 = inlined_call_operand.hbm [shape: f32[32,32], index: 7, kind: input, shape index: {}]
  %s8 = inlined_call_operand.hbm [shape: f32[1,32], index: 8, kind: input, shape index: {}]
  %s9 = inlined_call_operand.vmem [shape: f32[1,32], index: 9, kind: input, shape index: {}, may-alias: {9,15,21}]
  %s10 = inlined_call_operand.vmem [shape: f32[1,32], index: 10, kind: input, shape index: {}, may-alias: {10,16,22}]
  %s11 = inlined_call_operand.vmem [shape: f32[32,128], index: 11, kind: input, shape index: {}]
  %s12 = inlined_call_operand.vmem [shape: f32[1,128], index: 12, kind: input, shape index: {}]
  %s13 = inlined_call_operand.hbm [shape: f32[32,32], index: 13, kind: input, shape index: {}]
  %s14 = inlined_call_operand.hbm [shape: f32[1,32], index: 14, kind: input, shape index: {}]
  %s15 = inlined_call_operand.vmem [shape: f32[1,32], index: 15, kind: input, shape index: {}, may-alias: {9,15,21}]
  %s16 = inlined_call_operand.vmem [shape: f32[1,32], index: 16, kind: input, shape index: {}, may-alias: {10,16,22}]
  %s17 = inlined_call_operand.hbm [shape: f32[32,128], index: 17, kind: input, shape index: {}]
  %s18 = inlined_call_operand.hbm [shape: f32[1,128], index: 18, kind: input, shape index: {}]
  %s19 = inlined_call_operand.hbm [shape: f32[128,32], index: 19, kind: input, shape index: {}]
  %s20 = inlined_call_operand.hbm [shape: f32[1,32], index: 20, kind: input, shape index: {}]
  %s21 = inlined_call_operand.vmem [shape: f32[1,32], index: 21, kind: input, shape index: {}, may-alias: {9,15,21}]
  %s22 = inlined_call_operand.vmem [shape: f32[1,32], index: 22, kind: input, shape index: {}, may-alias: {10,16,22}]
  %s23 = inlined_call_operand.hbm [shape: f32[16,32], index: 23, kind: output, shape index: {}]
  %s24 = sld [smem:[#allocation0]]
  $region154: #{decoder_block.1} parent=0
    _
  %s26 = ssub.s32 1, %s24
  %s27 = scalar_select 0, %s26, %s24
  $region1: #{decoder_block.1} parent=0
    #allocation2 [shape = 'u8[8192]{0}', space=vmem, size = 0x2000, scoped, tag = 'input window, operand 0, single buffered']
    #allocation3 [shape = 's32[1]{0}', space=sflag, size = 0x4, scoped, tag = 'scoped memory for decoder_block.1']
    #allocation4 [shape = 's32[1]{0}', space=sflag, size = 0x4, scoped, tag = 'scoped memory for decoder_block.1']
    #allocation5 [shape = 'u8[8192]{0}', space=vmem, size = 0x2000, scoped, tag = 'input window, operand 1, single buffered']
    #allocation6 [shape = 's32[1]{0}', space=sflag, size = 0x4, scoped, tag = 'scoped memory for decoder_block.1']
    #allocation7 [shape = 'u8[8192]{0}', space=vmem, size = 0x2000, scoped, tag = 'input window, operand 2, single buffered']
    #allocation8 [shape = 'u8[8192]{0}', space=vmem, size = 0x2000, scoped, tag = 'input window, operand 3, single buffered']
    #allocation9 [shape = 's32[1]{0}', space=sflag, size = 0x4, scoped, tag = 'scoped memory for decoder_block.1']
    #allocation10 [shape = 'u8[8192]{0}', space=vmem, size = 0x2000, scoped, tag = 'input window, operand 4, single buffered']
    #allocation11 [shape = 'u8[16384]{0}', space=vmem, size = 0x4000, scoped, tag = 'input window, operand 7, single buffered']
    #allocation12 [shape = 's32[1]{0}', space=sflag, size = 0x4, scoped, tag = 'scoped memory for decoder_block.1']
    #allocation13 [shape = 'u8[512]{0}', space=vmem, size = 0x400, scoped, tag = 'input window, operand 8, single buffered']
    #allocation14 [shape = 'u8[16384]{0}', space=vmem, size = 0x4000, scoped, tag = 'input window, operand 13, single buffered']
    #allocation15 [shape = 's32[1]{0}', space=sflag, size = 0x4, scoped, tag = 'scoped memory for decoder_block.1']
    #allocation16 [shape = 'u8[512]{0}', space=vmem, size = 0x400, scoped, tag = 'input window, operand 14, single buffered']
    #allocation17 [shape = 'u8[16384]{0}', space=vmem, size = 0x4000, scoped, tag = 'input window, operand 17, single buffered']
    #allocation18 [shape = 's32[1]{0}', space=sflag, size = 0x4, scoped, tag = 'scoped memory for decoder_block.1']
    #allocation19 [shape = 'u8[512]{0}', space=vmem, size = 0x400, scoped, tag = 'input window, operand 18, single buffered']
    #allocation20 [shape = 'u8[65536]{0}', space=vmem, size = 0x10000, scoped, tag = 'input window, operand 19, single buffered']
    #allocation21 [shape = 's32[1]{0}', space=sflag, size = 0x4, scoped, tag = 'scoped memory for decoder_block.1']
    #allocation22 [shape = 'u8[512]{0}', space=vmem, size = 0x400, scoped, tag = 'input window, operand 20, single buffered']
    #allocation23 [shape = 'u8[8192]{0}', space=vmem, size = 0x2000, scoped, tag = 'output window, operand 0, single buffered']
    %28 = vsyncpa [#allocation3], 0
    %29 = vsyncpa [#allocation6], 0
    %30 = vsyncpa [#allocation9], 0
    %31 = vsyncpa [#allocation12], 0
    %32 = vsyncpa [#allocation15], 0
    %33 = vsyncpa [#allocation18], 0
    %34 = vsyncpa [#allocation21], 0
    %35 = vsyncpa [#allocation4], 0
    // Predicated region
    $region2: #{decoder_block.1} parent=1 // pred_check
      _
    $region3: #{decoder_block.1} parent=1 // pred_check_branch
      %37 = sbr.rel (0) target = $region5
    $region4: #{decoder_block.1} parent=1 // pred_region
      %s39 = ssub.s32 256, 256
      %40 = vsyncadd [#allocation3], %s39
      %s41 = sshll.u32 [#allocation2], 4
      %s42 = int_to_ptr.vmem [resolvable:$true] %s41
      %47 = dma.hbm_to_vmem [thread:$0]  %s0, 256, %s42, [#allocation3], 128, 128, 8
    $region5: #{decoder_block.1} parent=1 // pred_fallthru
      _
    // Predicated region
    $region6: #{decoder_block.1} parent=1 // pred_check
      _
    $region7: #{decoder_block.1} parent=1 // pred_check_branch
      %49 = sbr.rel (0) target = $region9
    $region8: #{decoder_block.1} parent=1 // pred_region
      %s51 = ssub.s32 256, 256
      %52 = vsyncadd [#allocation6], %s51
      %s53 = sshll.u32 [#allocation5], 4
      %s54 = int_to_ptr.vmem [resolvable:$true] %s53
      %59 = dma.hbm_to_vmem [thread:$0]  %s1, 256, %s54, [#allocation6], 128, 128, 8
    $region9: #{decoder_block.1} parent=1 // pred_fallthru
      _
    // Predicated region
    $region10: #{decoder_block.1} parent=1 // pred_check
      _
    $region11: #{decoder_block.1} parent=1 // pred_check_branch
      %61 = sbr.rel (0) target = $region13
    $region12: #{decoder_block.1} parent=1 // pred_region
      %s63 = ssub.s32 256, 256
      %64 = vsyncadd [#allocation6], %s63
      %s65 = sshll.u32 [#allocation7], 4
      %s66 = int_to_ptr.vmem [resolvable:$true] %s65
      %71 = dma.hbm_to_vmem [thread:$0]  %s2, 256, %s66, [#allocation6], 128, 128, 8
    $region13: #{decoder_block.1} parent=1 // pred_fallthru
      _
    // Predicated region
    $region14: #{decoder_block.1} parent=1 // pred_check
      _
    $region15: #{decoder_block.1} parent=1 // pred_check_branch
      %73 = sbr.rel (0) target = $region17
    $region16: #{decoder_block.1} parent=1 // pred_region
      %s75 = ssub.s32 256, 256
      %76 = vsyncadd [#allocation9], %s75
      %s77 = sshll.u32 [#allocation8], 4
      %s78 = int_to_ptr.vmem [resolvable:$true] %s77
      %83 = dma.hbm_to_vmem [thread:$0]  %s3, 256, %s78, [#allocation9], 128, 128, 8
    $region17: #{decoder_block.1} parent=1 // pred_fallthru
      _
    // Predicated region
    $region18: #{decoder_block.1} parent=1 // pred_check
      _
    $region19: #{decoder_block.1} parent=1 // pred_check_branch
      %85 = sbr.rel (0) target = $region21
    $region20: #{decoder_block.1} parent=1 // pred_region
      %s87 = ssub.s32 256, 256
      %88 = vsyncadd [#allocation9], %s87
      %s89 = sshll.u32 [#allocation10], 4
      %s90 = int_to_ptr.vmem [resolvable:$true] %s89
      %95 = dma.hbm_to_vmem [thread:$0]  %s4, 256, %s90, [#allocation9], 128, 128, 8
    $region21: #{decoder_block.1} parent=1 // pred_fallthru
      _
    // Predicated region
    $region22: #{decoder_block.1} parent=1 // pred_check
      _
    $region23: #{decoder_block.1} parent=1 // pred_check_branch
      %97 = sbr.rel (0) target = $region25
    $region24: #{decoder_block.1} parent=1 // pred_region
      _
    $region25: #{decoder_block.1} parent=1 // pred_fallthru
      _
    // Predicated region
    $region26: #{decoder_block.1} parent=1 // pred_check
      _
    $region27: #{decoder_block.1} parent=1 // pred_check_branch
      %99 = sbr.rel (0) target = $region29
    $region28: #{decoder_block.1} parent=1 // pred_region
      _
    $region29: #{decoder_block.1} parent=1 // pred_fallthru
      _
    // Predicated region
    $region30: #{decoder_block.1} parent=1 // pred_check
      _
    $region31: #{decoder_block.1} parent=1 // pred_check_branch
      %101 = sbr.rel (0) target = $region33
    $region32: #{decoder_block.1} parent=1 // pred_region
      %s103 = ssub.s32 512, 512
      %104 = vsyncadd [#allocation12], %s103
      %s105 = sshll.u32 [#allocation11], 4
      %s106 = int_to_ptr.vmem [resolvable:$true] %s105
      %111 = dma.hbm_to_vmem [thread:$0]  %s7, 512, %s106, [#allocation12], 128, 128, 8
    $region33: #{decoder_block.1} parent=1 // pred_fallthru
      _
    // Predicated region
    $region34: #{decoder_block.1} parent=1 // pred_check
      _
    $region35: #{decoder_block.1} parent=1 // pred_check_branch
      %113 = sbr.rel (0) target = $region37
    $region36: #{decoder_block.1} parent=1 // pred_region
      %s115 = ssub.s32 16, 16
      %116 = vsyncadd [#allocation12], %s115
      %s118 = sshll.u32 [#allocation13], 4
      %s119 = int_to_ptr.vmem [resolvable:$true] %s118
      %121 = dma.hbm_to_vmem [thread:$0]  %s8, 16, %s119, [#allocation12]
    $region37: #{decoder_block.1} parent=1 // pred_fallthru
      _
    // Predicated region
    $region38: #{decoder_block.1} parent=1 // pred_check
      _
    $region39: #{decoder_block.1} parent=1 // pred_check_branch
      %123 = sbr.rel (0) target = $region41
    $region40: #{decoder_block.1} parent=1 // pred_region
      _
    $region41: #{decoder_block.1} parent=1 // pred_fallthru
      _
    // Predicated region
    $region42: #{decoder_block.1} parent=1 // pred_check
      _
    $region43: #{decoder_block.1} parent=1 // pred_check_branch
      %125 = sbr.rel (0) target = $region45
    $region44: #{decoder_block.1} parent=1 // pred_region
      _
    $region45: #{decoder_block.1} parent=1 // pred_fallthru
      _
    // Predicated region
    $region46: #{decoder_block.1} parent=1 // pred_check
      _
    $region47: #{decoder_block.1} parent=1 // pred_check_branch
      %127 = sbr.rel (0) target = $region49
    $region48: #{decoder_block.1} parent=1 // pred_region
      _
    $region49: #{decoder_block.1} parent=1 // pred_fallthru
      _
    // Predicated region
    $region50: #{decoder_block.1} parent=1 // pred_check
      _
    $region51: #{decoder_block.1} parent=1 // pred_check_branch
      %129 = sbr.rel (0) target = $region53
    $region52: #{decoder_block.1} parent=1 // pred_region
      _
    $region53: #{decoder_block.1} parent=1 // pred_fallthru
      _
    // Predicated region
    $region54: #{decoder_block.1} parent=1 // pred_check
      _
    $region55: #{decoder_block.1} parent=1 // pred_check_branch
      %131 = sbr.rel (0) target = $region57
    $region56: #{decoder_block.1} parent=1 // pred_region
      %s133 = ssub.s32 512, 512
      %134 = vsyncadd [#allocation15], %s133
      %s135 = sshll.u32 [#allocation14], 4
      %s136 = int_to_ptr.vmem [resolvable:$true] %s135
      %141 = dma.hbm_to_vmem [thread:$0]  %s13, 512, %s136, [#allocation15], 128, 128, 8
    $region57: #{decoder_block.1} parent=1 // pred_fallthru
      _
    // Predicated region
    $region58: #{decoder_block.1} parent=1 // pred_check
      _
    $region59: #{decoder_block.1} parent=1 // pred_check_branch
      %143 = sbr.rel (0) target = $region61
    $region60: #{decoder_block.1} parent=1 // pred_region
      %s145 = ssub.s32 16, 16
      %146 = vsyncadd [#allocation15], %s145
      %s148 = sshll.u32 [#allocation16], 4
      %s149 = int_to_ptr.vmem [resolvable:$true] %s148
      %151 = dma.hbm_to_vmem [thread:$0]  %s14, 16, %s149, [#allocation15]
    $region61: #{decoder_block.1} parent=1 // pred_fallthru
      _
    // Predicated region
    $region62: #{decoder_block.1} parent=1 // pred_check
      _
    $region63: #{decoder_block.1} parent=1 // pred_check_branch
      %153 = sbr.rel (0) target = $region65
    $region64: #{decoder_block.1} parent=1 // pred_region
      _
    $region65: #{decoder_block.1} parent=1 // pred_fallthru
      _
    // Predicated region
    $region66: #{decoder_block.1} parent=1 // pred_check
      _
    $region67: #{decoder_block.1} parent=1 // pred_check_branch
      %155 = sbr.rel (0) target = $region69
    $region68: #{decoder_block.1} parent=1 // pred_region
      _
    $region69: #{decoder_block.1} parent=1 // pred_fallthru
      _
    // Predicated region
    $region70: #{decoder_block.1} parent=1 // pred_check
      _
    $region71: #{decoder_block.1} parent=1 // pred_check_branch
      %157 = sbr.rel (0) target = $region73
    $region72: #{decoder_block.1} parent=1 // pred_region
      %s159 = ssub.s32 512, 512
      %160 = vsyncadd [#allocation18], %s159
      %s161 = sshll.u32 [#allocation17], 4
      %s162 = int_to_ptr.vmem [resolvable:$true] %s161
      %167 = dma.hbm_to_vmem [thread:$0]  %s17, 512, %s162, [#allocation18], 128, 128, 8
    $region73: #{decoder_block.1} parent=1 // pred_fallthru
      _
    // Predicated region
    $region74: #{decoder_block.1} parent=1 // pred_check
      _
    $region75: #{decoder_block.1} parent=1 // pred_check_branch
      %169 = sbr.rel (0) target = $region77
    $region76: #{decoder_block.1} parent=1 // pred_region
      %s171 = ssub.s32 16, 16
      %172 = vsyncadd [#allocation18], %s171
      %s174 = sshll.u32 [#allocation19], 4
      %s175 = int_to_ptr.vmem [resolvable:$true] %s174
      %177 = dma.hbm_to_vmem [thread:$0]  %s18, 16, %s175, [#allocation18]
    $region77: #{decoder_block.1} parent=1 // pred_fallthru
      _
    // Predicated region
    $region78: #{decoder_block.1} parent=1 // pred_check
      _
    $region79: #{decoder_block.1} parent=1 // pred_check_branch
      %179 = sbr.rel (0) target = $region81
    $region80: #{decoder_block.1} parent=1 // pred_region
      %s181 = ssub.s32 2048, 2048
      %182 = vsyncadd [#allocation21], %s181
      %s183 = sshll.u32 [#allocation20], 4
      %s184 = int_to_ptr.vmem [resolvable:$true] %s183
      %189 = dma.hbm_to_vmem [thread:$0]  %s19, 2048, %s184, [#allocation21], 128, 128, 8
    $region81: #{decoder_block.1} parent=1 // pred_fallthru
      _
    // Predicated region
    $region82: #{decoder_block.1} parent=1 // pred_check
      _
    $region83: #{decoder_block.1} parent=1 // pred_check_branch
      %191 = sbr.rel (0) target = $region85
    $region84: #{decoder_block.1} parent=1 // pred_region
      %s193 = ssub.s32 16, 16
      %194 = vsyncadd [#allocation21], %s193
      %s196 = sshll.u32 [#allocation22], 4
      %s197 = int_to_ptr.vmem [resolvable:$true] %s196
      %199 = dma.hbm_to_vmem [thread:$0]  %s20, 16, %s197, [#allocation21]
    $region85: #{decoder_block.1} parent=1 // pred_fallthru
      _
    // Predicated region
    $region86: #{decoder_block.1} parent=1 // pred_check
      _
    $region87: #{decoder_block.1} parent=1 // pred_check_branch
      %201 = sbr.rel (0) target = $region89
    $region88: #{decoder_block.1} parent=1 // pred_region
      _
    $region89: #{decoder_block.1} parent=1 // pred_fallthru
      _
    // Predicated region
    $region90: #{decoder_block.1} parent=1 // pred_check
      _
    $region91: #{decoder_block.1} parent=1 // pred_check_branch
      %203 = sbr.rel (0) target = $region93
    $region92: #{decoder_block.1} parent=1 // pred_region
      _
    $region93: #{decoder_block.1} parent=1 // pred_fallthru
      _
    // Predicated region
    $region94: #{decoder_block.1} parent=1 // pred_check
      _
    $region95: #{decoder_block.1} parent=1 // pred_check_branch
      %205 = sbr.rel (0) target = $region97
    $region96: #{decoder_block.1} parent=1 // pred_region
      %206 = dma.done [#allocation3], 256
    $region97: #{decoder_block.1} parent=1 // pred_fallthru
      _
    // Predicated region
    $region98: #{decoder_block.1} parent=1 // pred_check
      _
    $region99: #{decoder_block.1} parent=1 // pred_check_branch
      %208 = sbr.rel (0) target = $region101
    $region100: #{decoder_block.1} parent=1 // pred_region
      %209 = dma.done [#allocation6], 256
    $region101: #{decoder_block.1} parent=1 // pred_fallthru
      _
    // Predicated region
    $region102: #{decoder_block.1} parent=1 // pred_check
      _
    $region103: #{decoder_block.1} parent=1 // pred_check_branch
      %211 = sbr.rel (0) target = $region105
    $region104: #{decoder_block.1} parent=1 // pred_region
      %212 = dma.done [#allocation6], 256
    $region105: #{decoder_block.1} parent=1 // pred_fallthru
      _
    // Predicated region
    $region106: #{decoder_block.1} parent=1 // pred_check
      _
    $region107: #{decoder_block.1} parent=1 // pred_check_branch
      %214 = sbr.rel (0) target = $region109
    $region108: #{decoder_block.1} parent=1 // pred_region
      %215 = dma.done [#allocation9], 256
    $region109: #{decoder_block.1} parent=1 // pred_fallthru
      _
    // Predicated region
    $region110: #{decoder_block.1} parent=1 // pred_check
      _
    $region111: #{decoder_block.1} parent=1 // pred_check_branch
      %217 = sbr.rel (0) target = $region113
    $region112: #{decoder_block.1} parent=1 // pred_region
      %218 = dma.done [#allocation9], 256
    $region113: #{decoder_block.1} parent=1 // pred_fallthru
      _
    // Predicated region
    $region114: #{decoder_block.1} parent=1 // pred_check
      _
    $region115: #{decoder_block.1} parent=1 // pred_check_branch
      %220 = sbr.rel (0) target = $region117
    $region116: #{decoder_block.1} parent=1 // pred_region
      %221 = dma.done [#allocation12], 512
    $region117: #{decoder_block.1} parent=1 // pred_fallthru
      _
    // Predicated region
    $region118: #{decoder_block.1} parent=1 // pred_check
      _
    $region119: #{decoder_block.1} parent=1 // pred_check_branch
      %223 = sbr.rel (0) target = $region121
    $region120: #{decoder_block.1} parent=1 // pred_region
      %224 = dma.done [#allocation12], 16
    $region121: #{decoder_block.1} parent=1 // pred_fallthru
      _
    // Predicated region
    $region122: #{decoder_block.1} parent=1 // pred_check
      _
    $region123: #{decoder_block.1} parent=1 // pred_check_branch
      %226 = sbr.rel (0) target = $region125
    $region124: #{decoder_block.1} parent=1 // pred_region
      %227 = dma.done [#allocation15], 512
    $region125: #{decoder_block.1} parent=1 // pred_fallthru
      _
    // Predicated region
    $region126: #{decoder_block.1} parent=1 // pred_check
      _
    $region127: #{decoder_block.1} parent=1 // pred_check_branch
      %229 = sbr.rel (0) target = $region129
    $region128: #{decoder_block.1} parent=1 // pred_region
      %230 = dma.done [#allocation15], 16
    $region129: #{decoder_block.1} parent=1 // pred_fallthru
      _
    // Predicated region
    $region130: #{decoder_block.1} parent=1 // pred_check
      _
    $region131: #{decoder_block.1} parent=1 // pred_check_branch
      %232 = sbr.rel (0) target = $region133
    $region132: #{decoder_block.1} parent=1 // pred_region
      %233 = dma.done [#allocation18], 512
    $region133: #{decoder_block.1} parent=1 // pred_fallthru
      _
    // Predicated region
    $region134: #{decoder_block.1} parent=1 // pred_check
      _
    $region135: #{decoder_block.1} parent=1 // pred_check_branch
      %235 = sbr.rel (0) target = $region137
    $region136: #{decoder_block.1} parent=1 // pred_region
      %236 = dma.done [#allocation18], 16
    $region137: #{decoder_block.1} parent=1 // pred_fallthru
      _
    // Predicated region
    $region138: #{decoder_block.1} parent=1 // pred_check
      _
    $region139: #{decoder_block.1} parent=1 // pred_check_branch
      %238 = sbr.rel (0) target = $region141
    $region140: #{decoder_block.1} parent=1 // pred_region
      %239 = dma.done [#allocation21], 2048
    $region141: #{decoder_block.1} parent=1 // pred_fallthru
      _
    // Predicated region
    $region142: #{decoder_block.1} parent=1 // pred_check
      _
    $region143: #{decoder_block.1} parent=1 // pred_check_branch
      %241 = sbr.rel (0) target = $region145
    $region144: #{decoder_block.1} parent=1 // pred_region
      %242 = dma.done [#allocation21], 16
    $region145: #{decoder_block.1} parent=1 // pred_fallthru
      _
    %v243 = vld [vmem:[#allocation2] sm:$0xff]
    %v244 = vld [vmem:[#allocation2 + $0x8] sm:$0xff]
    %v245 = vld [vmem:[#allocation5] sm:$0xff]
    %v246 = vld [vmem:[#allocation5 + $0x8] sm:$0xff]
    %v247 = vld [vmem:[#allocation7] sm:$0xff]
    %v248 = vld [vmem:[#allocation7 + $0x8] sm:$0xff]
    %v249 = vld [vmem:[#allocation8] sm:$0xff]
    %v250 = vld [vmem:[#allocation8 + $0x8] sm:$0xff]
    %vm251 = vcmp.eq.f32.partialorder %v249, 0.0
    %vm252 = vcmp.eq.f32.partialorder %v250, 0.0
    %v253 = vld [vmem:[#allocation10] sm:$0xff]
    %v254 = vld [vmem:[#allocation10 + $0x8] sm:$0xff]
    %vm255 = vcmp.eq.f32.partialorder %v253, 0.0
    %vm256 = vcmp.eq.f32.partialorder %v254, 0.0
    %v257 = vld [vmem:[%s5] sm:$0xff]
    %v258 = vld [vmem:[%s5 + $0x8] sm:$0xff]
    %v259 = vld [vmem:[%s5 + $0x10] sm:$0xff]
    %v260 = vld [vmem:[%s5 + $0x18] sm:$0xff]
    %v261 = vld [vmem:[%s6] sm:$0x1]
    %v262 = vld [vmem:[#allocation11] sm:$0xff]
    %v263 = vld [vmem:[#allocation11 + $0x8] sm:$0xff]
    %v264 = vld [vmem:[#allocation11 + $0x10] sm:$0xff]
    %v265 = vld [vmem:[#allocation11 + $0x18] sm:$0xff]
    %v266 = vld [vmem:[#allocation13] sm:$0x1]
    %v267 = vld [vmem:[%s9] sm:$0x1]
    %v268 = vld [vmem:[%s10] sm:$0x1]
    %v269 = vld [vmem:[%s11] sm:$0xff]
    %v270 = vld [vmem:[%s11 + $0x8] sm:$0xff]
    %v271 = vld [vmem:[%s11 + $0x10] sm:$0xff]
    %v272 = vld [vmem:[%s11 + $0x18] sm:$0xff]
    %v273 = vld [vmem:[%s12] sm:$0x1]
    %v274 = vld [vmem:[#allocation14] sm:$0xff]
    %v275 = vld [vmem:[#allocation14 + $0x8] sm:$0xff]
    %v276 = vld [vmem:[#allocation14 + $0x10] sm:$0xff]
    %v277 = vld [vmem:[#allocation14 + $0x18] sm:$0xff]
    %v278 = vld [vmem:[#allocation16] sm:$0x1]
    %v279 = vld [vmem:[%s15] sm:$0x1]
    %v280 = vld [vmem:[%s16] sm:$0x1]
    %v281 = vld [vmem:[#allocation17] sm:$0xff]
    %v282 = vld [vmem:[#allocation17 + $0x8] sm:$0xff]
    %v283 = vld [vmem:[#allocation17 + $0x10] sm:$0xff]
    %v284 = vld [vmem:[#allocation17 + $0x18] sm:$0xff]
    %v285 = vld [vmem:[#allocation19] sm:$0x1]
    %v286 = vld [vmem:[#allocation20] sm:$0xff]
    %v287 = vld [vmem:[#allocation20 + $0x8] sm:$0xff]
    %v288 = vld [vmem:[#allocation20 + $0x10] sm:$0xff]
    %v289 = vld [vmem:[#allocation20 + $0x18] sm:$0xff]
    %v290 = vld [vmem:[#allocation20 + $0x20] sm:$0xff]
    %v291 = vld [vmem:[#allocation20 + $0x28] sm:$0xff]
    %v292 = vld [vmem:[#allocation20 + $0x30] sm:$0xff]
    %v293 = vld [vmem:[#allocation20 + $0x38] sm:$0xff]
    %v294 = vld [vmem:[#allocation20 + $0x40] sm:$0xff]
    %v295 = vld [vmem:[#allocation20 + $0x48] sm:$0xff]
    %v296 = vld [vmem:[#allocation20 + $0x50] sm:$0xff]
    %v297 = vld [vmem:[#allocation20 + $0x58] sm:$0xff]
    %v298 = vld [vmem:[#allocation20 + $0x60] sm:$0xff]
    %v299 = vld [vmem:[#allocation20 + $0x68] sm:$0xff]
    %v300 = vld [vmem:[#allocation20 + $0x70] sm:$0xff]
    %v301 = vld [vmem:[#allocation20 + $0x78] sm:$0xff]
    %v302 = vld [vmem:[#allocation22] sm:$0x1]
    %v303 = vld [vmem:[%s21] sm:$0x1]
    %v304 = vld [vmem:[%s22] sm:$0x1]
    %v306 = vlaneseq
    %v307 = vshrl.u32 %v306, 7
    %v308 = vsub.s32 0, %v307
    %v309 = vrot.slane %v261, %v308
    %vm311 = vcmask 261120
    %v313 = vsel %vm311, %v243, 0
    %v316 = vsel %vm311, %v244, 0
    %318 = vmatprep.subr.mxu0 0.0
    %319 = vmatpush1.msra.mxu0 %v257
    %320 = vmatprep.subr.mxu0 0.0
    %321 = vmatpush1.msra.mxu0 %v258
    %322 = vmatprep.subr.mxu0 0.0
    %323 = vmatpush1.msra.mxu0 %v259
    %324 = vmatprep.subr.mxu0 0.0
    %325 = vmatpush1.msra.mxu0 %v260
    %326 = vmatprep.subr.mxu0 0.0
    %327 = vmatpush1.msra.mxu0 0.0
    %328 = vmatprep.subr.mxu0 0.0
    %329 = vmatpush1.msra.mxu0 0.0
    %330 = vmatprep.subr.mxu0 0.0
    %331 = vmatpush1.msra.mxu0 0.0
    %332 = vmatprep.subr.mxu0 0.0
    %333 = vmatpush1.msra.mxu0 0.0
    %334 = vmatprep.subr.mxu0 0.0
    %335 = vmatpush1.msra.mxu0 0.0
    %336 = vmatprep.subr.mxu0 0.0
    %337 = vmatpush1.msra.mxu0 0.0
    %338 = vmatprep.subr.mxu0 0.0
    %339 = vmatpush1.msra.mxu0 0.0
    %340 = vmatprep.subr.mxu0 0.0
    %341 = vmatpush1.msra.mxu0 0.0
    %342 = vmatprep.subr.mxu0 0.0
    %343 = vmatpush1.msra.mxu0 0.0
    %344 = vmatprep.subr.mxu0 0.0
    %345 = vmatpush1.msra.mxu0 0.0
    %346 = vmatprep.subr.mxu0 0.0
    %347 = vmatpush1.msra.mxu0 0.0
    %348 = vmatprep.subr.mxu0 0.0
    %349 = vmatpush1.msra.mxu0 0.0
    %350 = vmatprep.subr.mxu0 0.0
    %351 = vmatpush1.msra.mxu0 0.0
    %352 = vmatprep.subr.mxu0 0.0
    %353 = vmatpush1.msra.mxu0 0.0
    %354 = vmatprep.subr.mxu0 0.0
    %355 = vmatpush1.msra.mxu0 0.0
    %356 = vmatprep.subr.mxu0 0.0
    %357 = vmatpush1.msra.mxu0 0.0
    %358 = vmatprep.subr.mxu0 0.0
    %359 = vmatpush1.msra.mxu0 0.0
    %360 = vmatprep.subr.mxu0 0.0
    %361 = vmatpush1.msra.mxu0 0.0
    %362 = vmatprep.subr.mxu0 0.0
    %363 = vmatpush1.msra.mxu0 0.0
    %364 = vmatprep.subr.mxu0 0.0
    %365 = vmatpush1.msra.mxu0 0.0
    %366 = vmatprep.subr.mxu0 0.0
    %367 = vmatpush1.msra.mxu0 0.0
    %368 = vmatprep.subr.mxu0 0.0
    %369 = vmatpush1.msra.mxu0 0.0
    %370 = vmatprep.subr.mxu0 0.0
    %371 = vmatpush1.msra.mxu0 0.0
    %372 = vmatprep.subr.mxu0 0.0
    %373 = vmatpush1.msra.mxu0 0.0
    %374 = vmatprep.subr.mxu0 0.0
    %375 = vmatpush1.msra.mxu0 0.0
    %376 = vmatprep.subr.mxu0 0.0
    %377 = vmatpush1.msra.mxu0 0.0
    %378 = vmatprep.subr.mxu0 0.0
    %379 = vmatpush1.msra.mxu0 0.0
    %380 = vmatprep.subr.mxu0 0.0
    %381 = vmatpush1.msra.mxu0 0.0
    %382 = vmatprep.mubr.f32.mxu0 0.0
    %383 = vmatmul.mubr.f32.gmra.mrb[0].mxu0 %v313
    %v384 = vpop.f32.mrb[0].mxu0
    %v385 = vadd.f32 %v309, %v384
    %v386 = vpop.f32.mrb[0].mxu0
    %387 = vmatprep.mubr.f32.mxu0 0.0
    %388 = vmatmul.mubr.f32.gmra.mrb[0].mxu0 %v316
    %v389 = vpop.f32.mrb[0].mxu0
    %v390 = vadd.f32 %v309, %v389
    %v391 = vpop.f32.mrb[0].mxu0
    %392 = vdwg.mxu0
    %394 = vrot.lane.b32.xlu0 %v385, 96
    %v395 = vpop.permute.xlu0 %394
    %vm396 = vcmask 64512
    %v397 = vsel %vm396, %v385, 0
    %v399 = vsel %vm396, %v395, 0
    %401 = vmatprep.subr.mxu0 0.0
    %402 = vmatpush1.xpose.msra.mxu0 %v399
    %403 = vmatprep.subr.mxu0 0.0
    %404 = vmatpush1.xpose.msra.mxu0 0.0
    %405 = vmatprep.subr.mxu0 0.0
    %406 = vmatpush1.xpose.msra.mxu0 0.0
    %407 = vmatprep.subr.mxu0 0.0
    %408 = vmatpush1.xpose.msra.mxu0 0.0
    %409 = vmatprep.subr.mxu0 0.0
    %410 = vmatpush1.xpose.msra.mxu0 0.0
    %411 = vmatprep.subr.mxu0 0.0
    %412 = vmatpush1.xpose.msra.mxu0 0.0
    %413 = vmatprep.subr.mxu0 0.0
    %414 = vmatpush1.xpose.msra.mxu0 0.0
    %415 = vmatprep.subr.mxu0 0.0
    %416 = vmatpush1.xpose.msra.mxu0 0.0
    %417 = vmatprep.subr.mxu0 0.0
    %418 = vmatpush1.xpose.msra.mxu0 0.0
    %419 = vmatprep.subr.mxu0 0.0
    %420 = vmatpush1.xpose.msra.mxu0 0.0
    %421 = vmatprep.subr.mxu0 0.0
    %422 = vmatpush1.xpose.msra.mxu0 0.0
    %423 = vmatprep.subr.mxu0 0.0
    %424 = vmatpush1.xpose.msra.mxu0 0.0
    %425 = vmatprep.subr.mxu0 0.0
    %426 = vmatpush1.xpose.msra.mxu0 0.0
    %427 = vmatprep.subr.mxu0 0.0
    %428 = vmatpush1.xpose.msra.mxu0 0.0
    %429 = vmatprep.subr.mxu0 0.0
    %430 = vmatpush1.xpose.msra.mxu0 0.0
    %431 = vmatprep.subr.mxu0 0.0
    %432 = vmatpush1.xpose.msra.mxu0 0.0
    %433 = vmatprep.subr.mxu0 0.0
    %434 = vmatpush1.xpose.msra.mxu0 0.0
    %435 = vmatprep.subr.mxu0 0.0
    %436 = vmatpush1.xpose.msra.mxu0 0.0
    %437 = vmatprep.subr.mxu0 0.0
    %438 = vmatpush1.xpose.msra.mxu0 0.0
    %439 = vmatprep.subr.mxu0 0.0
    %440 = vmatpush1.xpose.msra.mxu0 0.0
    %441 = vmatprep.subr.mxu0 0.0
    %442 = vmatpush1.xpose.msra.mxu0 0.0
    %443 = vmatprep.subr.mxu0 0.0
    %444 = vmatpush1.xpose.msra.mxu0 0.0
    %445 = vmatprep.subr.mxu0 0.0
    %446 = vmatpush1.xpose.msra.mxu0 0.0
    %447 = vmatprep.subr.mxu0 0.0
    %448 = vmatpush1.xpose.msra.mxu0 0.0
    %449 = vmatprep.subr.mxu0 0.0
    %450 = vmatpush1.xpose.msra.mxu0 0.0
    %451 = vmatprep.subr.mxu0 0.0
    %452 = vmatpush1.xpose.msra.mxu0 0.0
    %453 = vmatprep.subr.mxu0 0.0
    %454 = vmatpush1.xpose.msra.mxu0 0.0
    %455 = vmatprep.subr.mxu0 0.0
    %456 = vmatpush1.xpose.msra.mxu0 0.0
    %457 = vmatprep.subr.mxu0 0.0
    %458 = vmatpush1.xpose.msra.mxu0 0.0
    %459 = vmatprep.subr.mxu0 0.0
    %460 = vmatpush1.xpose.msra.mxu0 0.0
    %461 = vmatprep.subr.mxu0 0.0
    %462 = vmatpush1.xpose.msra.mxu0 0.0
    %463 = vmatprep.subr.mxu0 0.0
    %464 = vmatpush1.xpose.msra.mxu0 0.0
    %465 = vmatprep.mubr.f32.mxu0 0.0
    %466 = vmatmul.mubr.f32.gmra.mrb[0].mxu0 %v397
    %v467 = vpop.f32.mrb[0].mxu0
    %v468 = vadd.f32 0.0, %v467
    %v469 = vpop.f32.mrb[0].mxu0
    %470 = vdwg.mxu0
    %v471 = vsel %vm251, -1e+20, %v468
    %v472 = vmul.f32 %v471, 0.17677669
    %v473 = vsel %vm396, %v472, -inf
    %474 = vmax.xlane.f32.xlu0 %v473
    %v475 = vpop.xlane.xlu0 %474
    %v476 = vsub.f32 %v472, %v475
    %v477 = vmul.f32 %v476, 1.442695
    %v478 = vpow.pop %v477
    %v479 = vsel %vm396, %v478, 0.0
    %480 = vadd.xlane.f32.xlu0 %v479
    %v481 = vpop.xlane.xlu0 %480
    %v482 = vrcp.pop %v481
    %v483 = vmul.f32 %v478, %v482
    %484 = vrot.lane.b32.xlu0 %v385, 64
    %v485 = vpop.permute.xlu0 %484
    %v488 = vsel %vm396, %v483, 0
    %490 = vmatprep.subr.mxu0 0.0
    %491 = vmatpush1.msra.mxu0 %v485
    %492 = vmatprep.subr.mxu0 0.0
    %493 = vmatpush1.msra.mxu0 0.0
    %494 = vmatprep.subr.mxu0 0.0
    %495 = vmatpush1.msra.mxu0 0.0
    %496 = vmatprep.subr.mxu0 0.0
    %497 = vmatpush1.msra.mxu0 0.0
    %498 = vmatprep.subr.mxu0 0.0
    %499 = vmatpush1.msra.mxu0 0.0
    %500 = vmatprep.subr.mxu0 0.0
    %501 = vmatpush1.msra.mxu0 0.0
    %502 = vmatprep.subr.mxu0 0.0
    %503 = vmatpush1.msra.mxu0 0.0
    %504 = vmatprep.subr.mxu0 0.0
    %505 = vmatpush1.msra.mxu0 0.0
    %506 = vmatprep.subr.mxu0 0.0
    %507 = vmatpush1.msra.mxu0 0.0
    %508 = vmatprep.subr.mxu0 0.0
    %509 = vmatpush1.msra.mxu0 0.0
    %510 = vmatprep.subr.mxu0 0.0
    %511 = vmatpush1.msra.mxu0 0.0
    %512 = vmatprep.subr.mxu0 0.0
    %513 = vmatpush1.msra.mxu0 0.0
    %514 = vmatprep.subr.mxu0 0.0
    %515 = vmatpush1.msra.mxu0 0.0
    %516 = vmatprep.subr.mxu0 0.0
    %517 = vmatpush1.msra.mxu0 0.0
    %518 = vmatprep.subr.mxu0 0.0
    %519 = vmatpush1.msra.mxu0 0.0
    %520 = vmatprep.subr.mxu0 0.0
    %521 = vmatpush1.msra.mxu0 0.0
    %522 = vmatprep.subr.mxu0 0.0
    %523 = vmatpush1.msra.mxu0 0.0
    %524 = vmatprep.subr.mxu0 0.0
    %525 = vmatpush1.msra.mxu0 0.0
    %526 = vmatprep.subr.mxu0 0.0
    %527 = vmatpush1.msra.mxu0 0.0
    %528 = vmatprep.subr.mxu0 0.0
    %529 = vmatpush1.msra.mxu0 0.0
    %530 = vmatprep.subr.mxu0 0.0
    %531 = vmatpush1.msra.mxu0 0.0
    %532 = vmatprep.subr.mxu0 0.0
    %533 = vmatpush1.msra.mxu0 0.0
    %534 = vmatprep.subr.mxu0 0.0
    %535 = vmatpush1.msra.mxu0 0.0
    %536 = vmatprep.subr.mxu0 0.0
    %537 = vmatpush1.msra.mxu0 0.0
    %538 = vmatprep.subr.mxu0 0.0
    %539 = vmatpush1.msra.mxu0 0.0
    %540 = vmatprep.subr.mxu0 0.0
    %541 = vmatpush1.msra.mxu0 0.0
    %542 = vmatprep.subr.mxu0 0.0
    %543 = vmatpush1.msra.mxu0 0.0
    %544 = vmatprep.subr.mxu0 0.0
    %545 = vmatpush1.msra.mxu0 0.0
    %546 = vmatprep.subr.mxu0 0.0
    %547 = vmatpush1.msra.mxu0 0.0
    %548 = vmatprep.subr.mxu0 0.0
    %549 = vmatpush1.msra.mxu0 0.0
    %550 = vmatprep.subr.mxu0 0.0
    %551 = vmatpush1.msra.mxu0 0.0
    %552 = vmatprep.subr.mxu0 0.0
    %553 = vmatpush1.msra.mxu0 0.0
    %554 = vmatprep.mubr.f32.mxu0 0.0
    %555 = vmatmul.mubr.f32.gmra.mrb[0].mxu0 %v488
    %v556 = vpop.f32.mrb[0].mxu0
    %v557 = vadd.f32 0.0, %v556
    %v558 = vpop.f32.mrb[0].mxu0
    %559 = vdwg.mxu0
    %560 = vrot.lane.b32.xlu0 %v385, 120
    %v561 = vpop.permute.xlu0 %560
    %562 = vrot.lane.b32.xlu0 %v385, 88
    %v563 = vpop.permute.xlu0 %562
    %v564 = vsel %vm396, %v561, 0
    %v566 = vsel %vm396, %v563, 0
    %568 = vmatprep.subr.mxu0 0.0
    %569 = vmatpush1.xpose.msra.mxu0 %v566
    %570 = vmatprep.subr.mxu0 0.0
    %571 = vmatpush1.xpose.msra.mxu0 0.0
    %572 = vmatprep.subr.mxu0 0.0
    %573 = vmatpush1.xpose.msra.mxu0 0.0
    %574 = vmatprep.subr.mxu0 0.0
    %575 = vmatpush1.xpose.msra.mxu0 0.0
    %576 = vmatprep.subr.mxu0 0.0
    %577 = vmatpush1.xpose.msra.mxu0 0.0
    %578 = vmatprep.subr.mxu0 0.0
    %579 = vmatpush1.xpose.msra.mxu0 0.0
    %580 = vmatprep.subr.mxu0 0.0
    %581 = vmatpush1.xpose.msra.mxu0 0.0
    %582 = vmatprep.subr.mxu0 0.0
    %583 = vmatpush1.xpose.msra.mxu0 0.0
    %584 = vmatprep.subr.mxu0 0.0
    %585 = vmatpush1.xpose.msra.mxu0 0.0
    %586 = vmatprep.subr.mxu0 0.0
    %587 = vmatpush1.xpose.msra.mxu0 0.0
    %588 = vmatprep.subr.mxu0 0.0
    %589 = vmatpush1.xpose.msra.mxu0 0.0
    %590 = vmatprep.subr.mxu0 0.0
    %591 = vmatpush1.xpose.msra.mxu0 0.0
    %592 = vmatprep.subr.mxu0 0.0
    %593 = vmatpush1.xpose.msra.mxu0 0.0
    %594 = vmatprep.subr.mxu0 0.0
    %595 = vmatpush1.xpose.msra.mxu0 0.0
    %596 = vmatprep.subr.mxu0 0.0
    %597 = vmatpush1.xpose.msra.mxu0 0.0
    %598 = vmatprep.subr.mxu0 0.0
    %599 = vmatpush1.xpose.msra.mxu0 0.0
    %600 = vmatprep.subr.mxu0 0.0
    %601 = vmatpush1.xpose.msra.mxu0 0.0
    %602 = vmatprep.subr.mxu0 0.0
    %603 = vmatpush1.xpose.msra.mxu0 0.0
    %604 = vmatprep.subr.mxu0 0.0
    %605 = vmatpush1.xpose.msra.mxu0 0.0
    %606 = vmatprep.subr.mxu0 0.0
    %607 = vmatpush1.xpose.msra.mxu0 0.0
    %608 = vmatprep.subr.mxu0 0.0
    %609 = vmatpush1.xpose.msra.mxu0 0.0
    %610 = vmatprep.subr.mxu0 0.0
    %611 = vmatpush1.xpose.msra.mxu0 0.0
    %612 = vmatprep.subr.mxu0 0.0
    %613 = vmatpush1.xpose.msra.mxu0 0.0
    %614 = vmatprep.subr.mxu0 0.0
    %615 = vmatpush1.xpose.msra.mxu0 0.0
    %616 = vmatprep.subr.mxu0 0.0
    %617 = vmatpush1.xpose.msra.mxu0 0.0
    %618 = vmatprep.subr.mxu0 0.0
    %619 = vmatpush1.xpose.msra.mxu0 0.0
    %620 = vmatprep.subr.mxu0 0.0
    %621 = vmatpush1.xpose.msra.mxu0 0.0
    %622 = vmatprep.subr.mxu0 0.0
    %623 = vmatpush1.xpose.msra.mxu0 0.0
    %624 = vmatprep.subr.mxu0 0.0
    %625 = vmatpush1.xpose.msra.mxu0 0.0
    %626 = vmatprep.subr.mxu0 0.0
    %627 = vmatpush1.xpose.msra.mxu0 0.0
    %628 = vmatprep.subr.mxu0 0.0
    %629 = vmatpush1.xpose.msra.mxu0 0.0
    %630 = vmatprep.subr.mxu0 0.0
    %631 = vmatpush1.xpose.msra.mxu0 0.0
    %632 = vmatprep.mubr.f32.mxu0 0.0
    %633 = vmatmul.mubr.f32.gmra.mrb[0].mxu0 %v564
    %v634 = vpop.f32.mrb[0].mxu0
    %v635 = vadd.f32 0.0, %v634
    %v636 = vpop.f32.mrb[0].mxu0
    %637 = vdwg.mxu0
    %v638 = vsel %vm251, -1e+20, %v635
    %v639 = vmul.f32 %v638, 0.17677669
    %v640 = vsel %vm396, %v639, -inf
    %641 = vmax.xlane.f32.xlu0 %v640
    %v642 = vpop.xlane.xlu0 %641
    %v643 = vsub.f32 %v639, %v642
    %v644 = vmul.f32 %v643, 1.442695
    %v645 = vpow.pop %v644
    %v646 = vsel %vm396, %v645, 0.0
    %647 = vadd.xlane.f32.xlu0 %v646
    %v648 = vpop.xlane.xlu0 %647
    %v649 = vrcp.pop %v648
    %v650 = vmul.f32 %v645, %v649
    %651 = vrot.lane.b32.xlu0 %v385, 56
    %v652 = vpop.permute.xlu0 %651
    %v655 = vsel %vm396, %v650, 0
    %657 = vmatprep.subr.mxu0 0.0
    %658 = vmatpush1.msra.mxu0 %v652
    %659 = vmatprep.subr.mxu0 0.0
    %660 = vmatpush1.msra.mxu0 0.0
    %661 = vmatprep.subr.mxu0 0.0
    %662 = vmatpush1.msra.mxu0 0.0
    %663 = vmatprep.subr.mxu0 0.0
    %664 = vmatpush1.msra.mxu0 0.0
    %665 = vmatprep.subr.mxu0 0.0
    %666 = vmatpush1.msra.mxu0 0.0
    %667 = vmatprep.subr.mxu0 0.0
    %668 = vmatpush1.msra.mxu0 0.0
    %669 = vmatprep.subr.mxu0 0.0
    %670 = vmatpush1.msra.mxu0 0.0
    %671 = vmatprep.subr.mxu0 0.0
    %672 = vmatpush1.msra.mxu0 0.0
    %673 = vmatprep.subr.mxu0 0.0
    %674 = vmatpush1.msra.mxu0 0.0
    %675 = vmatprep.subr.mxu0 0.0
    %676 = vmatpush1.msra.mxu0 0.0
    %677 = vmatprep.subr.mxu0 0.0
    %678 = vmatpush1.msra.mxu0 0.0
    %679 = vmatprep.subr.mxu0 0.0
    %680 = vmatpush1.msra.mxu0 0.0
    %681 = vmatprep.subr.mxu0 0.0
    %682 = vmatpush1.msra.mxu0 0.0
    %683 = vmatprep.subr.mxu0 0.0
    %684 = vmatpush1.msra.mxu0 0.0
    %685 = vmatprep.subr.mxu0 0.0
    %686 = vmatpush1.msra.mxu0 0.0
    %687 = vmatprep.subr.mxu0 0.0
    %688 = vmatpush1.msra.mxu0 0.0
    %689 = vmatprep.subr.mxu0 0.0
    %690 = vmatpush1.msra.mxu0 0.0
    %691 = vmatprep.subr.mxu0 0.0
    %692 = vmatpush1.msra.mxu0 0.0
    %693 = vmatprep.subr.mxu0 0.0
    %694 = vmatpush1.msra.mxu0 0.0
    %695 = vmatprep.subr.mxu0 0.0
    %696 = vmatpush1.msra.mxu0 0.0
    %697 = vmatprep.subr.mxu0 0.0
    %698 = vmatpush1.msra.mxu0 0.0
    %699 = vmatprep.subr.mxu0 0.0
    %700 = vmatpush1.msra.mxu0 0.0
    %701 = vmatprep.subr.mxu0 0.0
    %702 = vmatpush1.msra.mxu0 0.0
    %703 = vmatprep.subr.mxu0 0.0
    %704 = vmatpush1.msra.mxu0 0.0
    %705 = vmatprep.subr.mxu0 0.0
    %706 = vmatpush1.msra.mxu0 0.0
    %707 = vmatprep.subr.mxu0 0.0
    %708 = vmatpush1.msra.mxu0 0.0
    %709 = vmatprep.subr.mxu0 0.0
    %710 = vmatpush1.msra.mxu0 0.0
    %711 = vmatprep.subr.mxu0 0.0
    %712 = vmatpush1.msra.mxu0 0.0
    %713 = vmatprep.subr.mxu0 0.0
    %714 = vmatpush1.msra.mxu0 0.0
    %715 = vmatprep.subr.mxu0 0.0
    %716 = vmatpush1.msra.mxu0 0.0
    %717 = vmatprep.subr.mxu0 0.0
    %718 = vmatpush1.msra.mxu0 0.0
    %719 = vmatprep.subr.mxu0 0.0
    %720 = vmatpush1.msra.mxu0 0.0
    %721 = vmatprep.mubr.f32.mxu0 0.0
    %722 = vmatmul.mubr.f32.gmra.mrb[0].mxu0 %v655
    %v723 = vpop.f32.mrb[0].mxu0
    %v724 = vadd.f32 0.0, %v723
    %v725 = vpop.f32.mrb[0].mxu0
    %726 = vdwg.mxu0
    %727 = vrot.lane.b32.xlu0 %v385, 112
    %v728 = vpop.permute.xlu0 %727
    %729 = vrot.lane.b32.xlu0 %v385, 80
    %v730 = vpop.permute.xlu0 %729
    %v731 = vsel %vm396, %v728, 0
    %v733 = vsel %vm396, %v730, 0
    %735 = vmatprep.subr.mxu0 0.0
    %736 = vmatpush1.xpose.msra.mxu0 %v733
    %737 = vmatprep.subr.mxu0 0.0
    %738 = vmatpush1.xpose.msra.mxu0 0.0
    %739 = vmatprep.subr.mxu0 0.0
    %740 = vmatpush1.xpose.msra.mxu0 0.0
    %741 = vmatprep.subr.mxu0 0.0
    %742 = vmatpush1.xpose.msra.mxu0 0.0
    %743 = vmatprep.subr.mxu0 0.0
    %744 = vmatpush1.xpose.msra.mxu0 0.0
    %745 = vmatprep.subr.mxu0 0.0
    %746 = vmatpush1.xpose.msra.mxu0 0.0
    %747 = vmatprep.subr.mxu0 0.0
    %748 = vmatpush1.xpose.msra.mxu0 0.0
    %749 = vmatprep.subr.mxu0 0.0
    %750 = vmatpush1.xpose.msra.mxu0 0.0
    %751 = vmatprep.subr.mxu0 0.0
    %752 = vmatpush1.xpose.msra.mxu0 0.0
    %753 = vmatprep.subr.mxu0 0.0
    %754 = vmatpush1.xpose.msra.mxu0 0.0
    %755 = vmatprep.subr.mxu0 0.0
    %756 = vmatpush1.xpose.msra.mxu0 0.0
    %757 = vmatprep.subr.mxu0 0.0
    %758 = vmatpush1.xpose.msra.mxu0 0.0
    %759 = vmatprep.subr.mxu0 0.0
    %760 = vmatpush1.xpose.msra.mxu0 0.0
    %761 = vmatprep.subr.mxu0 0.0
    %762 = vmatpush1.xpose.msra.mxu0 0.0
    %763 = vmatprep.subr.mxu0 0.0
    %764 = vmatpush1.xpose.msra.mxu0 0.0
    %765 = vmatprep.subr.mxu0 0.0
    %766 = vmatpush1.xpose.msra.mxu0 0.0
    %767 = vmatprep.subr.mxu0 0.0
    %768 = vmatpush1.xpose.msra.mxu0 0.0
    %769 = vmatprep.subr.mxu0 0.0
    %770 = vmatpush1.xpose.msra.mxu0 0.0
    %771 = vmatprep.subr.mxu0 0.0
    %772 = vmatpush1.xpose.msra.mxu0 0.0
    %773 = vmatprep.subr.mxu0 0.0
    %774 = vmatpush1.xpose.msra.mxu0 0.0
    %775 = vmatprep.subr.mxu0 0.0
    %776 = vmatpush1.xpose.msra.mxu0 0.0
    %777 = vmatprep.subr.mxu0 0.0
    %778 = vmatpush1.xpose.msra.mxu0 0.0
    %779 = vmatprep.subr.mxu0 0.0
    %780 = vmatpush1.xpose.msra.mxu0 0.0
    %781 = vmatprep.subr.mxu0 0.0
    %782 = vmatpush1.xpose.msra.mxu0 0.0
    %783 = vmatprep.subr.mxu0 0.0
    %784 = vmatpush1.xpose.msra.mxu0 0.0
    %785 = vmatprep.subr.mxu0 0.0
    %786 = vmatpush1.xpose.msra.mxu0 0.0
    %787 = vmatprep.subr.mxu0 0.0
    %788 = vmatpush1.xpose.msra.mxu0 0.0
    %789 = vmatprep.subr.mxu0 0.0
    %790 = vmatpush1.xpose.msra.mxu0 0.0
    %791 = vmatprep.subr.mxu0 0.0
    %792 = vmatpush1.xpose.msra.mxu0 0.0
    %793 = vmatprep.subr.mxu0 0.0
    %794 = vmatpush1.xpose.msra.mxu0 0.0
    %795 = vmatprep.subr.mxu0 0.0
    %796 = vmatpush1.xpose.msra.mxu0 0.0
    %797 = vmatprep.subr.mxu0 0.0
    %798 = vmatpush1.xpose.msra.mxu0 0.0
    %799 = vmatprep.mubr.f32.mxu0 0.0
    %800 = vmatmul.mubr.f32.gmra.mrb[0].mxu0 %v731
    %v801 = vpop.f32.mrb[0].mxu0
    %v802 = vadd.f32 0.0, %v801
    %v803 = vpop.f32.mrb[0].mxu0
    %804 = vdwg.mxu0
    %v805 = vsel %vm251, -1e+20, %v802
    %v806 = vmul.f32 %v805, 0.17677669
    %v807 = vsel %vm396, %v806, -inf
    %808 = vmax.xlane.f32.xlu0 %v807
    %v809 = vpop.xlane.xlu0 %808
    %v810 = vsub.f32 %v806, %v809
    %v811 = vmul.f32 %v810, 1.442695
    %v812 = vpow.pop %v811
    %v813 = vsel %vm396, %v812, 0.0
    %814 = vadd.xlane.f32.xlu0 %v813
    %v815 = vpop.xlane.xlu0 %814
    %v816 = vrcp.pop %v815
    %v817 = vmul.f32 %v812, %v816
    %818 = vrot.lane.b32.xlu0 %v385, 48
    %v819 = vpop.permute.xlu0 %818
    %v822 = vsel %vm396, %v817, 0
    %824 = vmatprep.subr.mxu0 0.0
    %825 = vmatpush1.msra.mxu0 %v819
    %826 = vmatprep.subr.mxu0 0.0
    %827 = vmatpush1.msra.mxu0 0.0
    %828 = vmatprep.subr.mxu0 0.0
    %829 = vmatpush1.msra.mxu0 0.0
    %830 = vmatprep.subr.mxu0 0.0
    %831 = vmatpush1.msra.mxu0 0.0
    %832 = vmatprep.subr.mxu0 0.0
    %833 = vmatpush1.msra.mxu0 0.0
    %834 = vmatprep.subr.mxu0 0.0
    %835 = vmatpush1.msra.mxu0 0.0
    %836 = vmatprep.subr.mxu0 0.0
    %837 = vmatpush1.msra.mxu0 0.0
    %838 = vmatprep.subr.mxu0 0.0
    %839 = vmatpush1.msra.mxu0 0.0
    %840 = vmatprep.subr.mxu0 0.0
    %841 = vmatpush1.msra.mxu0 0.0
    %842 = vmatprep.subr.mxu0 0.0
    %843 = vmatpush1.msra.mxu0 0.0
    %844 = vmatprep.subr.mxu0 0.0
    %845 = vmatpush1.msra.mxu0 0.0
    %846 = vmatprep.subr.mxu0 0.0
    %847 = vmatpush1.msra.mxu0 0.0
    %848 = vmatprep.subr.mxu0 0.0
    %849 = vmatpush1.msra.mxu0 0.0
    %850 = vmatprep.subr.mxu0 0.0
    %851 = vmatpush1.msra.mxu0 0.0
    %852 = vmatprep.subr.mxu0 0.0
    %853 = vmatpush1.msra.mxu0 0.0
    %854 = vmatprep.subr.mxu0 0.0
    %855 = vmatpush1.msra.mxu0 0.0
    %856 = vmatprep.subr.mxu0 0.0
    %857 = vmatpush1.msra.mxu0 0.0
    %858 = vmatprep.subr.mxu0 0.0
    %859 = vmatpush1.msra.mxu0 0.0
    %860 = vmatprep.subr.mxu0 0.0
    %861 = vmatpush1.msra.mxu0 0.0
    %862 = vmatprep.subr.mxu0 0.0
    %863 = vmatpush1.msra.mxu0 0.0
    %864 = vmatprep.subr.mxu0 0.0
    %865 = vmatpush1.msra.mxu0 0.0
    %866 = vmatprep.subr.mxu0 0.0
    %867 = vmatpush1.msra.mxu0 0.0
    %868 = vmatprep.subr.mxu0 0.0
    %869 = vmatpush1.msra.mxu0 0.0
    %870 = vmatprep.subr.mxu0 0.0
    %871 = vmatpush1.msra.mxu0 0.0
    %872 = vmatprep.subr.mxu0 0.0
    %873 = vmatpush1.msra.mxu0 0.0
    %874 = vmatprep.subr.mxu0 0.0
    %875 = vmatpush1.msra.mxu0 0.0
    %876 = vmatprep.subr.mxu0 0.0
    %877 = vmatpush1.msra.mxu0 0.0
    %878 = vmatprep.subr.mxu0 0.0
    %879 = vmatpush1.msra.mxu0 0.0
    %880 = vmatprep.subr.mxu0 0.0
    %881 = vmatpush1.msra.mxu0 0.0
    %882 = vmatprep.subr.mxu0 0.0
    %883 = vmatpush1.msra.mxu0 0.0
    %884 = vmatprep.subr.mxu0 0.0
    %885 = vmatpush1.msra.mxu0 0.0
    %886 = vmatprep.subr.mxu0 0.0
    %887 = vmatpush1.msra.mxu0 0.0
    %888 = vmatprep.mubr.f32.mxu0 0.0
    %889 = vmatmul.mubr.f32.gmra.mrb[0].mxu0 %v822
    %v890 = vpop.f32.mrb[0].mxu0
    %v891 = vadd.f32 0.0, %v890
    %v892 = vpop.f32.mrb[0].mxu0
    %893 = vdwg.mxu0
    %894 = vrot.lane.b32.xlu0 %v385, 104
    %v895 = vpop.permute.xlu0 %894
    %896 = vrot.lane.b32.xlu0 %v385, 72
    %v897 = vpop.permute.xlu0 %896
    %v898 = vsel %vm396, %v895, 0
    %v900 = vsel %vm396, %v897, 0
    %902 = vmatprep.subr.mxu0 0.0
    %903 = vmatpush1.xpose.msra.mxu0 %v900
    %904 = vmatprep.subr.mxu0 0.0
    %905 = vmatpush1.xpose.msra.mxu0 0.0
    %906 = vmatprep.subr.mxu0 0.0
    %907 = vmatpush1.xpose.msra.mxu0 0.0
    %908 = vmatprep.subr.mxu0 0.0
    %909 = vmatpush1.xpose.msra.mxu0 0.0
    %910 = vmatprep.subr.mxu0 0.0
    %911 = vmatpush1.xpose.msra.mxu0 0.0
    %912 = vmatprep.subr.mxu0 0.0
    %913 = vmatpush1.xpose.msra.mxu0 0.0
    %914 = vmatprep.subr.mxu0 0.0
    %915 = vmatpush1.xpose.msra.mxu0 0.0
    %916 = vmatprep.subr.mxu0 0.0
    %917 = vmatpush1.xpose.msra.mxu0 0.0
    %918 = vmatprep.subr.mxu0 0.0
    %919 = vmatpush1.xpose.msra.mxu0 0.0
    %920 = vmatprep.subr.mxu0 0.0
    %921 = vmatpush1.xpose.msra.mxu0 0.0
    %922 = vmatprep.subr.mxu0 0.0
    %923 = vmatpush1.xpose.msra.mxu0 0.0
    %924 = vmatprep.subr.mxu0 0.0
    %925 = vmatpush1.xpose.msra.mxu0 0.0
    %926 = vmatprep.subr.mxu0 0.0
    %927 = vmatpush1.xpose.msra.mxu0 0.0
    %928 = vmatprep.subr.mxu0 0.0
    %929 = vmatpush1.xpose.msra.mxu0 0.0
    %930 = vmatprep.subr.mxu0 0.0
    %931 = vmatpush1.xpose.msra.mxu0 0.0
    %932 = vmatprep.subr.mxu0 0.0
    %933 = vmatpush1.xpose.msra.mxu0 0.0
    %934 = vmatprep.subr.mxu0 0.0
    %935 = vmatpush1.xpose.msra.mxu0 0.0
    %936 = vmatprep.subr.mxu0 0.0
    %937 = vmatpush1.xpose.msra.mxu0 0.0
    %938 = vmatprep.subr.mxu0 0.0
    %939 = vmatpush1.xpose.msra.mxu0 0.0
    %940 = vmatprep.subr.mxu0 0.0
    %941 = vmatpush1.xpose.msra.mxu0 0.0
    %942 = vmatprep.subr.mxu0 0.0
    %943 = vmatpush1.xpose.msra.mxu0 0.0
    %944 = vmatprep.subr.mxu0 0.0
    %945 = vmatpush1.xpose.msra.mxu0 0.0
    %946 = vmatprep.subr.mxu0 0.0
    %947 = vmatpush1.xpose.msra.mxu0 0.0
    %948 = vmatprep.subr.mxu0 0.0
    %949 = vmatpush1.xpose.msra.mxu0 0.0
    %950 = vmatprep.subr.mxu0 0.0
    %951 = vmatpush1.xpose.msra.mxu0 0.0
    %952 = vmatprep.subr.mxu0 0.0
    %953 = vmatpush1.xpose.msra.mxu0 0.0
    %954 = vmatprep.subr.mxu0 0.0
    %955 = vmatpush1.xpose.msra.mxu0 0.0
    %956 = vmatprep.subr.mxu0 0.0
    %957 = vmatpush1.xpose.msra.mxu0 0.0
    %958 = vmatprep.subr.mxu0 0.0
    %959 = vmatpush1.xpose.msra.mxu0 0.0
    %960 = vmatprep.subr.mxu0 0.0
    %961 = vmatpush1.xpose.msra.mxu0 0.0
    %962 = vmatprep.subr.mxu0 0.0
    %963 = vmatpush1.xpose.msra.mxu0 0.0
    %964 = vmatprep.subr.mxu0 0.0
    %965 = vmatpush1.xpose.msra.mxu0 0.0
    %966 = vmatprep.mubr.f32.mxu0 0.0
    %967 = vmatmul.mubr.f32.gmra.mrb[0].mxu0 %v898
    %v968 = vpop.f32.mrb[0].mxu0
    %v969 = vadd.f32 0.0, %v968
    %v970 = vpop.f32.mrb[0].mxu0
    %971 = vdwg.mxu0
    %v972 = vsel %vm251, -1e+20, %v969
    %v973 = vmul.f32 %v972, 0.17677669
    %v974 = vsel %vm396, %v973, -inf
    %975 = vmax.xlane.f32.xlu0 %v974
    %v976 = vpop.xlane.xlu0 %975
    %v977 = vsub.f32 %v973, %v976
    %v978 = vmul.f32 %v977, 1.442695
    %v979 = vpow.pop %v978
    %v980 = vsel %vm396, %v979, 0.0
    %981 = vadd.xlane.f32.xlu0 %v980
    %v982 = vpop.xlane.xlu0 %981
    %v983 = vrcp.pop %v982
    %v984 = vmul.f32 %v979, %v983
    %985 = vrot.lane.b32.xlu0 %v385, 40
    %v986 = vpop.permute.xlu0 %985
    %v989 = vsel %vm396, %v984, 0
    %991 = vmatprep.subr.mxu0 0.0
    %992 = vmatpush1.msra.mxu0 %v986
    %993 = vmatprep.subr.mxu0 0.0
    %994 = vmatpush1.msra.mxu0 0.0
    %995 = vmatprep.subr.mxu0 0.0
    %996 = vmatpush1.msra.mxu0 0.0
    %997 = vmatprep.subr.mxu0 0.0
    %998 = vmatpush1.msra.mxu0 0.0
    %999 = vmatprep.subr.mxu0 0.0
    %1000 = vmatpush1.msra.mxu0 0.0
    %1001 = vmatprep.subr.mxu0 0.0
    %1002 = vmatpush1.msra.mxu0 0.0
    %1003 = vmatprep.subr.mxu0 0.0
    %1004 = vmatpush1.msra.mxu0 0.0
    %1005 = vmatprep.subr.mxu0 0.0
    %1006 = vmatpush1.msra.mxu0 0.0
    %1007 = vmatprep.subr.mxu0 0.0
    %1008 = vmatpush1.msra.mxu0 0.0
    %1009 = vmatprep.subr.mxu0 0.0
    %1010 = vmatpush1.msra.mxu0 0.0
    %1011 = vmatprep.subr.mxu0 0.0
    %1012 = vmatpush1.msra.mxu0 0.0
    %1013 = vmatprep.subr.mxu0 0.0
    %1014 = vmatpush1.msra.mxu0 0.0
    %1015 = vmatprep.subr.mxu0 0.0
    %1016 = vmatpush1.msra.mxu0 0.0
    %1017 = vmatprep.subr.mxu0 0.0
    %1018 = vmatpush1.msra.mxu0 0.0
    %1019 = vmatprep.subr.mxu0 0.0
    %1020 = vmatpush1.msra.mxu0 0.0
    %1021 = vmatprep.subr.mxu0 0.0
    %1022 = vmatpush1.msra.mxu0 0.0
    %1023 = vmatprep.subr.mxu0 0.0
    %1024 = vmatpush1.msra.mxu0 0.0
    %1025 = vmatprep.subr.mxu0 0.0
    %1026 = vmatpush1.msra.mxu0 0.0
    %1027 = vmatprep.subr.mxu0 0.0
    %1028 = vmatpush1.msra.mxu0 0.0
    %1029 = vmatprep.subr.mxu0 0.0
    %1030 = vmatpush1.msra.mxu0 0.0
    %1031 = vmatprep.subr.mxu0 0.0
    %1032 = vmatpush1.msra.mxu0 0.0
    %1033 = vmatprep.subr.mxu0 0.0
    %1034 = vmatpush1.msra.mxu0 0.0
    %1035 = vmatprep.subr.mxu0 0.0
    %1036 = vmatpush1.msra.mxu0 0.0
    %1037 = vmatprep.subr.mxu0 0.0
    %1038 = vmatpush1.msra.mxu0 0.0
    %1039 = vmatprep.subr.mxu0 0.0
    %1040 = vmatpush1.msra.mxu0 0.0
    %1041 = vmatprep.subr.mxu0 0.0
    %1042 = vmatpush1.msra.mxu0 0.0
    %1043 = vmatprep.subr.mxu0 0.0
    %1044 = vmatpush1.msra.mxu0 0.0
    %1045 = vmatprep.subr.mxu0 0.0
    %1046 = vmatpush1.msra.mxu0 0.0
    %1047 = vmatprep.subr.mxu0 0.0
    %1048 = vmatpush1.msra.mxu0 0.0
    %1049 = vmatprep.subr.mxu0 0.0
    %1050 = vmatpush1.msra.mxu0 0.0
    %1051 = vmatprep.subr.mxu0 0.0
    %1052 = vmatpush1.msra.mxu0 0.0
    %1053 = vmatprep.subr.mxu0 0.0
    %1054 = vmatpush1.msra.mxu0 0.0
    %1055 = vmatprep.mubr.f32.mxu0 0.0
    %1056 = vmatmul.mubr.f32.gmra.mrb[0].mxu0 %v989
    %v1057 = vpop.f32.mrb[0].mxu0
    %v1058 = vadd.f32 0.0, %v1057
    %v1059 = vpop.f32.mrb[0].mxu0
    %1060 = vdwg.mxu0
    %1062 = vrot.lane.b32.xlu0 %v724, 8
    %v1063 = vpop.permute.xlu0 %1062
    %1066 = vrot.lane.b32.xlu0 %v891, 16
    %v1067 = vpop.permute.xlu0 %1066
    %1070 = vrot.lane.b32.xlu0 %v1058, 24
    %v1071 = vpop.permute.xlu0 %1070
    %v1073 = vsel %vm396, %v557, %v1063
    %vm1074 = vcmask 130048
    %v1075 = vsel %vm1074, %v1073, %v1067
    %vm1076 = vcmask 195584
    %v1077 = vsel %vm1076, %v1075, %v1071
    %1079 = vrot.lane.b32.xlu0 %v390, 96
    %v1080 = vpop.permute.xlu0 %1079
    %v1081 = vsel %vm396, %v390, 0
    %v1083 = vsel %vm396, %v1080, 0
    %1085 = vmatprep.subr.mxu0 0.0
    %1086 = vmatpush1.xpose.msra.mxu0 %v1083
    %1087 = vmatprep.subr.mxu0 0.0
    %1088 = vmatpush1.xpose.msra.mxu0 0.0
    %1089 = vmatprep.subr.mxu0 0.0
    %1090 = vmatpush1.xpose.msra.mxu0 0.0
    %1091 = vmatprep.subr.mxu0 0.0
    %1092 = vmatpush1.xpose.msra.mxu0 0.0
    %1093 = vmatprep.subr.mxu0 0.0
    %1094 = vmatpush1.xpose.msra.mxu0 0.0
    %1095 = vmatprep.subr.mxu0 0.0
    %1096 = vmatpush1.xpose.msra.mxu0 0.0
    %1097 = vmatprep.subr.mxu0 0.0
    %1098 = vmatpush1.xpose.msra.mxu0 0.0
    %1099 = vmatprep.subr.mxu0 0.0
    %1100 = vmatpush1.xpose.msra.mxu0 0.0
    %1101 = vmatprep.subr.mxu0 0.0
    %1102 = vmatpush1.xpose.msra.mxu0 0.0
    %1103 = vmatprep.subr.mxu0 0.0
    %1104 = vmatpush1.xpose.msra.mxu0 0.0
    %1105 = vmatprep.subr.mxu0 0.0
    %1106 = vmatpush1.xpose.msra.mxu0 0.0
    %1107 = vmatprep.subr.mxu0 0.0
    %1108 = vmatpush1.xpose.msra.mxu0 0.0
    %1109 = vmatprep.subr.mxu0 0.0
    %1110 = vmatpush1.xpose.msra.mxu0 0.0
    %1111 = vmatprep.subr.mxu0 0.0
    %1112 = vmatpush1.xpose.msra.mxu0 0.0
    %1113 = vmatprep.subr.mxu0 0.0
    %1114 = vmatpush1.xpose.msra.mxu0 0.0
    %1115 = vmatprep.subr.mxu0 0.0
    %1116 = vmatpush1.xpose.msra.mxu0 0.0
    %1117 = vmatprep.subr.mxu0 0.0
    %1118 = vmatpush1.xpose.msra.mxu0 0.0
    %1119 = vmatprep.subr.mxu0 0.0
    %1120 = vmatpush1.xpose.msra.mxu0 0.0
    %1121 = vmatprep.subr.mxu0 0.0
    %1122 = vmatpush1.xpose.msra.mxu0 0.0
    %1123 = vmatprep.subr.mxu0 0.0
    %1124 = vmatpush1.xpose.msra.mxu0 0.0
    %1125 = vmatprep.subr.mxu0 0.0
    %1126 = vmatpush1.xpose.msra.mxu0 0.0
    %1127 = vmatprep.subr.mxu0 0.0
    %1128 = vmatpush1.xpose.msra.mxu0 0.0
    %1129 = vmatprep.subr.mxu0 0.0
    %1130 = vmatpush1.xpose.msra.mxu0 0.0
    %1131 = vmatprep.subr.mxu0 0.0
    %1132 = vmatpush1.xpose.msra.mxu0 0.0
    %1133 = vmatprep.subr.mxu0 0.0
    %1134 = vmatpush1.xpose.msra.mxu0 0.0
    %1135 = vmatprep.subr.mxu0 0.0
    %1136 = vmatpush1.xpose.msra.mxu0 0.0
    %1137 = vmatprep.subr.mxu0 0.0
    %1138 = vmatpush1.xpose.msra.mxu0 0.0
    %1139 = vmatprep.subr.mxu0 0.0
    %1140 = vmatpush1.xpose.msra.mxu0 0.0
    %1141 = vmatprep.subr.mxu0 0.0
    %1142 = vmatpush1.xpose.msra.mxu0 0.0
    %1143 = vmatprep.subr.mxu0 0.0
    %1144 = vmatpush1.xpose.msra.mxu0 0.0
    %1145 = vmatprep.subr.mxu0 0.0
    %1146 = vmatpush1.xpose.msra.mxu0 0.0
    %1147 = vmatprep.subr.mxu0 0.0
    %1148 = vmatpush1.xpose.msra.mxu0 0.0
    %1149 = vmatprep.mubr.f32.mxu0 0.0
    %1150 = vmatmul.mubr.f32.gmra.mrb[0].mxu0 %v1081
    %v1151 = vpop.f32.mrb[0].mxu0
    %v1152 = vadd.f32 0.0, %v1151
    %v1153 = vpop.f32.mrb[0].mxu0
    %1154 = vdwg.mxu0
    %v1155 = vsel %vm252, -1e+20, %v1152
    %v1156 = vmul.f32 %v1155, 0.17677669
    %v1157 = vsel %vm396, %v1156, -inf
    %1158 = vmax.xlane.f32.xlu0 %v1157
    %v1159 = vpop.xlane.xlu0 %1158
    %v1160 = vsub.f32 %v1156, %v1159
    %v1161 = vmul.f32 %v1160, 1.442695
    %v1162 = vpow.pop %v1161
    %v1163 = vsel %vm396, %v1162, 0.0
    %1164 = vadd.xlane.f32.xlu0 %v1163
    %v1165 = vpop.xlane.xlu0 %1164
    %v1166 = vrcp.pop %v1165
    %v1167 = vmul.f32 %v1162, %v1166
    %1168 = vrot.lane.b32.xlu0 %v390, 64
    %v1169 = vpop.permute.xlu0 %1168
    %v1172 = vsel %vm396, %v1167, 0
    %1174 = vmatprep.subr.mxu0 0.0
    %1175 = vmatpush1.msra.mxu0 %v1169
    %1176 = vmatprep.subr.mxu0 0.0
    %1177 = vmatpush1.msra.mxu0 0.0
    %1178 = vmatprep.subr.mxu0 0.0
    %1179 = vmatpush1.msra.mxu0 0.0
    %1180 = vmatprep.subr.mxu0 0.0
    %1181 = vmatpush1.msra.mxu0 0.0
    %1182 = vmatprep.subr.mxu0 0.0
    %1183 = vmatpush1.msra.mxu0 0.0
    %1184 = vmatprep.subr.mxu0 0.0
    %1185 = vmatpush1.msra.mxu0 0.0
    %1186 = vmatprep.subr.mxu0 0.0
    %1187 = vmatpush1.msra.mxu0 0.0
    %1188 = vmatprep.subr.mxu0 0.0
    %1189 = vmatpush1.msra.mxu0 0.0
    %1190 = vmatprep.subr.mxu0 0.0
    %1191 = vmatpush1.msra.mxu0 0.0
    %1192 = vmatprep.subr.mxu0 0.0
    %1193 = vmatpush1.msra.mxu0 0.0
    %1194 = vmatprep.subr.mxu0 0.0
    %1195 = vmatpush1.msra.mxu0 0.0
    %1196 = vmatprep.subr.mxu0 0.0
    %1197 = vmatpush1.msra.mxu0 0.0
    %1198 = vmatprep.subr.mxu0 0.0
    %1199 = vmatpush1.msra.mxu0 0.0
    %1200 = vmatprep.subr.mxu0 0.0
    %1201 = vmatpush1.msra.mxu0 0.0
    %1202 = vmatprep.subr.mxu0 0.0
    %1203 = vmatpush1.msra.mxu0 0.0
    %1204 = vmatprep.subr.mxu0 0.0
    %1205 = vmatpush1.msra.mxu0 0.0
    %1206 = vmatprep.subr.mxu0 0.0
    %1207 = vmatpush1.msra.mxu0 0.0
    %1208 = vmatprep.subr.mxu0 0.0
    %1209 = vmatpush1.msra.mxu0 0.0
    %1210 = vmatprep.subr.mxu0 0.0
    %1211 = vmatpush1.msra.mxu0 0.0
    %1212 = vmatprep.subr.mxu0 0.0
    %1213 = vmatpush1.msra.mxu0 0.0
    %1214 = vmatprep.subr.mxu0 0.0
    %1215 = vmatpush1.msra.mxu0 0.0
    %1216 = vmatprep.subr.mxu0 0.0
    %1217 = vmatpush1.msra.mxu0 0.0
    %1218 = vmatprep.subr.mxu0 0.0
    %1219 = vmatpush1.msra.mxu0 0.0
    %1220 = vmatprep.subr.mxu0 0.0
    %1221 = vmatpush1.msra.mxu0 0.0
    %1222 = vmatprep.subr.mxu0 0.0
    %1223 = vmatpush1.msra.mxu0 0.0
    %1224 = vmatprep.subr.mxu0 0.0
    %1225 = vmatpush1.msra.mxu0 0.0
    %1226 = vmatprep.subr.mxu0 0.0
    %1227 = vmatpush1.msra.mxu0 0.0
    %1228 = vmatprep.subr.mxu0 0.0
    %1229 = vmatpush1.msra.mxu0 0.0
    %1230 = vmatprep.subr.mxu0 0.0
    %1231 = vmatpush1.msra.mxu0 0.0
    %1232 = vmatprep.subr.mxu0 0.0
    %1233 = vmatpush1.msra.mxu0 0.0
    %1234 = vmatprep.subr.mxu0 0.0
    %1235 = vmatpush1.msra.mxu0 0.0
    %1236 = vmatprep.subr.mxu0 0.0
    %1237 = vmatpush1.msra.mxu0 0.0
    %1238 = vmatprep.mubr.f32.mxu0 0.0
    %1239 = vmatmul.mubr.f32.gmra.mrb[0].mxu0 %v1172
    %v1240 = vpop.f32.mrb[0].mxu0
    %v1241 = vadd.f32 0.0, %v1240
    %v1242 = vpop.f32.mrb[0].mxu0
    %1243 = vdwg.mxu0
    %1244 = vrot.lane.b32.xlu0 %v390, 120
    %v1245 = vpop.permute.xlu0 %1244
    %1246 = vrot.lane.b32.xlu0 %v390, 88
    %v1247 = vpop.permute.xlu0 %1246
    %v1248 = vsel %vm396, %v1245, 0
    %v1250 = vsel %vm396, %v1247, 0
    %1252 = vmatprep.subr.mxu0 0.0
    %1253 = vmatpush1.xpose.msra.mxu0 %v1250
    %1254 = vmatprep.subr.mxu0 0.0
    %1255 = vmatpush1.xpose.msra.mxu0 0.0
    %1256 = vmatprep.subr.mxu0 0.0
    %1257 = vmatpush1.xpose.msra.mxu0 0.0
    %1258 = vmatprep.subr.mxu0 0.0
    %1259 = vmatpush1.xpose.msra.mxu0 0.0
    %1260 = vmatprep.subr.mxu0 0.0
    %1261 = vmatpush1.xpose.msra.mxu0 0.0
    %1262 = vmatprep.subr.mxu0 0.0
    %1263 = vmatpush1.xpose.msra.mxu0 0.0
    %1264 = vmatprep.subr.mxu0 0.0
    %1265 = vmatpush1.xpose.msra.mxu0 0.0
    %1266 = vmatprep.subr.mxu0 0.0
    %1267 = vmatpush1.xpose.msra.mxu0 0.0
    %1268 = vmatprep.subr.mxu0 0.0
    %1269 = vmatpush1.xpose.msra.mxu0 0.0
    %1270 = vmatprep.subr.mxu0 0.0
    %1271 = vmatpush1.xpose.msra.mxu0 0.0
    %1272 = vmatprep.subr.mxu0 0.0
    %1273 = vmatpush1.xpose.msra.mxu0 0.0
    %1274 = vmatprep.subr.mxu0 0.0
    %1275 = vmatpush1.xpose.msra.mxu0 0.0
    %1276 = vmatprep.subr.mxu0 0.0
    %1277 = vmatpush1.xpose.msra.mxu0 0.0
    %1278 = vmatprep.subr.mxu0 0.0
    %1279 = vmatpush1.xpose.msra.mxu0 0.0
    %1280 = vmatprep.subr.mxu0 0.0
    %1281 = vmatpush1.xpose.msra.mxu0 0.0
    %1282 = vmatprep.subr.mxu0 0.0
    %1283 = vmatpush1.xpose.msra.mxu0 0.0
    %1284 = vmatprep.subr.mxu0 0.0
    %1285 = vmatpush1.xpose.msra.mxu0 0.0
    %1286 = vmatprep.subr.mxu0 0.0
    %1287 = vmatpush1.xpose.msra.mxu0 0.0
    %1288 = vmatprep.subr.mxu0 0.0
    %1289 = vmatpush1.xpose.msra.mxu0 0.0
    %1290 = vmatprep.subr.mxu0 0.0
    %1291 = vmatpush1.xpose.msra.mxu0 0.0
    %1292 = vmatprep.subr.mxu0 0.0
    %1293 = vmatpush1.xpose.msra.mxu0 0.0
    %1294 = vmatprep.subr.mxu0 0.0
    %1295 = vmatpush1.xpose.msra.mxu0 0.0
    %1296 = vmatprep.subr.mxu0 0.0
    %1297 = vmatpush1.xpose.msra.mxu0 0.0
    %1298 = vmatprep.subr.mxu0 0.0
    %1299 = vmatpush1.xpose.msra.mxu0 0.0
    %1300 = vmatprep.subr.mxu0 0.0
    %1301 = vmatpush1.xpose.msra.mxu0 0.0
    %1302 = vmatprep.subr.mxu0 0.0
    %1303 = vmatpush1.xpose.msra.mxu0 0.0
    %1304 = vmatprep.subr.mxu0 0.0
    %1305 = vmatpush1.xpose.msra.mxu0 0.0
    %1306 = vmatprep.subr.mxu0 0.0
    %1307 = vmatpush1.xpose.msra.mxu0 0.0
    %1308 = vmatprep.subr.mxu0 0.0
    %1309 = vmatpush1.xpose.msra.mxu0 0.0
    %1310 = vmatprep.subr.mxu0 0.0
    %1311 = vmatpush1.xpose.msra.mxu0 0.0
    %1312 = vmatprep.subr.mxu0 0.0
    %1313 = vmatpush1.xpose.msra.mxu0 0.0
    %1314 = vmatprep.subr.mxu0 0.0
    %1315 = vmatpush1.xpose.msra.mxu0 0.0
    %1316 = vmatprep.mubr.f32.mxu0 0.0
    %1317 = vmatmul.mubr.f32.gmra.mrb[0].mxu0 %v1248
    %v1318 = vpop.f32.mrb[0].mxu0
    %v1319 = vadd.f32 0.0, %v1318
    %v1320 = vpop.f32.mrb[0].mxu0
    %1321 = vdwg.mxu0
    %v1322 = vsel %vm252, -1e+20, %v1319
    %v1323 = vmul.f32 %v1322, 0.17677669
    %v1324 = vsel %vm396, %v1323, -inf
    %1325 = vmax.xlane.f32.xlu0 %v1324
    %v1326 = vpop.xlane.xlu0 %1325
    %v1327 = vsub.f32 %v1323, %v1326
    %v1328 = vmul.f32 %v1327, 1.442695
    %v1329 = vpow.pop %v1328
    %v1330 = vsel %vm396, %v1329, 0.0
    %1331 = vadd.xlane.f32.xlu0 %v1330
    %v1332 = vpop.xlane.xlu0 %1331
    %v1333 = vrcp.pop %v1332
    %v1334 = vmul.f32 %v1329, %v1333
    %1335 = vrot.lane.b32.xlu0 %v390, 56
    %v1336 = vpop.permute.xlu0 %1335
    %v1339 = vsel %vm396, %v1334, 0
    %1341 = vmatprep.subr.mxu0 0.0
    %1342 = vmatpush1.msra.mxu0 %v1336
    %1343 = vmatprep.subr.mxu0 0.0
    %1344 = vmatpush1.msra.mxu0 0.0
    %1345 = vmatprep.subr.mxu0 0.0
    %1346 = vmatpush1.msra.mxu0 0.0
    %1347 = vmatprep.subr.mxu0 0.0
    %1348 = vmatpush1.msra.mxu0 0.0
    %1349 = vmatprep.subr.mxu0 0.0
    %1350 = vmatpush1.msra.mxu0 0.0
    %1351 = vmatprep.subr.mxu0 0.0
    %1352 = vmatpush1.msra.mxu0 0.0
    %1353 = vmatprep.subr.mxu0 0.0
    %1354 = vmatpush1.msra.mxu0 0.0
    %1355 = vmatprep.subr.mxu0 0.0
    %1356 = vmatpush1.msra.mxu0 0.0
    %1357 = vmatprep.subr.mxu0 0.0
    %1358 = vmatpush1.msra.mxu0 0.0
    %1359 = vmatprep.subr.mxu0 0.0
    %1360 = vmatpush1.msra.mxu0 0.0
    %1361 = vmatprep.subr.mxu0 0.0
    %1362 = vmatpush1.msra.mxu0 0.0
    %1363 = vmatprep.subr.mxu0 0.0
    %1364 = vmatpush1.msra.mxu0 0.0
    %1365 = vmatprep.subr.mxu0 0.0
    %1366 = vmatpush1.msra.mxu0 0.0
    %1367 = vmatprep.subr.mxu0 0.0
    %1368 = vmatpush1.msra.mxu0 0.0
    %1369 = vmatprep.subr.mxu0 0.0
    %1370 = vmatpush1.msra.mxu0 0.0
    %1371 = vmatprep.subr.mxu0 0.0
    %1372 = vmatpush1.msra.mxu0 0.0
    %1373 = vmatprep.subr.mxu0 0.0
    %1374 = vmatpush1.msra.mxu0 0.0
    %1375 = vmatprep.subr.mxu0 0.0
    %1376 = vmatpush1.msra.mxu0 0.0
    %1377 = vmatprep.subr.mxu0 0.0
    %1378 = vmatpush1.msra.mxu0 0.0
    %1379 = vmatprep.subr.mxu0 0.0
    %1380 = vmatpush1.msra.mxu0 0.0
    %1381 = vmatprep.subr.mxu0 0.0
    %1382 = vmatpush1.msra.mxu0 0.0
    %1383 = vmatprep.subr.mxu0 0.0
    %1384 = vmatpush1.msra.mxu0 0.0
    %1385 = vmatprep.subr.mxu0 0.0
    %1386 = vmatpush1.msra.mxu0 0.0
    %1387 = vmatprep.subr.mxu0 0.0
    %1388 = vmatpush1.msra.mxu0 0.0
    %1389 = vmatprep.subr.mxu0 0.0
    %1390 = vmatpush1.msra.mxu0 0.0
    %1391 = vmatprep.subr.mxu0 0.0
    %1392 = vmatpush1.msra.mxu0 0.0
    %1393 = vmatprep.subr.mxu0 0.0
    %1394 = vmatpush1.msra.mxu0 0.0
    %1395 = vmatprep.subr.mxu0 0.0
    %1396 = vmatpush1.msra.mxu0 0.0
    %1397 = vmatprep.subr.mxu0 0.0
    %1398 = vmatpush1.msra.mxu0 0.0
    %1399 = vmatprep.subr.mxu0 0.0
    %1400 = vmatpush1.msra.mxu0 0.0
    %1401 = vmatprep.subr.mxu0 0.0
    %1402 = vmatpush1.msra.mxu0 0.0
    %1403 = vmatprep.subr.mxu0 0.0
    %1404 = vmatpush1.msra.mxu0 0.0
    %1405 = vmatprep.mubr.f32.mxu0 0.0
    %1406 = vmatmul.mubr.f32.gmra.mrb[0].mxu0 %v1339
    %v1407 = vpop.f32.mrb[0].mxu0
    %v1408 = vadd.f32 0.0, %v1407
    %v1409 = vpop.f32.mrb[0].mxu0
    %1410 = vdwg.mxu0
    %1411 = vrot.lane.b32.xlu0 %v390, 112
    %v1412 = vpop.permute.xlu0 %1411
    %1413 = vrot.lane.b32.xlu0 %v390, 80
    %v1414 = vpop.permute.xlu0 %1413
    %v1415 = vsel %vm396, %v1412, 0
    %v1417 = vsel %vm396, %v1414, 0
    %1419 = vmatprep.subr.mxu0 0.0
    %1420 = vmatpush1.xpose.msra.mxu0 %v1417
    %1421 = vmatprep.subr.mxu0 0.0
    %1422 = vmatpush1.xpose.msra.mxu0 0.0
    %1423 = vmatprep.subr.mxu0 0.0
    %1424 = vmatpush1.xpose.msra.mxu0 0.0
    %1425 = vmatprep.subr.mxu0 0.0
    %1426 = vmatpush1.xpose.msra.mxu0 0.0
    %1427 = vmatprep.subr.mxu0 0.0
    %1428 = vmatpush1.xpose.msra.mxu0 0.0
    %1429 = vmatprep.subr.mxu0 0.0
    %1430 = vmatpush1.xpose.msra.mxu0 0.0
    %1431 = vmatprep.subr.mxu0 0.0
    %1432 = vmatpush1.xpose.msra.mxu0 0.0
    %1433 = vmatprep.subr.mxu0 0.0
    %1434 = vmatpush1.xpose.msra.mxu0 0.0
    %1435 = vmatprep.subr.mxu0 0.0
    %1436 = vmatpush1.xpose.msra.mxu0 0.0
    %1437 = vmatprep.subr.mxu0 0.0
    %1438 = vmatpush1.xpose.msra.mxu0 0.0
    %1439 = vmatprep.subr.mxu0 0.0
    %1440 = vmatpush1.xpose.msra.mxu0 0.0
    %1441 = vmatprep.subr.mxu0 0.0
    %1442 = vmatpush1.xpose.msra.mxu0 0.0
    %1443 = vmatprep.subr.mxu0 0.0
    %1444 = vmatpush1.xpose.msra.mxu0 0.0
    %1445 = vmatprep.subr.mxu0 0.0
    %1446 = vmatpush1.xpose.msra.mxu0 0.0
    %1447 = vmatprep.subr.mxu0 0.0
    %1448 = vmatpush1.xpose.msra.mxu0 0.0
    %1449 = vmatprep.subr.mxu0 0.0
    %1450 = vmatpush1.xpose.msra.mxu0 0.0
    %1451 = vmatprep.subr.mxu0 0.0
    %1452 = vmatpush1.xpose.msra.mxu0 0.0
    %1453 = vmatprep.subr.mxu0 0.0
    %1454 = vmatpush1.xpose.msra.mxu0 0.0
    %1455 = vmatprep.subr.mxu0 0.0
    %1456 = vmatpush1.xpose.msra.mxu0 0.0
    %1457 = vmatprep.subr.mxu0 0.0
    %1458 = vmatpush1.xpose.msra.mxu0 0.0
    %1459 = vmatprep.subr.mxu0 0.0
    %1460 = vmatpush1.xpose.msra.mxu0 0.0
    %1461 = vmatprep.subr.mxu0 0.0
    %1462 = vmatpush1.xpose.msra.mxu0 0.0
    %1463 = vmatprep.subr.mxu0 0.0
    %1464 = vmatpush1.xpose.msra.mxu0 0.0
    %1465 = vmatprep.subr.mxu0 0.0
    %1466 = vmatpush1.xpose.msra.mxu0 0.0
    %1467 = vmatprep.subr.mxu0 0.0
    %1468 = vmatpush1.xpose.msra.mxu0 0.0
    %1469 = vmatprep.subr.mxu0 0.0
    %1470 = vmatpush1.xpose.msra.mxu0 0.0
    %1471 = vmatprep.subr.mxu0 0.0
    %1472 = vmatpush1.xpose.msra.mxu0 0.0
    %1473 = vmatprep.subr.mxu0 0.0
    %1474 = vmatpush1.xpose.msra.mxu0 0.0
    %1475 = vmatprep.subr.mxu0 0.0
    %1476 = vmatpush1.xpose.msra.mxu0 0.0
    %1477 = vmatprep.subr.mxu0 0.0
    %1478 = vmatpush1.xpose.msra.mxu0 0.0
    %1479 = vmatprep.subr.mxu0 0.0
    %1480 = vmatpush1.xpose.msra.mxu0 0.0
    %1481 = vmatprep.subr.mxu0 0.0
    %1482 = vmatpush1.xpose.msra.mxu0 0.0
    %1483 = vmatprep.mubr.f32.mxu0 0.0
    %1484 = vmatmul.mubr.f32.gmra.mrb[0].mxu0 %v1415
    %v1485 = vpop.f32.mrb[0].mxu0
    %v1486 = vadd.f32 0.0, %v1485
    %v1487 = vpop.f32.mrb[0].mxu0
    %1488 = vdwg.mxu0
    %v1489 = vsel %vm252, -1e+20, %v1486
    %v1490 = vmul.f32 %v1489, 0.17677669
    %v1491 = vsel %vm396, %v1490, -inf
    %1492 = vmax.xlane.f32.xlu0 %v1491
    %v1493 = vpop.xlane.xlu0 %1492
    %v1494 = vsub.f32 %v1490, %v1493
    %v1495 = vmul.f32 %v1494, 1.442695
    %v1496 = vpow.pop %v1495
    %v1497 = vsel %vm396, %v1496, 0.0
    %1498 = vadd.xlane.f32.xlu0 %v1497
    %v1499 = vpop.xlane.xlu0 %1498
    %v1500 = vrcp.pop %v1499
    %v1501 = vmul.f32 %v1496, %v1500
    %1502 = vrot.lane.b32.xlu0 %v390, 48
    %v1503 = vpop.permute.xlu0 %1502
    %v1506 = vsel %vm396, %v1501, 0
    %1508 = vmatprep.subr.mxu0 0.0
    %1509 = vmatpush1.msra.mxu0 %v1503
    %1510 = vmatprep.subr.mxu0 0.0
    %1511 = vmatpush1.msra.mxu0 0.0
    %1512 = vmatprep.subr.mxu0 0.0
    %1513 = vmatpush1.msra.mxu0 0.0
    %1514 = vmatprep.subr.mxu0 0.0
    %1515 = vmatpush1.msra.mxu0 0.0
    %1516 = vmatprep.subr.mxu0 0.0
    %1517 = vmatpush1.msra.mxu0 0.0
    %1518 = vmatprep.subr.mxu0 0.0
    %1519 = vmatpush1.msra.mxu0 0.0
    %1520 = vmatprep.subr.mxu0 0.0
    %1521 = vmatpush1.msra.mxu0 0.0
    %1522 = vmatprep.subr.mxu0 0.0
    %1523 = vmatpush1.msra.mxu0 0.0
    %1524 = vmatprep.subr.mxu0 0.0
    %1525 = vmatpush1.msra.mxu0 0.0
    %1526 = vmatprep.subr.mxu0 0.0
    %1527 = vmatpush1.msra.mxu0 0.0
    %1528 = vmatprep.subr.mxu0 0.0
    %1529 = vmatpush1.msra.mxu0 0.0
    %1530 = vmatprep.subr.mxu0 0.0
    %1531 = vmatpush1.msra.mxu0 0.0
    %1532 = vmatprep.subr.mxu0 0.0
    %1533 = vmatpush1.msra.mxu0 0.0
    %1534 = vmatprep.subr.mxu0 0.0
    %1535 = vmatpush1.msra.mxu0 0.0
    %1536 = vmatprep.subr.mxu0 0.0
    %1537 = vmatpush1.msra.mxu0 0.0
    %1538 = vmatprep.subr.mxu0 0.0
    %1539 = vmatpush1.msra.mxu0 0.0
    %1540 = vmatprep.subr.mxu0 0.0
    %1541 = vmatpush1.msra.mxu0 0.0
    %1542 = vmatprep.subr.mxu0 0.0
    %1543 = vmatpush1.msra.mxu0 0.0
    %1544 = vmatprep.subr.mxu0 0.0
    %1545 = vmatpush1.msra.mxu0 0.0
    %1546 = vmatprep.subr.mxu0 0.0
    %1547 = vmatpush1.msra.mxu0 0.0
    %1548 = vmatprep.subr.mxu0 0.0
    %1549 = vmatpush1.msra.mxu0 0.0
    %1550 = vmatprep.subr.mxu0 0.0
    %1551 = vmatpush1.msra.mxu0 0.0
    %1552 = vmatprep.subr.mxu0 0.0
    %1553 = vmatpush1.msra.mxu0 0.0
    %1554 = vmatprep.subr.mxu0 0.0
    %1555 = vmatpush1.msra.mxu0 0.0
    %1556 = vmatprep.subr.mxu0 0.0
    %1557 = vmatpush1.msra.mxu0 0.0
    %1558 = vmatprep.subr.mxu0 0.0
    %1559 = vmatpush1.msra.mxu0 0.0
    %1560 = vmatprep.subr.mxu0 0.0
    %1561 = vmatpush1.msra.mxu0 0.0
    %1562 = vmatprep.subr.mxu0 0.0
    %1563 = vmatpush1.msra.mxu0 0.0
    %1564 = vmatprep.subr.mxu0 0.0
    %1565 = vmatpush1.msra.mxu0 0.0
    %1566 = vmatprep.subr.mxu0 0.0
    %1567 = vmatpush1.msra.mxu0 0.0
    %1568 = vmatprep.subr.mxu0 0.0
    %1569 = vmatpush1.msra.mxu0 0.0
    %1570 = vmatprep.subr.mxu0 0.0
    %1571 = vmatpush1.msra.mxu0 0.0
    %1572 = vmatprep.mubr.f32.mxu0 0.0
    %1573 = vmatmul.mubr.f32.gmra.mrb[0].mxu0 %v1506
    %v1574 = vpop.f32.mrb[0].mxu0
    %v1575 = vadd.f32 0.0, %v1574
    %v1576 = vpop.f32.mrb[0].mxu0
    %1577 = vdwg.mxu0
    %1578 = vrot.lane.b32.xlu0 %v390, 104
    %v1579 = vpop.permute.xlu0 %1578
    %1580 = vrot.lane.b32.xlu0 %v390, 72
    %v1581 = vpop.permute.xlu0 %1580
    %v1582 = vsel %vm396, %v1579, 0
    %v1584 = vsel %vm396, %v1581, 0
    %1586 = vmatprep.subr.mxu0 0.0
    %1587 = vmatpush1.xpose.msra.mxu0 %v1584
    %1588 = vmatprep.subr.mxu0 0.0
    %1589 = vmatpush1.xpose.msra.mxu0 0.0
    %1590 = vmatprep.subr.mxu0 0.0
    %1591 = vmatpush1.xpose.msra.mxu0 0.0
    %1592 = vmatprep.subr.mxu0 0.0
    %1593 = vmatpush1.xpose.msra.mxu0 0.0
    %1594 = vmatprep.subr.mxu0 0.0
    %1595 = vmatpush1.xpose.msra.mxu0 0.0
    %1596 = vmatprep.subr.mxu0 0.0
    %1597 = vmatpush1.xpose.msra.mxu0 0.0
    %1598 = vmatprep.subr.mxu0 0.0
    %1599 = vmatpush1.xpose.msra.mxu0 0.0
    %1600 = vmatprep.subr.mxu0 0.0
    %1601 = vmatpush1.xpose.msra.mxu0 0.0
    %1602 = vmatprep.subr.mxu0 0.0
    %1603 = vmatpush1.xpose.msra.mxu0 0.0
    %1604 = vmatprep.subr.mxu0 0.0
    %1605 = vmatpush1.xpose.msra.mxu0 0.0
    %1606 = vmatprep.subr.mxu0 0.0
    %1607 = vmatpush1.xpose.msra.mxu0 0.0
    %1608 = vmatprep.subr.mxu0 0.0
    %1609 = vmatpush1.xpose.msra.mxu0 0.0
    %1610 = vmatprep.subr.mxu0 0.0
    %1611 = vmatpush1.xpose.msra.mxu0 0.0
    %1612 = vmatprep.subr.mxu0 0.0
    %1613 = vmatpush1.xpose.msra.mxu0 0.0
    %1614 = vmatprep.subr.mxu0 0.0
    %1615 = vmatpush1.xpose.msra.mxu0 0.0
    %1616 = vmatprep.subr.mxu0 0.0
    %1617 = vmatpush1.xpose.msra.mxu0 0.0
    %1618 = vmatprep.subr.mxu0 0.0
    %1619 = vmatpush1.xpose.msra.mxu0 0.0
    %1620 = vmatprep.subr.mxu0 0.0
    %1621 = vmatpush1.xpose.msra.mxu0 0.0
    %1622 = vmatprep.subr.mxu0 0.0
    %1623 = vmatpush1.xpose.msra.mxu0 0.0
    %1624 = vmatprep.subr.mxu0 0.0
    %1625 = vmatpush1.xpose.msra.mxu0 0.0
    %1626 = vmatprep.subr.mxu0 0.0
    %1627 = vmatpush1.xpose.msra.mxu0 0.0
    %1628 = vmatprep.subr.mxu0 0.0
    %1629 = vmatpush1.xpose.msra.mxu0 0.0
    %1630 = vmatprep.subr.mxu0 0.0
    %1631 = vmatpush1.xpose.msra.mxu0 0.0
    %1632 = vmatprep.subr.mxu0 0.0
    %1633 = vmatpush1.xpose.msra.mxu0 0.0
    %1634 = vmatprep.subr.mxu0 0.0
    %1635 = vmatpush1.xpose.msra.mxu0 0.0
    %1636 = vmatprep.subr.mxu0 0.0
    %1637 = vmatpush1.xpose.msra.mxu0 0.0
    %1638 = vmatprep.subr.mxu0 0.0
    %1639 = vmatpush1.xpose.msra.mxu0 0.0
    %1640 = vmatprep.subr.mxu0 0.0
    %1641 = vmatpush1.xpose.msra.mxu0 0.0
    %1642 = vmatprep.subr.mxu0 0.0
    %1643 = vmatpush1.xpose.msra.mxu0 0.0
    %1644 = vmatprep.subr.mxu0 0.0
    %1645 = vmatpush1.xpose.msra.mxu0 0.0
    %1646 = vmatprep.subr.mxu0 0.0
    %1647 = vmatpush1.xpose.msra.mxu0 0.0
    %1648 = vmatprep.subr.mxu0 0.0
    %1649 = vmatpush1.xpose.msra.mxu0 0.0
    %1650 = vmatprep.mubr.f32.mxu0 0.0
    %1651 = vmatmul.mubr.f32.gmra.mrb[0].mxu0 %v1582
    %v1652 = vpop.f32.mrb[0].mxu0
    %v1653 = vadd.f32 0.0, %v1652
    %v1654 = vpop.f32.mrb[0].mxu0
    %1655 = vdwg.mxu0
    %v1656 = vsel %vm252, -1e+20, %v1653
    %v1657 = vmul.f32 %v1656, 0.17677669
    %v1658 = vsel %vm396, %v1657, -inf
    %1659 = vmax.xlane.f32.xlu0 %v1658
    %v1660 = vpop.xlane.xlu0 %1659
    %v1661 = vsub.f32 %v1657, %v1660
    %v1662 = vmul.f32 %v1661, 1.442695
    %v1663 = vpow.pop %v1662
    %v1664 = vsel %vm396, %v1663, 0.0
    %1665 = vadd.xlane.f32.xlu0 %v1664
    %v1666 = vpop.xlane.xlu0 %1665
    %v1667 = vrcp.pop %v1666
    %v1668 = vmul.f32 %v1663, %v1667
    %1669 = vrot.lane.b32.xlu0 %v390, 40
    %v1670 = vpop.permute.xlu0 %1669
    %v1673 = vsel %vm396, %v1668, 0
    %1675 = vmatprep.subr.mxu0 0.0
    %1676 = vmatpush1.msra.mxu0 %v1670
    %1677 = vmatprep.subr.mxu0 0.0
    %1678 = vmatpush1.msra.mxu0 0.0
    %1679 = vmatprep.subr.mxu0 0.0
    %1680 = vmatpush1.msra.mxu0 0.0
    %1681 = vmatprep.subr.mxu0 0.0
    %1682 = vmatpush1.msra.mxu0 0.0
    %1683 = vmatprep.subr.mxu0 0.0
    %1684 = vmatpush1.msra.mxu0 0.0
    %1685 = vmatprep.subr.mxu0 0.0
    %1686 = vmatpush1.msra.mxu0 0.0
    %1687 = vmatprep.subr.mxu0 0.0
    %1688 = vmatpush1.msra.mxu0 0.0
    %1689 = vmatprep.subr.mxu0 0.0
    %1690 = vmatpush1.msra.mxu0 0.0
    %1691 = vmatprep.subr.mxu0 0.0
    %1692 = vmatpush1.msra.mxu0 0.0
    %1693 = vmatprep.subr.mxu0 0.0
    %1694 = vmatpush1.msra.mxu0 0.0
    %1695 = vmatprep.subr.mxu0 0.0
    %1696 = vmatpush1.msra.mxu0 0.0
    %1697 = vmatprep.subr.mxu0 0.0
    %1698 = vmatpush1.msra.mxu0 0.0
    %1699 = vmatprep.subr.mxu0 0.0
    %1700 = vmatpush1.msra.mxu0 0.0
    %1701 = vmatprep.subr.mxu0 0.0
    %1702 = vmatpush1.msra.mxu0 0.0
    %1703 = vmatprep.subr.mxu0 0.0
    %1704 = vmatpush1.msra.mxu0 0.0
    %1705 = vmatprep.subr.mxu0 0.0
    %1706 = vmatpush1.msra.mxu0 0.0
    %1707 = vmatprep.subr.mxu0 0.0
    %1708 = vmatpush1.msra.mxu0 0.0
    %1709 = vmatprep.subr.mxu0 0.0
    %1710 = vmatpush1.msra.mxu0 0.0
    %1711 = vmatprep.subr.mxu0 0.0
    %1712 = vmatpush1.msra.mxu0 0.0
    %1713 = vmatprep.subr.mxu0 0.0
    %1714 = vmatpush1.msra.mxu0 0.0
    %1715 = vmatprep.subr.mxu0 0.0
    %1716 = vmatpush1.msra.mxu0 0.0
    %1717 = vmatprep.subr.mxu0 0.0
    %1718 = vmatpush1.msra.mxu0 0.0
    %1719 = vmatprep.subr.mxu0 0.0
    %1720 = vmatpush1.msra.mxu0 0.0
    %1721 = vmatprep.subr.mxu0 0.0
    %1722 = vmatpush1.msra.mxu0 0.0
    %1723 = vmatprep.subr.mxu0 0.0
    %1724 = vmatpush1.msra.mxu0 0.0
    %1725 = vmatprep.subr.mxu0 0.0
    %1726 = vmatpush1.msra.mxu0 0.0
    %1727 = vmatprep.subr.mxu0 0.0
    %1728 = vmatpush1.msra.mxu0 0.0
    %1729 = vmatprep.subr.mxu0 0.0
    %1730 = vmatpush1.msra.mxu0 0.0
    %1731 = vmatprep.subr.mxu0 0.0
    %1732 = vmatpush1.msra.mxu0 0.0
    %1733 = vmatprep.subr.mxu0 0.0
    %1734 = vmatpush1.msra.mxu0 0.0
    %1735 = vmatprep.subr.mxu0 0.0
    %1736 = vmatpush1.msra.mxu0 0.0
    %1737 = vmatprep.subr.mxu0 0.0
    %1738 = vmatpush1.msra.mxu0 0.0
    %1739 = vmatprep.mubr.f32.mxu0 0.0
    %1740 = vmatmul.mubr.f32.gmra.mrb[0].mxu0 %v1673
    %v1741 = vpop.f32.mrb[0].mxu0
    %v1742 = vadd.f32 0.0, %v1741
    %v1743 = vpop.f32.mrb[0].mxu0
    %1744 = vdwg.mxu0
    %1746 = vrot.lane.b32.xlu0 %v1408, 8
    %v1747 = vpop.permute.xlu0 %1746
    %1750 = vrot.lane.b32.xlu0 %v1575, 16
    %v1751 = vpop.permute.xlu0 %1750
    %1754 = vrot.lane.b32.xlu0 %v1742, 24
    %v1755 = vpop.permute.xlu0 %1754
    %v1757 = vsel %vm396, %v1241, %v1747
    %v1758 = vsel %vm1074, %v1757, %v1751
    %v1759 = vsel %vm1076, %v1758, %v1755
    %v1761 = vlaneseq
    %v1762 = vshrl.u32 %v1761, 7
    %v1763 = vsub.s32 0, %v1762
    %v1764 = vrot.slane %v266, %v1763
    %v1767 = vsel %vm311, %v1077, 0
    %v1770 = vsel %vm311, %v1759, 0
    %1772 = vmatprep.subr.mxu0 0.0
    %1773 = vmatpush1.msra.mxu0 %v262
    %1774 = vmatprep.subr.mxu0 0.0
    %1775 = vmatpush1.msra.mxu0 %v263
    %1776 = vmatprep.subr.mxu0 0.0
    %1777 = vmatpush1.msra.mxu0 %v264
    %1778 = vmatprep.subr.mxu0 0.0
    %1779 = vmatpush1.msra.mxu0 %v265
    %1780 = vmatprep.subr.mxu0 0.0
    %1781 = vmatpush1.msra.mxu0 0.0
    %1782 = vmatprep.subr.mxu0 0.0
    %1783 = vmatpush1.msra.mxu0 0.0
    %1784 = vmatprep.subr.mxu0 0.0
    %1785 = vmatpush1.msra.mxu0 0.0
    %1786 = vmatprep.subr.mxu0 0.0
    %1787 = vmatpush1.msra.mxu0 0.0
    %1788 = vmatprep.subr.mxu0 0.0
    %1789 = vmatpush1.msra.mxu0 0.0
    %1790 = vmatprep.subr.mxu0 0.0
    %1791 = vmatpush1.msra.mxu0 0.0
    %1792 = vmatprep.subr.mxu0 0.0
    %1793 = vmatpush1.msra.mxu0 0.0
    %1794 = vmatprep.subr.mxu0 0.0
    %1795 = vmatpush1.msra.mxu0 0.0
    %1796 = vmatprep.subr.mxu0 0.0
    %1797 = vmatpush1.msra.mxu0 0.0
    %1798 = vmatprep.subr.mxu0 0.0
    %1799 = vmatpush1.msra.mxu0 0.0
    %1800 = vmatprep.subr.mxu0 0.0
    %1801 = vmatpush1.msra.mxu0 0.0
    %1802 = vmatprep.subr.mxu0 0.0
    %1803 = vmatpush1.msra.mxu0 0.0
    %1804 = vmatprep.subr.mxu0 0.0
    %1805 = vmatpush1.msra.mxu0 0.0
    %1806 = vmatprep.subr.mxu0 0.0
    %1807 = vmatpush1.msra.mxu0 0.0
    %1808 = vmatprep.subr.mxu0 0.0
    %1809 = vmatpush1.msra.mxu0 0.0
    %1810 = vmatprep.subr.mxu0 0.0
    %1811 = vmatpush1.msra.mxu0 0.0
    %1812 = vmatprep.subr.mxu0 0.0
    %1813 = vmatpush1.msra.mxu0 0.0
    %1814 = vmatprep.subr.mxu0 0.0
    %1815 = vmatpush1.msra.mxu0 0.0
    %1816 = vmatprep.subr.mxu0 0.0
    %1817 = vmatpush1.msra.mxu0 0.0
    %1818 = vmatprep.subr.mxu0 0.0
    %1819 = vmatpush1.msra.mxu0 0.0
    %1820 = vmatprep.subr.mxu0 0.0
    %1821 = vmatpush1.msra.mxu0 0.0
    %1822 = vmatprep.subr.mxu0 0.0
    %1823 = vmatpush1.msra.mxu0 0.0
    %1824 = vmatprep.subr.mxu0 0.0
    %1825 = vmatpush1.msra.mxu0 0.0
    %1826 = vmatprep.subr.mxu0 0.0
    %1827 = vmatpush1.msra.mxu0 0.0
    %1828 = vmatprep.subr.mxu0 0.0
    %1829 = vmatpush1.msra.mxu0 0.0
    %1830 = vmatprep.subr.mxu0 0.0
    %1831 = vmatpush1.msra.mxu0 0.0
    %1832 = vmatprep.subr.mxu0 0.0
    %1833 = vmatpush1.msra.mxu0 0.0
    %1834 = vmatprep.subr.mxu0 0.0
    %1835 = vmatpush1.msra.mxu0 0.0
    %1836 = vmatprep.mubr.f32.mxu0 0.0
    %1837 = vmatmul.mubr.f32.gmra.mrb[0].mxu0 %v1767
    %v1838 = vpop.f32.mrb[0].mxu0
    %v1839 = vadd.f32 %v1764, %v1838
    %v1840 = vpop.f32.mrb[0].mxu0
    %1841 = vmatprep.mubr.f32.mxu0 0.0
    %1842 = vmatmul.mubr.f32.gmra.mrb[0].mxu0 %v1770
    %v1843 = vpop.f32.mrb[0].mxu0
    %v1844 = vadd.f32 %v1764, %v1843
    %v1845 = vpop.f32.mrb[0].mxu0
    %1846 = vdwg.mxu0
    %v1847 = vadd.f32 %v1839, %v243
    %v1848 = vadd.f32 %v1844, %v244
    %v1849 = vsel %vm311, %v1847, 0.0
    %1850 = vadd.xlane.f32.xlu0 %v1849
    %v1851 = vpop.xlane.xlu0 %1850
    %v1852 = vsel %vm311, %v1848, 0.0
    %1853 = vadd.xlane.f32.xlu0 %v1852
    %v1854 = vpop.xlane.xlu0 %1853
    %v1855 = vrcp.pop 32.0
    %v1856 = vmul.f32 %v1851, %v1855
    %v1857 = vmul.f32 %v1854, %v1855
    %v1858 = vsub.f32 %v1847, %v1856
    %v1859 = vsub.f32 %v1848, %v1857
    %v1860 = vmul.f32 %v1858, %v1858
    %v1861 = vmul.f32 %v1859, %v1859
    %v1862 = vsel %vm311, %v1860, 0.0
    %1863 = vadd.xlane.f32.xlu0 %v1862
    %v1864 = vpop.xlane.xlu0 %1863
    %v1865 = vsel %vm311, %v1861, 0.0
    %1866 = vadd.xlane.f32.xlu0 %v1865
    %v1867 = vpop.xlane.xlu0 %1866
    %v1868 = vmul.f32 %v1864, %v1855
    %v1869 = vmul.f32 %v1867, %v1855
    %v1870 = vadd.f32 %v1868, 1e-05
    %v1871 = vadd.f32 %v1869, 1e-05
    %v1872 = vrsqrt.pop %v1870
    %v1873 = vrsqrt.pop %v1871
    %v1874 = vmul.f32 %v1858, %v1872
    %v1875 = vmul.f32 %v1859, %v1873
    %v1877 = vlaneseq
    %v1878 = vshrl.u32 %v1877, 7
    %v1879 = vsub.s32 0, %v1878
    %v1880 = vrot.slane %v267, %v1879
    %v1882 = vmul.f32 %v1874, %v1880
    %v1883 = vmul.f32 %v1875, %v1880
    %v1885 = vlaneseq
    %v1886 = vshrl.u32 %v1885, 7
    %v1887 = vsub.s32 0, %v1886
    %v1888 = vrot.slane %v268, %v1887
    %v1890 = vadd.f32 %v1882, %v1888
    %v1891 = vadd.f32 %v1883, %v1888
    %v1893 = vlaneseq
    %v1894 = vshrl.u32 %v1893, 7
    %v1895 = vsub.s32 0, %v1894
    %v1896 = vrot.slane %v273, %v1895
    %v1899 = vsel %vm311, %v1890, 0
    %v1902 = vsel %vm311, %v1891, 0
    %v1905 = vsel %vm311, %v247, 0
    %v1908 = vsel %vm311, %v248, 0
    %v1911 = vsel %vm311, %v245, 0
    %v1914 = vsel %vm311, %v246, 0
    %1916 = vmatprep.subr.mxu0 0.0
    %1917 = vmatpush1.msra.mxu0 %v269
    %1918 = vmatprep.subr.mxu0 0.0
    %1919 = vmatpush1.msra.mxu0 %v270
    %1920 = vmatprep.subr.mxu0 0.0
    %1921 = vmatpush1.msra.mxu0 %v271
    %1922 = vmatprep.subr.mxu0 0.0
    %1923 = vmatpush1.msra.mxu0 %v272
    %1924 = vmatprep.subr.mxu0 0.0
    %1925 = vmatpush1.msra.mxu0 0.0
    %1926 = vmatprep.subr.mxu0 0.0
    %1927 = vmatpush1.msra.mxu0 0.0
    %1928 = vmatprep.subr.mxu0 0.0
    %1929 = vmatpush1.msra.mxu0 0.0
    %1930 = vmatprep.subr.mxu0 0.0
    %1931 = vmatpush1.msra.mxu0 0.0
    %1932 = vmatprep.subr.mxu0 0.0
    %1933 = vmatpush1.msra.mxu0 0.0
    %1934 = vmatprep.subr.mxu0 0.0
    %1935 = vmatpush1.msra.mxu0 0.0
    %1936 = vmatprep.subr.mxu0 0.0
    %1937 = vmatpush1.msra.mxu0 0.0
    %1938 = vmatprep.subr.mxu0 0.0
    %1939 = vmatpush1.msra.mxu0 0.0
    %1940 = vmatprep.subr.mxu0 0.0
    %1941 = vmatpush1.msra.mxu0 0.0
    %1942 = vmatprep.subr.mxu0 0.0
    %1943 = vmatpush1.msra.mxu0 0.0
    %1944 = vmatprep.subr.mxu0 0.0
    %1945 = vmatpush1.msra.mxu0 0.0
    %1946 = vmatprep.subr.mxu0 0.0
    %1947 = vmatpush1.msra.mxu0 0.0
    %1948 = vmatprep.subr.mxu0 0.0
    %1949 = vmatpush1.msra.mxu0 0.0
    %1950 = vmatprep.subr.mxu0 0.0
    %1951 = vmatpush1.msra.mxu0 0.0
    %1952 = vmatprep.subr.mxu0 0.0
    %1953 = vmatpush1.msra.mxu0 0.0
    %1954 = vmatprep.subr.mxu0 0.0
    %1955 = vmatpush1.msra.mxu0 0.0
    %1956 = vmatprep.subr.mxu0 0.0
    %1957 = vmatpush1.msra.mxu0 0.0
    %1958 = vmatprep.subr.mxu0 0.0
    %1959 = vmatpush1.msra.mxu0 0.0
    %1960 = vmatprep.subr.mxu0 0.0
    %1961 = vmatpush1.msra.mxu0 0.0
    %1962 = vmatprep.subr.mxu0 0.0
    %1963 = vmatpush1.msra.mxu0 0.0
    %1964 = vmatprep.subr.mxu0 0.0
    %1965 = vmatpush1.msra.mxu0 0.0
    %1966 = vmatprep.subr.mxu0 0.0
    %1967 = vmatpush1.msra.mxu0 0.0
    %1968 = vmatprep.subr.mxu0 0.0
    %1969 = vmatpush1.msra.mxu0 0.0
    %1970 = vmatprep.subr.mxu0 0.0
    %1971 = vmatpush1.msra.mxu0 0.0
    %1972 = vmatprep.subr.mxu0 0.0
    %1973 = vmatpush1.msra.mxu0 0.0
    %1974 = vmatprep.subr.mxu0 0.0
    %1975 = vmatpush1.msra.mxu0 0.0
    %1976 = vmatprep.subr.mxu0 0.0
    %1977 = vmatpush1.msra.mxu0 0.0
    %1978 = vmatprep.subr.mxu0 0.0
    %1979 = vmatpush1.msra.mxu0 0.0
    %1980 = vmatprep.mubr.f32.mxu0 0.0
    %1981 = vmatmul.mubr.f32.gmra.mrb[0].mxu0 %v1899
    %v1982 = vpop.f32.mrb[0].mxu0
    %v1983 = vadd.f32 %v1896, %v1982
    %v1984 = vpop.f32.mrb[0].mxu0
    %1985 = vmatprep.mubr.f32.mxu0 0.0
    %1986 = vmatmul.mubr.f32.gmra.mrb[0].mxu0 %v1902
    %v1987 = vpop.f32.mrb[0].mxu0
    %v1988 = vadd.f32 %v1896, %v1987
    %v1989 = vpop.f32.mrb[0].mxu0
    %1990 = vmatprep.mubr.f32.mxu0 0.0
    %1991 = vmatmul.mubr.f32.gmra.mrb[0].mxu0 %v1905
    %v1992 = vpop.f32.mrb[0].mxu0
    %v1993 = vadd.f32 %v1896, %v1992
    %v1994 = vpop.f32.mrb[0].mxu0
    %1995 = vmatprep.mubr.f32.mxu0 0.0
    %1996 = vmatmul.mubr.f32.gmra.mrb[0].mxu0 %v1908
    %v1997 = vpop.f32.mrb[0].mxu0
    %v1998 = vadd.f32 %v1896, %v1997
    %v1999 = vpop.f32.mrb[0].mxu0
    %2000 = vmatprep.mubr.f32.mxu0 0.0
    %2001 = vmatmul.mubr.f32.gmra.mrb[0].mxu0 %v1911
    %v2002 = vpop.f32.mrb[0].mxu0
    %v2003 = vadd.f32 %v1896, %v2002
    %v2004 = vpop.f32.mrb[0].mxu0
    %2005 = vmatprep.mubr.f32.mxu0 0.0
    %2006 = vmatmul.mubr.f32.gmra.mrb[0].mxu0 %v1914
    %v2007 = vpop.f32.mrb[0].mxu0
    %v2008 = vadd.f32 %v1896, %v2007
    %v2009 = vpop.f32.mrb[0].mxu0
    %2010 = vdwg.mxu0
    %2012 = vrot.lane.b32.xlu0 %v1993, 96
    %v2013 = vpop.permute.xlu0 %2012
    %v2015 = vsel %vm396, %v1983, 0
    %v2017 = vsel %vm396, %v2013, 0
    %2019 = vmatprep.subr.mxu0 0.0
    %2020 = vmatpush1.xpose.msra.mxu0 %v2017
    %2021 = vmatprep.subr.mxu0 0.0
    %2022 = vmatpush1.xpose.msra.mxu0 0.0
    %2023 = vmatprep.subr.mxu0 0.0
    %2024 = vmatpush1.xpose.msra.mxu0 0.0
    %2025 = vmatprep.subr.mxu0 0.0
    %2026 = vmatpush1.xpose.msra.mxu0 0.0
    %2027 = vmatprep.subr.mxu0 0.0
    %2028 = vmatpush1.xpose.msra.mxu0 0.0
    %2029 = vmatprep.subr.mxu0 0.0
    %2030 = vmatpush1.xpose.msra.mxu0 0.0
    %2031 = vmatprep.subr.mxu0 0.0
    %2032 = vmatpush1.xpose.msra.mxu0 0.0
    %2033 = vmatprep.subr.mxu0 0.0
    %2034 = vmatpush1.xpose.msra.mxu0 0.0
    %2035 = vmatprep.subr.mxu0 0.0
    %2036 = vmatpush1.xpose.msra.mxu0 0.0
    %2037 = vmatprep.subr.mxu0 0.0
    %2038 = vmatpush1.xpose.msra.mxu0 0.0
    %2039 = vmatprep.subr.mxu0 0.0
    %2040 = vmatpush1.xpose.msra.mxu0 0.0
    %2041 = vmatprep.subr.mxu0 0.0
    %2042 = vmatpush1.xpose.msra.mxu0 0.0
    %2043 = vmatprep.subr.mxu0 0.0
    %2044 = vmatpush1.xpose.msra.mxu0 0.0
    %2045 = vmatprep.subr.mxu0 0.0
    %2046 = vmatpush1.xpose.msra.mxu0 0.0
    %2047 = vmatprep.subr.mxu0 0.0
    %2048 = vmatpush1.xpose.msra.mxu0 0.0
    %2049 = vmatprep.subr.mxu0 0.0
    %2050 = vmatpush1.xpose.msra.mxu0 0.0
    %2051 = vmatprep.subr.mxu0 0.0
    %2052 = vmatpush1.xpose.msra.mxu0 0.0
    %2053 = vmatprep.subr.mxu0 0.0
    %2054 = vmatpush1.xpose.msra.mxu0 0.0
    %2055 = vmatprep.subr.mxu0 0.0
    %2056 = vmatpush1.xpose.msra.mxu0 0.0
    %2057 = vmatprep.subr.mxu0 0.0
    %2058 = vmatpush1.xpose.msra.mxu0 0.0
    %2059 = vmatprep.subr.mxu0 0.0
    %2060 = vmatpush1.xpose.msra.mxu0 0.0
    %2061 = vmatprep.subr.mxu0 0.0
    %2062 = vmatpush1.xpose.msra.mxu0 0.0
    %2063 = vmatprep.subr.mxu0 0.0
    %2064 = vmatpush1.xpose.msra.mxu0 0.0
    %2065 = vmatprep.subr.mxu0 0.0
    %2066 = vmatpush1.xpose.msra.mxu0 0.0
    %2067 = vmatprep.subr.mxu0 0.0
    %2068 = vmatpush1.xpose.msra.mxu0 0.0
    %2069 = vmatprep.subr.mxu0 0.0
    %2070 = vmatpush1.xpose.msra.mxu0 0.0
    %2071 = vmatprep.subr.mxu0 0.0
    %2072 = vmatpush1.xpose.msra.mxu0 0.0
    %2073 = vmatprep.subr.mxu0 0.0
    %2074 = vmatpush1.xpose.msra.mxu0 0.0
    %2075 = vmatprep.subr.mxu0 0.0
    %2076 = vmatpush1.xpose.msra.mxu0 0.0
    %2077 = vmatprep.subr.mxu0 0.0
    %2078 = vmatpush1.xpose.msra.mxu0 0.0
    %2079 = vmatprep.subr.mxu0 0.0
    %2080 = vmatpush1.xpose.msra.mxu0 0.0
    %2081 = vmatprep.subr.mxu0 0.0
    %2082 = vmatpush1.xpose.msra.mxu0 0.0
    %2083 = vmatprep.mubr.f32.mxu0 0.0
    %2084 = vmatmul.mubr.f32.gmra.mrb[0].mxu0 %v2015
    %v2085 = vpop.f32.mrb[0].mxu0
    %v2086 = vadd.f32 0.0, %v2085
    %v2087 = vpop.f32.mrb[0].mxu0
    %2088 = vdwg.mxu0
    %v2089 = vsel %vm255, -1e+20, %v2086
    %v2090 = vmul.f32 %v2089, 0.17677669
    %v2091 = vsel %vm396, %v2090, -inf
    %2092 = vmax.xlane.f32.xlu0 %v2091
    %v2093 = vpop.xlane.xlu0 %2092
    %v2094 = vsub.f32 %v2090, %v2093
    %v2095 = vmul.f32 %v2094, 1.442695
    %v2096 = vpow.pop %v2095
    %v2097 = vsel %vm396, %v2096, 0.0
    %2098 = vadd.xlane.f32.xlu0 %v2097
    %v2099 = vpop.xlane.xlu0 %2098
    %v2100 = vrcp.pop %v2099
    %v2101 = vmul.f32 %v2096, %v2100
    %2103 = vrot.lane.b32.xlu0 %v2003, 64
    %v2104 = vpop.permute.xlu0 %2103
    %v2107 = vsel %vm396, %v2101, 0
    %2109 = vmatprep.subr.mxu0 0.0
    %2110 = vmatpush1.msra.mxu0 %v2104
    %2111 = vmatprep.subr.mxu0 0.0
    %2112 = vmatpush1.msra.mxu0 0.0
    %2113 = vmatprep.subr.mxu0 0.0
    %2114 = vmatpush1.msra.mxu0 0.0
    %2115 = vmatprep.subr.mxu0 0.0
    %2116 = vmatpush1.msra.mxu0 0.0
    %2117 = vmatprep.subr.mxu0 0.0
    %2118 = vmatpush1.msra.mxu0 0.0
    %2119 = vmatprep.subr.mxu0 0.0
    %2120 = vmatpush1.msra.mxu0 0.0
    %2121 = vmatprep.subr.mxu0 0.0
    %2122 = vmatpush1.msra.mxu0 0.0
    %2123 = vmatprep.subr.mxu0 0.0
    %2124 = vmatpush1.msra.mxu0 0.0
    %2125 = vmatprep.subr.mxu0 0.0
    %2126 = vmatpush1.msra.mxu0 0.0
    %2127 = vmatprep.subr.mxu0 0.0
    %2128 = vmatpush1.msra.mxu0 0.0
    %2129 = vmatprep.subr.mxu0 0.0
    %2130 = vmatpush1.msra.mxu0 0.0
    %2131 = vmatprep.subr.mxu0 0.0
    %2132 = vmatpush1.msra.mxu0 0.0
    %2133 = vmatprep.subr.mxu0 0.0
    %2134 = vmatpush1.msra.mxu0 0.0
    %2135 = vmatprep.subr.mxu0 0.0
    %2136 = vmatpush1.msra.mxu0 0.0
    %2137 = vmatprep.subr.mxu0 0.0
    %2138 = vmatpush1.msra.mxu0 0.0
    %2139 = vmatprep.subr.mxu0 0.0
    %2140 = vmatpush1.msra.mxu0 0.0
    %2141 = vmatprep.subr.mxu0 0.0
    %2142 = vmatpush1.msra.mxu0 0.0
    %2143 = vmatprep.subr.mxu0 0.0
    %2144 = vmatpush1.msra.mxu0 0.0
    %2145 = vmatprep.subr.mxu0 0.0
    %2146 = vmatpush1.msra.mxu0 0.0
    %2147 = vmatprep.subr.mxu0 0.0
    %2148 = vmatpush1.msra.mxu0 0.0
    %2149 = vmatprep.subr.mxu0 0.0
    %2150 = vmatpush1.msra.mxu0 0.0
    %2151 = vmatprep.subr.mxu0 0.0
    %2152 = vmatpush1.msra.mxu0 0.0
    %2153 = vmatprep.subr.mxu0 0.0
    %2154 = vmatpush1.msra.mxu0 0.0
    %2155 = vmatprep.subr.mxu0 0.0
    %2156 = vmatpush1.msra.mxu0 0.0
    %2157 = vmatprep.subr.mxu0 0.0
    %2158 = vmatpush1.msra.mxu0 0.0
    %2159 = vmatprep.subr.mxu0 0.0
    %2160 = vmatpush1.msra.mxu0 0.0
    %2161 = vmatprep.subr.mxu0 0.0
    %2162 = vmatpush1.msra.mxu0 0.0
    %2163 = vmatprep.subr.mxu0 0.0
    %2164 = vmatpush1.msra.mxu0 0.0
    %2165 = vmatprep.subr.mxu0 0.0
    %2166 = vmatpush1.msra.mxu0 0.0
    %2167 = vmatprep.subr.mxu0 0.0
    %2168 = vmatpush1.msra.mxu0 0.0
    %2169 = vmatprep.subr.mxu0 0.0
    %2170 = vmatpush1.msra.mxu0 0.0
    %2171 = vmatprep.subr.mxu0 0.0
    %2172 = vmatpush1.msra.mxu0 0.0
    %2173 = vmatprep.mubr.f32.mxu0 0.0
    %2174 = vmatmul.mubr.f32.gmra.mrb[0].mxu0 %v2107
    %v2175 = vpop.f32.mrb[0].mxu0
    %v2176 = vadd.f32 0.0, %v2175
    %v2177 = vpop.f32.mrb[0].mxu0
    %2178 = vdwg.mxu0
    %2179 = vrot.lane.b32.xlu0 %v1983, 120
    %v2180 = vpop.permute.xlu0 %2179
    %2181 = vrot.lane.b32.xlu0 %v1993, 88
    %v2182 = vpop.permute.xlu0 %2181
    %v2183 = vsel %vm396, %v2180, 0
    %v2185 = vsel %vm396, %v2182, 0
    %2187 = vmatprep.subr.mxu0 0.0
    %2188 = vmatpush1.xpose.msra.mxu0 %v2185
    %2189 = vmatprep.subr.mxu0 0.0
    %2190 = vmatpush1.xpose.msra.mxu0 0.0
    %2191 = vmatprep.subr.mxu0 0.0
    %2192 = vmatpush1.xpose.msra.mxu0 0.0
    %2193 = vmatprep.subr.mxu0 0.0
    %2194 = vmatpush1.xpose.msra.mxu0 0.0
    %2195 = vmatprep.subr.mxu0 0.0
    %2196 = vmatpush1.xpose.msra.mxu0 0.0
    %2197 = vmatprep.subr.mxu0 0.0
    %2198 = vmatpush1.xpose.msra.mxu0 0.0
    %2199 = vmatprep.subr.mxu0 0.0
    %2200 = vmatpush1.xpose.msra.mxu0 0.0
    %2201 = vmatprep.subr.mxu0 0.0
    %2202 = vmatpush1.xpose.msra.mxu0 0.0
    %2203 = vmatprep.subr.mxu0 0.0
    %2204 = vmatpush1.xpose.msra.mxu0 0.0
    %2205 = vmatprep.subr.mxu0 0.0
    %2206 = vmatpush1.xpose.msra.mxu0 0.0
    %2207 = vmatprep.subr.mxu0 0.0
    %2208 = vmatpush1.xpose.msra.mxu0 0.0
    %2209 = vmatprep.subr.mxu0 0.0
    %2210 = vmatpush1.xpose.msra.mxu0 0.0
    %2211 = vmatprep.subr.mxu0 0.0
    %2212 = vmatpush1.xpose.msra.mxu0 0.0
    %2213 = vmatprep.subr.mxu0 0.0
    %2214 = vmatpush1.xpose.msra.mxu0 0.0
    %2215 = vmatprep.subr.mxu0 0.0
    %2216 = vmatpush1.xpose.msra.mxu0 0.0
    %2217 = vmatprep.subr.mxu0 0.0
    %2218 = vmatpush1.xpose.msra.mxu0 0.0
    %2219 = vmatprep.subr.mxu0 0.0
    %2220 = vmatpush1.xpose.msra.mxu0 0.0
    %2221 = vmatprep.subr.mxu0 0.0
    %2222 = vmatpush1.xpose.msra.mxu0 0.0
    %2223 = vmatprep.subr.mxu0 0.0
    %2224 = vmatpush1.xpose.msra.mxu0 0.0
    %2225 = vmatprep.subr.mxu0 0.0
    %2226 = vmatpush1.xpose.msra.mxu0 0.0
    %2227 = vmatprep.subr.mxu0 0.0
    %2228 = vmatpush1.xpose.msra.mxu0 0.0
    %2229 = vmatprep.subr.mxu0 0.0
    %2230 = vmatpush1.xpose.msra.mxu0 0.0
    %2231 = vmatprep.subr.mxu0 0.0
    %2232 = vmatpush1.xpose.msra.mxu0 0.0
    %2233 = vmatprep.subr.mxu0 0.0
    %2234 = vmatpush1.xpose.msra.mxu0 0.0
    %2235 = vmatprep.subr.mxu0 0.0
    %2236 = vmatpush1.xpose.msra.mxu0 0.0
    %2237 = vmatprep.subr.mxu0 0.0
    %2238 = vmatpush1.xpose.msra.mxu0 0.0
    %2239 = vmatprep.subr.mxu0 0.0
    %2240 = vmatpush1.xpose.msra.mxu0 0.0
    %2241 = vmatprep.subr.mxu0 0.0
    %2242 = vmatpush1.xpose.msra.mxu0 0.0
    %2243 = vmatprep.subr.mxu0 0.0
    %2244 = vmatpush1.xpose.msra.mxu0 0.0
    %2245 = vmatprep.subr.mxu0 0.0
    %2246 = vmatpush1.xpose.msra.mxu0 0.0
    %2247 = vmatprep.subr.mxu0 0.0
    %2248 = vmatpush1.xpose.msra.mxu0 0.0
    %2249 = vmatprep.subr.mxu0 0.0
    %2250 = vmatpush1.xpose.msra.mxu0 0.0
    %2251 = vmatprep.mubr.f32.mxu0 0.0
    %2252 = vmatmul.mubr.f32.gmra.mrb[0].mxu0 %v2183
    %v2253 = vpop.f32.mrb[0].mxu0
    %v2254 = vadd.f32 0.0, %v2253
    %v2255 = vpop.f32.mrb[0].mxu0
    %2256 = vdwg.mxu0
    %v2257 = vsel %vm255, -1e+20, %v2254
    %v2258 = vmul.f32 %v2257, 0.17677669
    %v2259 = vsel %vm396, %v2258, -inf
    %2260 = vmax.xlane.f32.xlu0 %v2259
    %v2261 = vpop.xlane.xlu0 %2260
    %v2262 = vsub.f32 %v2258, %v2261
    %v2263 = vmul.f32 %v2262, 1.442695
    %v2264 = vpow.pop %v2263
    %v2265 = vsel %vm396, %v2264, 0.0
    %2266 = vadd.xlane.f32.xlu0 %v2265
    %v2267 = vpop.xlane.xlu0 %2266
    %v2268 = vrcp.pop %v2267
    %v2269 = vmul.f32 %v2264, %v2268
    %2270 = vrot.lane.b32.xlu0 %v2003, 56
    %v2271 = vpop.permute.xlu0 %2270
    %v2274 = vsel %vm396, %v2269, 0
    %2276 = vmatprep.subr.mxu0 0.0
    %2277 = vmatpush1.msra.mxu0 %v2271
    %2278 = vmatprep.subr.mxu0 0.0
    %2279 = vmatpush1.msra.mxu0 0.0
    %2280 = vmatprep.subr.mxu0 0.0
    %2281 = vmatpush1.msra.mxu0 0.0
    %2282 = vmatprep.subr.mxu0 0.0
    %2283 = vmatpush1.msra.mxu0 0.0
    %2284 = vmatprep.subr.mxu0 0.0
    %2285 = vmatpush1.msra.mxu0 0.0
    %2286 = vmatprep.subr.mxu0 0.0
    %2287 = vmatpush1.msra.mxu0 0.0
    %2288 = vmatprep.subr.mxu0 0.0
    %2289 = vmatpush1.msra.mxu0 0.0
    %2290 = vmatprep.subr.mxu0 0.0
    %2291 = vmatpush1.msra.mxu0 0.0
    %2292 = vmatprep.subr.mxu0 0.0
    %2293 = vmatpush1.msra.mxu0 0.0
    %2294 = vmatprep.subr.mxu0 0.0
    %2295 = vmatpush1.msra.mxu0 0.0
    %2296 = vmatprep.subr.mxu0 0.0
    %2297 = vmatpush1.msra.mxu0 0.0
    %2298 = vmatprep.subr.mxu0 0.0
    %2299 = vmatpush1.msra.mxu0 0.0
    %2300 = vmatprep.subr.mxu0 0.0
    %2301 = vmatpush1.msra.mxu0 0.0
    %2302 = vmatprep.subr.mxu0 0.0
    %2303 = vmatpush1.msra.mxu0 0.0
    %2304 = vmatprep.subr.mxu0 0.0
    %2305 = vmatpush1.msra.mxu0 0.0
    %2306 = vmatprep.subr.mxu0 0.0
    %2307 = vmatpush1.msra.mxu0 0.0
    %2308 = vmatprep.subr.mxu0 0.0
    %2309 = vmatpush1.msra.mxu0 0.0
    %2310 = vmatprep.subr.mxu0 0.0
    %2311 = vmatpush1.msra.mxu0 0.0
    %2312 = vmatprep.subr.mxu0 0.0
    %2313 = vmatpush1.msra.mxu0 0.0
    %2314 = vmatprep.subr.mxu0 0.0
    %2315 = vmatpush1.msra.mxu0 0.0
    %2316 = vmatprep.subr.mxu0 0.0
    %2317 = vmatpush1.msra.mxu0 0.0
    %2318 = vmatprep.subr.mxu0 0.0
    %2319 = vmatpush1.msra.mxu0 0.0
    %2320 = vmatprep.subr.mxu0 0.0
    %2321 = vmatpush1.msra.mxu0 0.0
    %2322 = vmatprep.subr.mxu0 0.0
    %2323 = vmatpush1.msra.mxu0 0.0
    %2324 = vmatprep.subr.mxu0 0.0
    %2325 = vmatpush1.msra.mxu0 0.0
    %2326 = vmatprep.subr.mxu0 0.0
    %2327 = vmatpush1.msra.mxu0 0.0
    %2328 = vmatprep.subr.mxu0 0.0
    %2329 = vmatpush1.msra.mxu0 0.0
    %2330 = vmatprep.subr.mxu0 0.0
    %2331 = vmatpush1.msra.mxu0 0.0
    %2332 = vmatprep.subr.mxu0 0.0
    %2333 = vmatpush1.msra.mxu0 0.0
    %2334 = vmatprep.subr.mxu0 0.0
    %2335 = vmatpush1.msra.mxu0 0.0
    %2336 = vmatprep.subr.mxu0 0.0
    %2337 = vmatpush1.msra.mxu0 0.0
    %2338 = vmatprep.subr.mxu0 0.0
    %2339 = vmatpush1.msra.mxu0 0.0
    %2340 = vmatprep.mubr.f32.mxu0 0.0
    %2341 = vmatmul.mubr.f32.gmra.mrb[0].mxu0 %v2274
    %v2342 = vpop.f32.mrb[0].mxu0
    %v2343 = vadd.f32 0.0, %v2342
    %v2344 = vpop.f32.mrb[0].mxu0
    %2345 = vdwg.mxu0
    %2346 = vrot.lane.b32.xlu0 %v1983, 112
    %v2347 = vpop.permute.xlu0 %2346
    %2348 = vrot.lane.b32.xlu0 %v1993, 80
    %v2349 = vpop.permute.xlu0 %2348
    %v2350 = vsel %vm396, %v2347, 0
    %v2352 = vsel %vm396, %v2349, 0
    %2354 = vmatprep.subr.mxu0 0.0
    %2355 = vmatpush1.xpose.msra.mxu0 %v2352
    %2356 = vmatprep.subr.mxu0 0.0
    %2357 = vmatpush1.xpose.msra.mxu0 0.0
    %2358 = vmatprep.subr.mxu0 0.0
    %2359 = vmatpush1.xpose.msra.mxu0 0.0
    %2360 = vmatprep.subr.mxu0 0.0
    %2361 = vmatpush1.xpose.msra.mxu0 0.0
    %2362 = vmatprep.subr.mxu0 0.0
    %2363 = vmatpush1.xpose.msra.mxu0 0.0
    %2364 = vmatprep.subr.mxu0 0.0
    %2365 = vmatpush1.xpose.msra.mxu0 0.0
    %2366 = vmatprep.subr.mxu0 0.0
    %2367 = vmatpush1.xpose.msra.mxu0 0.0
    %2368 = vmatprep.subr.mxu0 0.0
    %2369 = vmatpush1.xpose.msra.mxu0 0.0
    %2370 = vmatprep.subr.mxu0 0.0
    %2371 = vmatpush1.xpose.msra.mxu0 0.0
    %2372 = vmatprep.subr.mxu0 0.0
    %2373 = vmatpush1.xpose.msra.mxu0 0.0
    %2374 = vmatprep.subr.mxu0 0.0
    %2375 = vmatpush1.xpose.msra.mxu0 0.0
    %2376 = vmatprep.subr.mxu0 0.0
    %2377 = vmatpush1.xpose.msra.mxu0 0.0
    %2378 = vmatprep.subr.mxu0 0.0
    %2379 = vmatpush1.xpose.msra.mxu0 0.0
    %2380 = vmatprep.subr.mxu0 0.0
    %2381 = vmatpush1.xpose.msra.mxu0 0.0
    %2382 = vmatprep.subr.mxu0 0.0
    %2383 = vmatpush1.xpose.msra.mxu0 0.0
    %2384 = vmatprep.subr.mxu0 0.0
    %2385 = vmatpush1.xpose.msra.mxu0 0.0
    %2386 = vmatprep.subr.mxu0 0.0
    %2387 = vmatpush1.xpose.msra.mxu0 0.0
    %2388 = vmatprep.subr.mxu0 0.0
    %2389 = vmatpush1.xpose.msra.mxu0 0.0
    %2390 = vmatprep.subr.mxu0 0.0
    %2391 = vmatpush1.xpose.msra.mxu0 0.0
    %2392 = vmatprep.subr.mxu0 0.0
    %2393 = vmatpush1.xpose.msra.mxu0 0.0
    %2394 = vmatprep.subr.mxu0 0.0
    %2395 = vmatpush1.xpose.msra.mxu0 0.0
    %2396 = vmatprep.subr.mxu0 0.0
    %2397 = vmatpush1.xpose.msra.mxu0 0.0
    %2398 = vmatprep.subr.mxu0 0.0
    %2399 = vmatpush1.xpose.msra.mxu0 0.0
    %2400 = vmatprep.subr.mxu0 0.0
    %2401 = vmatpush1.xpose.msra.mxu0 0.0
    %2402 = vmatprep.subr.mxu0 0.0
    %2403 = vmatpush1.xpose.msra.mxu0 0.0
    %2404 = vmatprep.subr.mxu0 0.0
    %2405 = vmatpush1.xpose.msra.mxu0 0.0
    %2406 = vmatprep.subr.mxu0 0.0
    %2407 = vmatpush1.xpose.msra.mxu0 0.0
    %2408 = vmatprep.subr.mxu0 0.0
    %2409 = vmatpush1.xpose.msra.mxu0 0.0
    %2410 = vmatprep.subr.mxu0 0.0
    %2411 = vmatpush1.xpose.msra.mxu0 0.0
    %2412 = vmatprep.subr.mxu0 0.0
    %2413 = vmatpush1.xpose.msra.mxu0 0.0
    %2414 = vmatprep.subr.mxu0 0.0
    %2415 = vmatpush1.xpose.msra.mxu0 0.0
    %2416 = vmatprep.subr.mxu0 0.0
    %2417 = vmatpush1.xpose.msra.mxu0 0.0
    %2418 = vmatprep.mubr.f32.mxu0 0.0
    %2419 = vmatmul.mubr.f32.gmra.mrb[0].mxu0 %v2350
    %v2420 = vpop.f32.mrb[0].mxu0
    %v2421 = vadd.f32 0.0, %v2420
    %v2422 = vpop.f32.mrb[0].mxu0
    %2423 = vdwg.mxu0
    %v2424 = vsel %vm255, -1e+20, %v2421
    %v2425 = vmul.f32 %v2424, 0.17677669
    %v2426 = vsel %vm396, %v2425, -inf
    %2427 = vmax.xlane.f32.xlu0 %v2426
    %v2428 = vpop.xlane.xlu0 %2427
    %v2429 = vsub.f32 %v2425, %v2428
    %v2430 = vmul.f32 %v2429, 1.442695
    %v2431 = vpow.pop %v2430
    %v2432 = vsel %vm396, %v2431, 0.0
    %2433 = vadd.xlane.f32.xlu0 %v2432
    %v2434 = vpop.xlane.xlu0 %2433
    %v2435 = vrcp.pop %v2434
    %v2436 = vmul.f32 %v2431, %v2435
    %2437 = vrot.lane.b32.xlu0 %v2003, 48
    %v2438 = vpop.permute.xlu0 %2437
    %v2441 = vsel %vm396, %v2436, 0
    %2443 = vmatprep.subr.mxu0 0.0
    %2444 = vmatpush1.msra.mxu0 %v2438
    %2445 = vmatprep.subr.mxu0 0.0
    %2446 = vmatpush1.msra.mxu0 0.0
    %2447 = vmatprep.subr.mxu0 0.0
    %2448 = vmatpush1.msra.mxu0 0.0
    %2449 = vmatprep.subr.mxu0 0.0
    %2450 = vmatpush1.msra.mxu0 0.0
    %2451 = vmatprep.subr.mxu0 0.0
    %2452 = vmatpush1.msra.mxu0 0.0
    %2453 = vmatprep.subr.mxu0 0.0
    %2454 = vmatpush1.msra.mxu0 0.0
    %2455 = vmatprep.subr.mxu0 0.0
    %2456 = vmatpush1.msra.mxu0 0.0
    %2457 = vmatprep.subr.mxu0 0.0
    %2458 = vmatpush1.msra.mxu0 0.0
    %2459 = vmatprep.subr.mxu0 0.0
    %2460 = vmatpush1.msra.mxu0 0.0
    %2461 = vmatprep.subr.mxu0 0.0
    %2462 = vmatpush1.msra.mxu0 0.0
    %2463 = vmatprep.subr.mxu0 0.0
    %2464 = vmatpush1.msra.mxu0 0.0
    %2465 = vmatprep.subr.mxu0 0.0
    %2466 = vmatpush1.msra.mxu0 0.0
    %2467 = vmatprep.subr.mxu0 0.0
    %2468 = vmatpush1.msra.mxu0 0.0
    %2469 = vmatprep.subr.mxu0 0.0
    %2470 = vmatpush1.msra.mxu0 0.0
    %2471 = vmatprep.subr.mxu0 0.0
    %2472 = vmatpush1.msra.mxu0 0.0
    %2473 = vmatprep.subr.mxu0 0.0
    %2474 = vmatpush1.msra.mxu0 0.0
    %2475 = vmatprep.subr.mxu0 0.0
    %2476 = vmatpush1.msra.mxu0 0.0
    %2477 = vmatprep.subr.mxu0 0.0
    %2478 = vmatpush1.msra.mxu0 0.0
    %2479 = vmatprep.subr.mxu0 0.0
    %2480 = vmatpush1.msra.mxu0 0.0
    %2481 = vmatprep.subr.mxu0 0.0
    %2482 = vmatpush1.msra.mxu0 0.0
    %2483 = vmatprep.subr.mxu0 0.0
    %2484 = vmatpush1.msra.mxu0 0.0
    %2485 = vmatprep.subr.mxu0 0.0
    %2486 = vmatpush1.msra.mxu0 0.0
    %2487 = vmatprep.subr.mxu0 0.0
    %2488 = vmatpush1.msra.mxu0 0.0
    %2489 = vmatprep.subr.mxu0 0.0
    %2490 = vmatpush1.msra.mxu0 0.0
    %2491 = vmatprep.subr.mxu0 0.0
    %2492 = vmatpush1.msra.mxu0 0.0
    %2493 = vmatprep.subr.mxu0 0.0
    %2494 = vmatpush1.msra.mxu0 0.0
    %2495 = vmatprep.subr.mxu0 0.0
    %2496 = vmatpush1.msra.mxu0 0.0
    %2497 = vmatprep.subr.mxu0 0.0
    %2498 = vmatpush1.msra.mxu0 0.0
    %2499 = vmatprep.subr.mxu0 0.0
    %2500 = vmatpush1.msra.mxu0 0.0
    %2501 = vmatprep.subr.mxu0 0.0
    %2502 = vmatpush1.msra.mxu0 0.0
    %2503 = vmatprep.subr.mxu0 0.0
    %2504 = vmatpush1.msra.mxu0 0.0
    %2505 = vmatprep.subr.mxu0 0.0
    %2506 = vmatpush1.msra.mxu0 0.0
    %2507 = vmatprep.mubr.f32.mxu0 0.0
    %2508 = vmatmul.mubr.f32.gmra.mrb[0].mxu0 %v2441
    %v2509 = vpop.f32.mrb[0].mxu0
    %v2510 = vadd.f32 0.0, %v2509
    %v2511 = vpop.f32.mrb[0].mxu0
    %2512 = vdwg.mxu0
    %2513 = vrot.lane.b32.xlu0 %v1983, 104
    %v2514 = vpop.permute.xlu0 %2513
    %2515 = vrot.lane.b32.xlu0 %v1993, 72
    %v2516 = vpop.permute.xlu0 %2515
    %v2517 = vsel %vm396, %v2514, 0
    %v2519 = vsel %vm396, %v2516, 0
    %2521 = vmatprep.subr.mxu0 0.0
    %2522 = vmatpush1.xpose.msra.mxu0 %v2519
    %2523 = vmatprep.subr.mxu0 0.0
    %2524 = vmatpush1.xpose.msra.mxu0 0.0
    %2525 = vmatprep.subr.mxu0 0.0
    %2526 = vmatpush1.xpose.msra.mxu0 0.0
    %2527 = vmatprep.subr.mxu0 0.0
    %2528 = vmatpush1.xpose.msra.mxu0 0.0
    %2529 = vmatprep.subr.mxu0 0.0
    %2530 = vmatpush1.xpose.msra.mxu0 0.0
    %2531 = vmatprep.subr.mxu0 0.0
    %2532 = vmatpush1.xpose.msra.mxu0 0.0
    %2533 = vmatprep.subr.mxu0 0.0
    %2534 = vmatpush1.xpose.msra.mxu0 0.0
    %2535 = vmatprep.subr.mxu0 0.0
    %2536 = vmatpush1.xpose.msra.mxu0 0.0
    %2537 = vmatprep.subr.mxu0 0.0
    %2538 = vmatpush1.xpose.msra.mxu0 0.0
    %2539 = vmatprep.subr.mxu0 0.0
    %2540 = vmatpush1.xpose.msra.mxu0 0.0
    %2541 = vmatprep.subr.mxu0 0.0
    %2542 = vmatpush1.xpose.msra.mxu0 0.0
    %2543 = vmatprep.subr.mxu0 0.0
    %2544 = vmatpush1.xpose.msra.mxu0 0.0
    %2545 = vmatprep.subr.mxu0 0.0
    %2546 = vmatpush1.xpose.msra.mxu0 0.0
    %2547 = vmatprep.subr.mxu0 0.0
    %2548 = vmatpush1.xpose.msra.mxu0 0.0
    %2549 = vmatprep.subr.mxu0 0.0
    %2550 = vmatpush1.xpose.msra.mxu0 0.0
    %2551 = vmatprep.subr.mxu0 0.0
    %2552 = vmatpush1.xpose.msra.mxu0 0.0
    %2553 = vmatprep.subr.mxu0 0.0
    %2554 = vmatpush1.xpose.msra.mxu0 0.0
    %2555 = vmatprep.subr.mxu0 0.0
    %2556 = vmatpush1.xpose.msra.mxu0 0.0
    %2557 = vmatprep.subr.mxu0 0.0
    %2558 = vmatpush1.xpose.msra.mxu0 0.0
    %2559 = vmatprep.subr.mxu0 0.0
    %2560 = vmatpush1.xpose.msra.mxu0 0.0
    %2561 = vmatprep.subr.mxu0 0.0
    %2562 = vmatpush1.xpose.msra.mxu0 0.0
    %2563 = vmatprep.subr.mxu0 0.0
    %2564 = vmatpush1.xpose.msra.mxu0 0.0
    %2565 = vmatprep.subr.mxu0 0.0
    %2566 = vmatpush1.xpose.msra.mxu0 0.0
    %2567 = vmatprep.subr.mxu0 0.0
    %2568 = vmatpush1.xpose.msra.mxu0 0.0
    %2569 = vmatprep.subr.mxu0 0.0
    %2570 = vmatpush1.xpose.msra.mxu0 0.0
    %2571 = vmatprep.subr.mxu0 0.0
    %2572 = vmatpush1.xpose.msra.mxu0 0.0
    %2573 = vmatprep.subr.mxu0 0.0
    %2574 = vmatpush1.xpose.msra.mxu0 0.0
    %2575 = vmatprep.subr.mxu0 0.0
    %2576 = vmatpush1.xpose.msra.mxu0 0.0
    %2577 = vmatprep.subr.mxu0 0.0
    %2578 = vmatpush1.xpose.msra.mxu0 0.0
    %2579 = vmatprep.subr.mxu0 0.0
    %2580 = vmatpush1.xpose.msra.mxu0 0.0
    %2581 = vmatprep.subr.mxu0 0.0
    %2582 = vmatpush1.xpose.msra.mxu0 0.0
    %2583 = vmatprep.subr.mxu0 0.0
    %2584 = vmatpush1.xpose.msra.mxu0 0.0
    %2585 = vmatprep.mubr.f32.mxu0 0.0
    %2586 = vmatmul.mubr.f32.gmra.mrb[0].mxu0 %v2517
    %v2587 = vpop.f32.mrb[0].mxu0
    %v2588 = vadd.f32 0.0, %v2587
    %v2589 = vpop.f32.mrb[0].mxu0
    %2590 = vdwg.mxu0
    %v2591 = vsel %vm255, -1e+20, %v2588
    %v2592 = vmul.f32 %v2591, 0.17677669
    %v2593 = vsel %vm396, %v2592, -inf
    %2594 = vmax.xlane.f32.xlu0 %v2593
    %v2595 = vpop.xlane.xlu0 %2594
    %v2596 = vsub.f32 %v2592, %v2595
    %v2597 = vmul.f32 %v2596, 1.442695
    %v2598 = vpow.pop %v2597
    %v2599 = vsel %vm396, %v2598, 0.0
    %2600 = vadd.xlane.f32.xlu0 %v2599
    %v2601 = vpop.xlane.xlu0 %2600
    %v2602 = vrcp.pop %v2601
    %v2603 = vmul.f32 %v2598, %v2602
    %2604 = vrot.lane.b32.xlu0 %v2003, 40
    %v2605 = vpop.permute.xlu0 %2604
    %v2608 = vsel %vm396, %v2603, 0
    %2610 = vmatprep.subr.mxu0 0.0
    %2611 = vmatpush1.msra.mxu0 %v2605
    %2612 = vmatprep.subr.mxu0 0.0
    %2613 = vmatpush1.msra.mxu0 0.0
    %2614 = vmatprep.subr.mxu0 0.0
    %2615 = vmatpush1.msra.mxu0 0.0
    %2616 = vmatprep.subr.mxu0 0.0
    %2617 = vmatpush1.msra.mxu0 0.0
    %2618 = vmatprep.subr.mxu0 0.0
    %2619 = vmatpush1.msra.mxu0 0.0
    %2620 = vmatprep.subr.mxu0 0.0
    %2621 = vmatpush1.msra.mxu0 0.0
    %2622 = vmatprep.subr.mxu0 0.0
    %2623 = vmatpush1.msra.mxu0 0.0
    %2624 = vmatprep.subr.mxu0 0.0
    %2625 = vmatpush1.msra.mxu0 0.0
    %2626 = vmatprep.subr.mxu0 0.0
    %2627 = vmatpush1.msra.mxu0 0.0
    %2628 = vmatprep.subr.mxu0 0.0
    %2629 = vmatpush1.msra.mxu0 0.0
    %2630 = vmatprep.subr.mxu0 0.0
    %2631 = vmatpush1.msra.mxu0 0.0
    %2632 = vmatprep.subr.mxu0 0.0
    %2633 = vmatpush1.msra.mxu0 0.0
    %2634 = vmatprep.subr.mxu0 0.0
    %2635 = vmatpush1.msra.mxu0 0.0
    %2636 = vmatprep.subr.mxu0 0.0
    %2637 = vmatpush1.msra.mxu0 0.0
    %2638 = vmatprep.subr.mxu0 0.0
    %2639 = vmatpush1.msra.mxu0 0.0
    %2640 = vmatprep.subr.mxu0 0.0
    %2641 = vmatpush1.msra.mxu0 0.0
    %2642 = vmatprep.subr.mxu0 0.0
    %2643 = vmatpush1.msra.mxu0 0.0
    %2644 = vmatprep.subr.mxu0 0.0
    %2645 = vmatpush1.msra.mxu0 0.0
    %2646 = vmatprep.subr.mxu0 0.0
    %2647 = vmatpush1.msra.mxu0 0.0
    %2648 = vmatprep.subr.mxu0 0.0
    %2649 = vmatpush1.msra.mxu0 0.0
    %2650 = vmatprep.subr.mxu0 0.0
    %2651 = vmatpush1.msra.mxu0 0.0
    %2652 = vmatprep.subr.mxu0 0.0
    %2653 = vmatpush1.msra.mxu0 0.0
    %2654 = vmatprep.subr.mxu0 0.0
    %2655 = vmatpush1.msra.mxu0 0.0
    %2656 = vmatprep.subr.mxu0 0.0
    %2657 = vmatpush1.msra.mxu0 0.0
    %2658 = vmatprep.subr.mxu0 0.0
    %2659 = vmatpush1.msra.mxu0 0.0
    %2660 = vmatprep.subr.mxu0 0.0
    %2661 = vmatpush1.msra.mxu0 0.0
    %2662 = vmatprep.subr.mxu0 0.0
    %2663 = vmatpush1.msra.mxu0 0.0
    %2664 = vmatprep.subr.mxu0 0.0
    %2665 = vmatpush1.msra.mxu0 0.0
    %2666 = vmatprep.subr.mxu0 0.0
    %2667 = vmatpush1.msra.mxu0 0.0
    %2668 = vmatprep.subr.mxu0 0.0
    %2669 = vmatpush1.msra.mxu0 0.0
    %2670 = vmatprep.subr.mxu0 0.0
    %2671 = vmatpush1.msra.mxu0 0.0
    %2672 = vmatprep.subr.mxu0 0.0
    %2673 = vmatpush1.msra.mxu0 0.0
    %2674 = vmatprep.mubr.f32.mxu0 0.0
    %2675 = vmatmul.mubr.f32.gmra.mrb[0].mxu0 %v2608
    %v2676 = vpop.f32.mrb[0].mxu0
    %v2677 = vadd.f32 0.0, %v2676
    %v2678 = vpop.f32.mrb[0].mxu0
    %2679 = vdwg.mxu0
    %2681 = vrot.lane.b32.xlu0 %v2343, 8
    %v2682 = vpop.permute.xlu0 %2681
    %2685 = vrot.lane.b32.xlu0 %v2510, 16
    %v2686 = vpop.permute.xlu0 %2685
    %2689 = vrot.lane.b32.xlu0 %v2677, 24
    %v2690 = vpop.permute.xlu0 %2689
    %v2692 = vsel %vm396, %v2176, %v2682
    %v2693 = vsel %vm1074, %v2692, %v2686
    %v2694 = vsel %vm1076, %v2693, %v2690
    %2696 = vrot.lane.b32.xlu0 %v1998, 96
    %v2697 = vpop.permute.xlu0 %2696
    %v2699 = vsel %vm396, %v1988, 0
    %v2701 = vsel %vm396, %v2697, 0
    %2703 = vmatprep.subr.mxu0 0.0
    %2704 = vmatpush1.xpose.msra.mxu0 %v2701
    %2705 = vmatprep.subr.mxu0 0.0
    %2706 = vmatpush1.xpose.msra.mxu0 0.0
    %2707 = vmatprep.subr.mxu0 0.0
    %2708 = vmatpush1.xpose.msra.mxu0 0.0
    %2709 = vmatprep.subr.mxu0 0.0
    %2710 = vmatpush1.xpose.msra.mxu0 0.0
    %2711 = vmatprep.subr.mxu0 0.0
    %2712 = vmatpush1.xpose.msra.mxu0 0.0
    %2713 = vmatprep.subr.mxu0 0.0
    %2714 = vmatpush1.xpose.msra.mxu0 0.0
    %2715 = vmatprep.subr.mxu0 0.0
    %2716 = vmatpush1.xpose.msra.mxu0 0.0
    %2717 = vmatprep.subr.mxu0 0.0
    %2718 = vmatpush1.xpose.msra.mxu0 0.0
    %2719 = vmatprep.subr.mxu0 0.0
    %2720 = vmatpush1.xpose.msra.mxu0 0.0
    %2721 = vmatprep.subr.mxu0 0.0
    %2722 = vmatpush1.xpose.msra.mxu0 0.0
    %2723 = vmatprep.subr.mxu0 0.0
    %2724 = vmatpush1.xpose.msra.mxu0 0.0
    %2725 = vmatprep.subr.mxu0 0.0
    %2726 = vmatpush1.xpose.msra.mxu0 0.0
    %2727 = vmatprep.subr.mxu0 0.0
    %2728 = vmatpush1.xpose.msra.mxu0 0.0
    %2729 = vmatprep.subr.mxu0 0.0
    %2730 = vmatpush1.xpose.msra.mxu0 0.0
    %2731 = vmatprep.subr.mxu0 0.0
    %2732 = vmatpush1.xpose.msra.mxu0 0.0
    %2733 = vmatprep.subr.mxu0 0.0
    %2734 = vmatpush1.xpose.msra.mxu0 0.0
    %2735 = vmatprep.subr.mxu0 0.0
    %2736 = vmatpush1.xpose.msra.mxu0 0.0
    %2737 = vmatprep.subr.mxu0 0.0
    %2738 = vmatpush1.xpose.msra.mxu0 0.0
    %2739 = vmatprep.subr.mxu0 0.0
    %2740 = vmatpush1.xpose.msra.mxu0 0.0
    %2741 = vmatprep.subr.mxu0 0.0
    %2742 = vmatpush1.xpose.msra.mxu0 0.0
    %2743 = vmatprep.subr.mxu0 0.0
    %2744 = vmatpush1.xpose.msra.mxu0 0.0
    %2745 = vmatprep.subr.mxu0 0.0
    %2746 = vmatpush1.xpose.msra.mxu0 0.0
    %2747 = vmatprep.subr.mxu0 0.0
    %2748 = vmatpush1.xpose.msra.mxu0 0.0
    %2749 = vmatprep.subr.mxu0 0.0
    %2750 = vmatpush1.xpose.msra.mxu0 0.0
    %2751 = vmatprep.subr.mxu0 0.0
    %2752 = vmatpush1.xpose.msra.mxu0 0.0
    %2753 = vmatprep.subr.mxu0 0.0
    %2754 = vmatpush1.xpose.msra.mxu0 0.0
    %2755 = vmatprep.subr.mxu0 0.0
    %2756 = vmatpush1.xpose.msra.mxu0 0.0
    %2757 = vmatprep.subr.mxu0 0.0
    %2758 = vmatpush1.xpose.msra.mxu0 0.0
    %2759 = vmatprep.subr.mxu0 0.0
    %2760 = vmatpush1.xpose.msra.mxu0 0.0
    %2761 = vmatprep.subr.mxu0 0.0
    %2762 = vmatpush1.xpose.msra.mxu0 0.0
    %2763 = vmatprep.subr.mxu0 0.0
    %2764 = vmatpush1.xpose.msra.mxu0 0.0
    %2765 = vmatprep.subr.mxu0 0.0
    %2766 = vmatpush1.xpose.msra.mxu0 0.0
    %2767 = vmatprep.mubr.f32.mxu0 0.0
    %2768 = vmatmul.mubr.f32.gmra.mrb[0].mxu0 %v2699
    %v2769 = vpop.f32.mrb[0].mxu0
    %v2770 = vadd.f32 0.0, %v2769
    %v2771 = vpop.f32.mrb[0].mxu0
    %2772 = vdwg.mxu0
    %v2773 = vsel %vm256, -1e+20, %v2770
    %v2774 = vmul.f32 %v2773, 0.17677669
    %v2775 = vsel %vm396, %v2774, -inf
    %2776 = vmax.xlane.f32.xlu0 %v2775
    %v2777 = vpop.xlane.xlu0 %2776
    %v2778 = vsub.f32 %v2774, %v2777
    %v2779 = vmul.f32 %v2778, 1.442695
    %v2780 = vpow.pop %v2779
    %v2781 = vsel %vm396, %v2780, 0.0
    %2782 = vadd.xlane.f32.xlu0 %v2781
    %v2783 = vpop.xlane.xlu0 %2782
    %v2784 = vrcp.pop %v2783
    %v2785 = vmul.f32 %v2780, %v2784
    %2787 = vrot.lane.b32.xlu0 %v2008, 64
    %v2788 = vpop.permute.xlu0 %2787
    %v2791 = vsel %vm396, %v2785, 0
    %2793 = vmatprep.subr.mxu0 0.0
    %2794 = vmatpush1.msra.mxu0 %v2788
    %2795 = vmatprep.subr.mxu0 0.0
    %2796 = vmatpush1.msra.mxu0 0.0
    %2797 = vmatprep.subr.mxu0 0.0
    %2798 = vmatpush1.msra.mxu0 0.0
    %2799 = vmatprep.subr.mxu0 0.0
    %2800 = vmatpush1.msra.mxu0 0.0
    %2801 = vmatprep.subr.mxu0 0.0
    %2802 = vmatpush1.msra.mxu0 0.0
    %2803 = vmatprep.subr.mxu0 0.0
    %2804 = vmatpush1.msra.mxu0 0.0
    %2805 = vmatprep.subr.mxu0 0.0
    %2806 = vmatpush1.msra.mxu0 0.0
    %2807 = vmatprep.subr.mxu0 0.0
    %2808 = vmatpush1.msra.mxu0 0.0
    %2809 = vmatprep.subr.mxu0 0.0
    %2810 = vmatpush1.msra.mxu0 0.0
    %2811 = vmatprep.subr.mxu0 0.0
    %2812 = vmatpush1.msra.mxu0 0.0
    %2813 = vmatprep.subr.mxu0 0.0
    %2814 = vmatpush1.msra.mxu0 0.0
    %2815 = vmatprep.subr.mxu0 0.0
    %2816 = vmatpush1.msra.mxu0 0.0
    %2817 = vmatprep.subr.mxu0 0.0
    %2818 = vmatpush1.msra.mxu0 0.0
    %2819 = vmatprep.subr.mxu0 0.0
    %2820 = vmatpush1.msra.mxu0 0.0
    %2821 = vmatprep.subr.mxu0 0.0
    %2822 = vmatpush1.msra.mxu0 0.0
    %2823 = vmatprep.subr.mxu0 0.0
    %2824 = vmatpush1.msra.mxu0 0.0
    %2825 = vmatprep.subr.mxu0 0.0
    %2826 = vmatpush1.msra.mxu0 0.0
    %2827 = vmatprep.subr.mxu0 0.0
    %2828 = vmatpush1.msra.mxu0 0.0
    %2829 = vmatprep.subr.mxu0 0.0
    %2830 = vmatpush1.msra.mxu0 0.0
    %2831 = vmatprep.subr.mxu0 0.0
    %2832 = vmatpush1.msra.mxu0 0.0
    %2833 = vmatprep.subr.mxu0 0.0
    %2834 = vmatpush1.msra.mxu0 0.0
    %2835 = vmatprep.subr.mxu0 0.0
    %2836 = vmatpush1.msra.mxu0 0.0
    %2837 = vmatprep.subr.mxu0 0.0
    %2838 = vmatpush1.msra.mxu0 0.0
    %2839 = vmatprep.subr.mxu0 0.0
    %2840 = vmatpush1.msra.mxu0 0.0
    %2841 = vmatprep.subr.mxu0 0.0
    %2842 = vmatpush1.msra.mxu0 0.0
    %2843 = vmatprep.subr.mxu0 0.0
    %2844 = vmatpush1.msra.mxu0 0.0
    %2845 = vmatprep.subr.mxu0 0.0
    %2846 = vmatpush1.msra.mxu0 0.0
    %2847 = vmatprep.subr.mxu0 0.0
    %2848 = vmatpush1.msra.mxu0 0.0
    %2849 = vmatprep.subr.mxu0 0.0
    %2850 = vmatpush1.msra.mxu0 0.0
    %2851 = vmatprep.subr.mxu0 0.0
    %2852 = vmatpush1.msra.mxu0 0.0
    %2853 = vmatprep.subr.mxu0 0.0
    %2854 = vmatpush1.msra.mxu0 0.0
    %2855 = vmatprep.subr.mxu0 0.0
    %2856 = vmatpush1.msra.mxu0 0.0
    %2857 = vmatprep.mubr.f32.mxu0 0.0
    %2858 = vmatmul.mubr.f32.gmra.mrb[0].mxu0 %v2791
    %v2859 = vpop.f32.mrb[0].mxu0
    %v2860 = vadd.f32 0.0, %v2859
    %v2861 = vpop.f32.mrb[0].mxu0
    %2862 = vdwg.mxu0
    %2863 = vrot.lane.b32.xlu0 %v1988, 120
    %v2864 = vpop.permute.xlu0 %2863
    %2865 = vrot.lane.b32.xlu0 %v1998, 88
    %v2866 = vpop.permute.xlu0 %2865
    %v2867 = vsel %vm396, %v2864, 0
    %v2869 = vsel %vm396, %v2866, 0
    %2871 = vmatprep.subr.mxu0 0.0
    %2872 = vmatpush1.xpose.msra.mxu0 %v2869
    %2873 = vmatprep.subr.mxu0 0.0
    %2874 = vmatpush1.xpose.msra.mxu0 0.0
    %2875 = vmatprep.subr.mxu0 0.0
    %2876 = vmatpush1.xpose.msra.mxu0 0.0
    %2877 = vmatprep.subr.mxu0 0.0
    %2878 = vmatpush1.xpose.msra.mxu0 0.0
    %2879 = vmatprep.subr.mxu0 0.0
    %2880 = vmatpush1.xpose.msra.mxu0 0.0
    %2881 = vmatprep.subr.mxu0 0.0
    %2882 = vmatpush1.xpose.msra.mxu0 0.0
    %2883 = vmatprep.subr.mxu0 0.0
    %2884 = vmatpush1.xpose.msra.mxu0 0.0
    %2885 = vmatprep.subr.mxu0 0.0
    %2886 = vmatpush1.xpose.msra.mxu0 0.0
    %2887 = vmatprep.subr.mxu0 0.0
    %2888 = vmatpush1.xpose.msra.mxu0 0.0
    %2889 = vmatprep.subr.mxu0 0.0
    %2890 = vmatpush1.xpose.msra.mxu0 0.0
    %2891 = vmatprep.subr.mxu0 0.0
    %2892 = vmatpush1.xpose.msra.mxu0 0.0
    %2893 = vmatprep.subr.mxu0 0.0
    %2894 = vmatpush1.xpose.msra.mxu0 0.0
    %2895 = vmatprep.subr.mxu0 0.0
    %2896 = vmatpush1.xpose.msra.mxu0 0.0
    %2897 = vmatprep.subr.mxu0 0.0
    %2898 = vmatpush1.xpose.msra.mxu0 0.0
    %2899 = vmatprep.subr.mxu0 0.0
    %2900 = vmatpush1.xpose.msra.mxu0 0.0
    %2901 = vmatprep.subr.mxu0 0.0
    %2902 = vmatpush1.xpose.msra.mxu0 0.0
    %2903 = vmatprep.subr.mxu0 0.0
    %2904 = vmatpush1.xpose.msra.mxu0 0.0
    %2905 = vmatprep.subr.mxu0 0.0
    %2906 = vmatpush1.xpose.msra.mxu0 0.0
    %2907 = vmatprep.subr.mxu0 0.0
    %2908 = vmatpush1.xpose.msra.mxu0 0.0
    %2909 = vmatprep.subr.mxu0 0.0
    %2910 = vmatpush1.xpose.msra.mxu0 0.0
    %2911 = vmatprep.subr.mxu0 0.0
    %2912 = vmatpush1.xpose.msra.mxu0 0.0
    %2913 = vmatprep.subr.mxu0 0.0
    %2914 = vmatpush1.xpose.msra.mxu0 0.0
    %2915 = vmatprep.subr.mxu0 0.0
    %2916 = vmatpush1.xpose.msra.mxu0 0.0
    %2917 = vmatprep.subr.mxu0 0.0
    %2918 = vmatpush1.xpose.msra.mxu0 0.0
    %2919 = vmatprep.subr.mxu0 0.0
    %2920 = vmatpush1.xpose.msra.mxu0 0.0
    %2921 = vmatprep.subr.mxu0 0.0
    %2922 = vmatpush1.xpose.msra.mxu0 0.0
    %2923 = vmatprep.subr.mxu0 0.0
    %2924 = vmatpush1.xpose.msra.mxu0 0.0
    %2925 = vmatprep.subr.mxu0 0.0
    %2926 = vmatpush1.xpose.msra.mxu0 0.0
    %2927 = vmatprep.subr.mxu0 0.0
    %2928 = vmatpush1.xpose.msra.mxu0 0.0
    %2929 = vmatprep.subr.mxu0 0.0
    %2930 = vmatpush1.xpose.msra.mxu0 0.0
    %2931 = vmatprep.subr.mxu0 0.0
    %2932 = vmatpush1.xpose.msra.mxu0 0.0
    %2933 = vmatprep.subr.mxu0 0.0
    %2934 = vmatpush1.xpose.msra.mxu0 0.0
    %2935 = vmatprep.mubr.f32.mxu0 0.0
    %2936 = vmatmul.mubr.f32.gmra.mrb[0].mxu0 %v2867
    %v2937 = vpop.f32.mrb[0].mxu0
    %v2938 = vadd.f32 0.0, %v2937
    %v2939 = vpop.f32.mrb[0].mxu0
    %2940 = vdwg.mxu0
    %v2941 = vsel %vm256, -1e+20, %v2938
    %v2942 = vmul.f32 %v2941, 0.17677669
    %v2943 = vsel %vm396, %v2942, -inf
    %2944 = vmax.xlane.f32.xlu0 %v2943
    %v2945 = vpop.xlane.xlu0 %2944
    %v2946 = vsub.f32 %v2942, %v2945
    %v2947 = vmul.f32 %v2946, 1.442695
    %v2948 = vpow.pop %v2947
    %v2949 = vsel %vm396, %v2948, 0.0
    %2950 = vadd.xlane.f32.xlu0 %v2949
    %v2951 = vpop.xlane.xlu0 %2950
    %v2952 = vrcp.pop %v2951
    %v2953 = vmul.f32 %v2948, %v2952
    %2954 = vrot.lane.b32.xlu0 %v2008, 56
    %v2955 = vpop.permute.xlu0 %2954
    %v2958 = vsel %vm396, %v2953, 0
    %2960 = vmatprep.subr.mxu0 0.0
    %2961 = vmatpush1.msra.mxu0 %v2955
    %2962 = vmatprep.subr.mxu0 0.0
    %2963 = vmatpush1.msra.mxu0 0.0
    %2964 = vmatprep.subr.mxu0 0.0
    %2965 = vmatpush1.msra.mxu0 0.0
    %2966 = vmatprep.subr.mxu0 0.0
    %2967 = vmatpush1.msra.mxu0 0.0
    %2968 = vmatprep.subr.mxu0 0.0
    %2969 = vmatpush1.msra.mxu0 0.0
    %2970 = vmatprep.subr.mxu0 0.0
    %2971 = vmatpush1.msra.mxu0 0.0
    %2972 = vmatprep.subr.mxu0 0.0
    %2973 = vmatpush1.msra.mxu0 0.0
    %2974 = vmatprep.subr.mxu0 0.0
    %2975 = vmatpush1.msra.mxu0 0.0
    %2976 = vmatprep.subr.mxu0 0.0
    %2977 = vmatpush1.msra.mxu0 0.0
    %2978 = vmatprep.subr.mxu0 0.0
    %2979 = vmatpush1.msra.mxu0 0.0
    %2980 = vmatprep.subr.mxu0 0.0
    %2981 = vmatpush1.msra.mxu0 0.0
    %2982 = vmatprep.subr.mxu0 0.0
    %2983 = vmatpush1.msra.mxu0 0.0
    %2984 = vmatprep.subr.mxu0 0.0
    %2985 = vmatpush1.msra.mxu0 0.0
    %2986 = vmatprep.subr.mxu0 0.0
    %2987 = vmatpush1.msra.mxu0 0.0
    %2988 = vmatprep.subr.mxu0 0.0
    %2989 = vmatpush1.msra.mxu0 0.0
    %2990 = vmatprep.subr.mxu0 0.0
    %2991 = vmatpush1.msra.mxu0 0.0
    %2992 = vmatprep.subr.mxu0 0.0
    %2993 = vmatpush1.msra.mxu0 0.0
    %2994 = vmatprep.subr.mxu0 0.0
    %2995 = vmatpush1.msra.mxu0 0.0
    %2996 = vmatprep.subr.mxu0 0.0
    %2997 = vmatpush1.msra.mxu0 0.0
    %2998 = vmatprep.subr.mxu0 0.0
    %2999 = vmatpush1.msra.mxu0 0.0
    %3000 = vmatprep.subr.mxu0 0.0
    %3001 = vmatpush1.msra.mxu0 0.0
    %3002 = vmatprep.subr.mxu0 0.0
    %3003 = vmatpush1.msra.mxu0 0.0
    %3004 = vmatprep.subr.mxu0 0.0
    %3005 = vmatpush1.msra.mxu0 0.0
    %3006 = vmatprep.subr.mxu0 0.0
    %3007 = vmatpush1.msra.mxu0 0.0
    %3008 = vmatprep.subr.mxu0 0.0
    %3009 = vmatpush1.msra.mxu0 0.0
    %3010 = vmatprep.subr.mxu0 0.0
    %3011 = vmatpush1.msra.mxu0 0.0
    %3012 = vmatprep.subr.mxu0 0.0
    %3013 = vmatpush1.msra.mxu0 0.0
    %3014 = vmatprep.subr.mxu0 0.0
    %3015 = vmatpush1.msra.mxu0 0.0
    %3016 = vmatprep.subr.mxu0 0.0
    %3017 = vmatpush1.msra.mxu0 0.0
    %3018 = vmatprep.subr.mxu0 0.0
    %3019 = vmatpush1.msra.mxu0 0.0
    %3020 = vmatprep.subr.mxu0 0.0
    %3021 = vmatpush1.msra.mxu0 0.0
    %3022 = vmatprep.subr.mxu0 0.0
    %3023 = vmatpush1.msra.mxu0 0.0
    %3024 = vmatprep.mubr.f32.mxu0 0.0
    %3025 = vmatmul.mubr.f32.gmra.mrb[0].mxu0 %v2958
    %v3026 = vpop.f32.mrb[0].mxu0
    %v3027 = vadd.f32 0.0, %v3026
    %v3028 = vpop.f32.mrb[0].mxu0
    %3029 = vdwg.mxu0
    %3030 = vrot.lane.b32.xlu0 %v1988, 112
    %v3031 = vpop.permute.xlu0 %3030
    %3032 = vrot.lane.b32.xlu0 %v1998, 80
    %v3033 = vpop.permute.xlu0 %3032
    %v3034 = vsel %vm396, %v3031, 0
    %v3036 = vsel %vm396, %v3033, 0
    %3038 = vmatprep.subr.mxu0 0.0
    %3039 = vmatpush1.xpose.msra.mxu0 %v3036
    %3040 = vmatprep.subr.mxu0 0.0
    %3041 = vmatpush1.xpose.msra.mxu0 0.0
    %3042 = vmatprep.subr.mxu0 0.0
    %3043 = vmatpush1.xpose.msra.mxu0 0.0
    %3044 = vmatprep.subr.mxu0 0.0
    %3045 = vmatpush1.xpose.msra.mxu0 0.0
    %3046 = vmatprep.subr.mxu0 0.0
    %3047 = vmatpush1.xpose.msra.mxu0 0.0
    %3048 = vmatprep.subr.mxu0 0.0
    %3049 = vmatpush1.xpose.msra.mxu0 0.0
    %3050 = vmatprep.subr.mxu0 0.0
    %3051 = vmatpush1.xpose.msra.mxu0 0.0
    %3052 = vmatprep.subr.mxu0 0.0
    %3053 = vmatpush1.xpose.msra.mxu0 0.0
    %3054 = vmatprep.subr.mxu0 0.0
    %3055 = vmatpush1.xpose.msra.mxu0 0.0
    %3056 = vmatprep.subr.mxu0 0.0
    %3057 = vmatpush1.xpose.msra.mxu0 0.0
    %3058 = vmatprep.subr.mxu0 0.0
    %3059 = vmatpush1.xpose.msra.mxu0 0.0
    %3060 = vmatprep.subr.mxu0 0.0
    %3061 = vmatpush1.xpose.msra.mxu0 0.0
    %3062 = vmatprep.subr.mxu0 0.0
    %3063 = vmatpush1.xpose.msra.mxu0 0.0
    %3064 = vmatprep.subr.mxu0 0.0
    %3065 = vmatpush1.xpose.msra.mxu0 0.0
    %3066 = vmatprep.subr.mxu0 0.0
    %3067 = vmatpush1.xpose.msra.mxu0 0.0
    %3068 = vmatprep.subr.mxu0 0.0
    %3069 = vmatpush1.xpose.msra.mxu0 0.0
    %3070 = vmatprep.subr.mxu0 0.0
    %3071 = vmatpush1.xpose.msra.mxu0 0.0
    %3072 = vmatprep.subr.mxu0 0.0
    %3073 = vmatpush1.xpose.msra.mxu0 0.0
    %3074 = vmatprep.subr.mxu0 0.0
    %3075 = vmatpush1.xpose.msra.mxu0 0.0
    %3076 = vmatprep.subr.mxu0 0.0
    %3077 = vmatpush1.xpose.msra.mxu0 0.0
    %3078 = vmatprep.subr.mxu0 0.0
    %3079 = vmatpush1.xpose.msra.mxu0 0.0
    %3080 = vmatprep.subr.mxu0 0.0
    %3081 = vmatpush1.xpose.msra.mxu0 0.0
    %3082 = vmatprep.subr.mxu0 0.0
    %3083 = vmatpush1.xpose.msra.mxu0 0.0
    %3084 = vmatprep.subr.mxu0 0.0
    %3085 = vmatpush1.xpose.msra.mxu0 0.0
    %3086 = vmatprep.subr.mxu0 0.0
    %3087 = vmatpush1.xpose.msra.mxu0 0.0
    %3088 = vmatprep.subr.mxu0 0.0
    %3089 = vmatpush1.xpose.msra.mxu0 0.0
    %3090 = vmatprep.subr.mxu0 0.0
    %3091 = vmatpush1.xpose.msra.mxu0 0.0
    %3092 = vmatprep.subr.mxu0 0.0
    %3093 = vmatpush1.xpose.msra.mxu0 0.0
    %3094 = vmatprep.subr.mxu0 0.0
    %3095 = vmatpush1.xpose.msra.mxu0 0.0
    %3096 = vmatprep.subr.mxu0 0.0
    %3097 = vmatpush1.xpose.msra.mxu0 0.0
    %3098 = vmatprep.subr.mxu0 0.0
    %3099 = vmatpush1.xpose.msra.mxu0 0.0
    %3100 = vmatprep.subr.mxu0 0.0
    %3101 = vmatpush1.xpose.msra.mxu0 0.0
    %3102 = vmatprep.mubr.f32.mxu0 0.0
    %3103 = vmatmul.mubr.f32.gmra.mrb[0].mxu0 %v3034
    %v3104 = vpop.f32.mrb[0].mxu0
    %v3105 = vadd.f32 0.0, %v3104
    %v3106 = vpop.f32.mrb[0].mxu0
    %3107 = vdwg.mxu0
    %v3108 = vsel %vm256, -1e+20, %v3105
    %v3109 = vmul.f32 %v3108, 0.17677669
    %v3110 = vsel %vm396, %v3109, -inf
    %3111 = vmax.xlane.f32.xlu0 %v3110
    %v3112 = vpop.xlane.xlu0 %3111
    %v3113 = vsub.f32 %v3109, %v3112
    %v3114 = vmul.f32 %v3113, 1.442695
    %v3115 = vpow.pop %v3114
    %v3116 = vsel %vm396, %v3115, 0.0
    %3117 = vadd.xlane.f32.xlu0 %v3116
    %v3118 = vpop.xlane.xlu0 %3117
    %v3119 = vrcp.pop %v3118
    %v3120 = vmul.f32 %v3115, %v3119
    %3121 = vrot.lane.b32.xlu0 %v2008, 48
    %v3122 = vpop.permute.xlu0 %3121
    %v3125 = vsel %vm396, %v3120, 0
    %3127 = vmatprep.subr.mxu0 0.0
    %3128 = vmatpush1.msra.mxu0 %v3122
    %3129 = vmatprep.subr.mxu0 0.0
    %3130 = vmatpush1.msra.mxu0 0.0
    %3131 = vmatprep.subr.mxu0 0.0
    %3132 = vmatpush1.msra.mxu0 0.0
    %3133 = vmatprep.subr.mxu0 0.0
    %3134 = vmatpush1.msra.mxu0 0.0
    %3135 = vmatprep.subr.mxu0 0.0
    %3136 = vmatpush1.msra.mxu0 0.0
    %3137 = vmatprep.subr.mxu0 0.0
    %3138 = vmatpush1.msra.mxu0 0.0
    %3139 = vmatprep.subr.mxu0 0.0
    %3140 = vmatpush1.msra.mxu0 0.0
    %3141 = vmatprep.subr.mxu0 0.0
    %3142 = vmatpush1.msra.mxu0 0.0
    %3143 = vmatprep.subr.mxu0 0.0
    %3144 = vmatpush1.msra.mxu0 0.0
    %3145 = vmatprep.subr.mxu0 0.0
    %3146 = vmatpush1.msra.mxu0 0.0
    %3147 = vmatprep.subr.mxu0 0.0
    %3148 = vmatpush1.msra.mxu0 0.0
    %3149 = vmatprep.subr.mxu0 0.0
    %3150 = vmatpush1.msra.mxu0 0.0
    %3151 = vmatprep.subr.mxu0 0.0
    %3152 = vmatpush1.msra.mxu0 0.0
    %3153 = vmatprep.subr.mxu0 0.0
    %3154 = vmatpush1.msra.mxu0 0.0
    %3155 = vmatprep.subr.mxu0 0.0
    %3156 = vmatpush1.msra.mxu0 0.0
    %3157 = vmatprep.subr.mxu0 0.0
    %3158 = vmatpush1.msra.mxu0 0.0
    %3159 = vmatprep.subr.mxu0 0.0
    %3160 = vmatpush1.msra.mxu0 0.0
    %3161 = vmatprep.subr.mxu0 0.0
    %3162 = vmatpush1.msra.mxu0 0.0
    %3163 = vmatprep.subr.mxu0 0.0
    %3164 = vmatpush1.msra.mxu0 0.0
    %3165 = vmatprep.subr.mxu0 0.0
    %3166 = vmatpush1.msra.mxu0 0.0
    %3167 = vmatprep.subr.mxu0 0.0
    %3168 = vmatpush1.msra.mxu0 0.0
    %3169 = vmatprep.subr.mxu0 0.0
    %3170 = vmatpush1.msra.mxu0 0.0
    %3171 = vmatprep.subr.mxu0 0.0
    %3172 = vmatpush1.msra.mxu0 0.0
    %3173 = vmatprep.subr.mxu0 0.0
    %3174 = vmatpush1.msra.mxu0 0.0
    %3175 = vmatprep.subr.mxu0 0.0
    %3176 = vmatpush1.msra.mxu0 0.0
    %3177 = vmatprep.subr.mxu0 0.0
    %3178 = vmatpush1.msra.mxu0 0.0
    %3179 = vmatprep.subr.mxu0 0.0
    %3180 = vmatpush1.msra.mxu0 0.0
    %3181 = vmatprep.subr.mxu0 0.0
    %3182 = vmatpush1.msra.mxu0 0.0
    %3183 = vmatprep.subr.mxu0 0.0
    %3184 = vmatpush1.msra.mxu0 0.0
    %3185 = vmatprep.subr.mxu0 0.0
    %3186 = vmatpush1.msra.mxu0 0.0
    %3187 = vmatprep.subr.mxu0 0.0
    %3188 = vmatpush1.msra.mxu0 0.0
    %3189 = vmatprep.subr.mxu0 0.0
    %3190 = vmatpush1.msra.mxu0 0.0
    %3191 = vmatprep.mubr.f32.mxu0 0.0
    %3192 = vmatmul.mubr.f32.gmra.mrb[0].mxu0 %v3125
    %v3193 = vpop.f32.mrb[0].mxu0
    %v3194 = vadd.f32 0.0, %v3193
    %v3195 = vpop.f32.mrb[0].mxu0
    %3196 = vdwg.mxu0
    %3197 = vrot.lane.b32.xlu0 %v1988, 104
    %v3198 = vpop.permute.xlu0 %3197
    %3199 = vrot.lane.b32.xlu0 %v1998, 72
    %v3200 = vpop.permute.xlu0 %3199
    %v3201 = vsel %vm396, %v3198, 0
    %v3203 = vsel %vm396, %v3200, 0
    %3205 = vmatprep.subr.mxu0 0.0
    %3206 = vmatpush1.xpose.msra.mxu0 %v3203
    %3207 = vmatprep.subr.mxu0 0.0
    %3208 = vmatpush1.xpose.msra.mxu0 0.0
    %3209 = vmatprep.subr.mxu0 0.0
    %3210 = vmatpush1.xpose.msra.mxu0 0.0
    %3211 = vmatprep.subr.mxu0 0.0
    %3212 = vmatpush1.xpose.msra.mxu0 0.0
    %3213 = vmatprep.subr.mxu0 0.0
    %3214 = vmatpush1.xpose.msra.mxu0 0.0
    %3215 = vmatprep.subr.mxu0 0.0
    %3216 = vmatpush1.xpose.msra.mxu0 0.0
    %3217 = vmatprep.subr.mxu0 0.0
    %3218 = vmatpush1.xpose.msra.mxu0 0.0
    %3219 = vmatprep.subr.mxu0 0.0
    %3220 = vmatpush1.xpose.msra.mxu0 0.0
    %3221 = vmatprep.subr.mxu0 0.0
    %3222 = vmatpush1.xpose.msra.mxu0 0.0
    %3223 = vmatprep.subr.mxu0 0.0
    %3224 = vmatpush1.xpose.msra.mxu0 0.0
    %3225 = vmatprep.subr.mxu0 0.0
    %3226 = vmatpush1.xpose.msra.mxu0 0.0
    %3227 = vmatprep.subr.mxu0 0.0
    %3228 = vmatpush1.xpose.msra.mxu0 0.0
    %3229 = vmatprep.subr.mxu0 0.0
    %3230 = vmatpush1.xpose.msra.mxu0 0.0
    %3231 = vmatprep.subr.mxu0 0.0
    %3232 = vmatpush1.xpose.msra.mxu0 0.0
    %3233 = vmatprep.subr.mxu0 0.0
    %3234 = vmatpush1.xpose.msra.mxu0 0.0
    %3235 = vmatprep.subr.mxu0 0.0
    %3236 = vmatpush1.xpose.msra.mxu0 0.0
    %3237 = vmatprep.subr.mxu0 0.0
    %3238 = vmatpush1.xpose.msra.mxu0 0.0
    %3239 = vmatprep.subr.mxu0 0.0
    %3240 = vmatpush1.xpose.msra.mxu0 0.0
    %3241 = vmatprep.subr.mxu0 0.0
    %3242 = vmatpush1.xpose.msra.mxu0 0.0
    %3243 = vmatprep.subr.mxu0 0.0
    %3244 = vmatpush1.xpose.msra.mxu0 0.0
    %3245 = vmatprep.subr.mxu0 0.0
    %3246 = vmatpush1.xpose.msra.mxu0 0.0
    %3247 = vmatprep.subr.mxu0 0.0
    %3248 = vmatpush1.xpose.msra.mxu0 0.0
    %3249 = vmatprep.subr.mxu0 0.0
    %3250 = vmatpush1.xpose.msra.mxu0 0.0
    %3251 = vmatprep.subr.mxu0 0.0
    %3252 = vmatpush1.xpose.msra.mxu0 0.0
    %3253 = vmatprep.subr.mxu0 0.0
    %3254 = vmatpush1.xpose.msra.mxu0 0.0
    %3255 = vmatprep.subr.mxu0 0.0
    %3256 = vmatpush1.xpose.msra.mxu0 0.0
    %3257 = vmatprep.subr.mxu0 0.0
    %3258 = vmatpush1.xpose.msra.mxu0 0.0
    %3259 = vmatprep.subr.mxu0 0.0
    %3260 = vmatpush1.xpose.msra.mxu0 0.0
    %3261 = vmatprep.subr.mxu0 0.0
    %3262 = vmatpush1.xpose.msra.mxu0 0.0
    %3263 = vmatprep.subr.mxu0 0.0
    %3264 = vmatpush1.xpose.msra.mxu0 0.0
    %3265 = vmatprep.subr.mxu0 0.0
    %3266 = vmatpush1.xpose.msra.mxu0 0.0
    %3267 = vmatprep.subr.mxu0 0.0
    %3268 = vmatpush1.xpose.msra.mxu0 0.0
    %3269 = vmatprep.mubr.f32.mxu0 0.0
    %3270 = vmatmul.mubr.f32.gmra.mrb[0].mxu0 %v3201
    %v3271 = vpop.f32.mrb[0].mxu0
    %v3272 = vadd.f32 0.0, %v3271
    %v3273 = vpop.f32.mrb[0].mxu0
    %3274 = vdwg.mxu0
    %v3275 = vsel %vm256, -1e+20, %v3272
    %v3276 = vmul.f32 %v3275, 0.17677669
    %v3277 = vsel %vm396, %v3276, -inf
    %3278 = vmax.xlane.f32.xlu0 %v3277
    %v3279 = vpop.xlane.xlu0 %3278
    %v3280 = vsub.f32 %v3276, %v3279
    %v3281 = vmul.f32 %v3280, 1.442695
    %v3282 = vpow.pop %v3281
    %v3283 = vsel %vm396, %v3282, 0.0
    %3284 = vadd.xlane.f32.xlu0 %v3283
    %v3285 = vpop.xlane.xlu0 %3284
    %v3286 = vrcp.pop %v3285
    %v3287 = vmul.f32 %v3282, %v3286
    %3288 = vrot.lane.b32.xlu0 %v2008, 40
    %v3289 = vpop.permute.xlu0 %3288
    %v3292 = vsel %vm396, %v3287, 0
    %3294 = vmatprep.subr.mxu0 0.0
    %3295 = vmatpush1.msra.mxu0 %v3289
    %3296 = vmatprep.subr.mxu0 0.0
    %3297 = vmatpush1.msra.mxu0 0.0
    %3298 = vmatprep.subr.mxu0 0.0
    %3299 = vmatpush1.msra.mxu0 0.0
    %3300 = vmatprep.subr.mxu0 0.0
    %3301 = vmatpush1.msra.mxu0 0.0
    %3302 = vmatprep.subr.mxu0 0.0
    %3303 = vmatpush1.msra.mxu0 0.0
    %3304 = vmatprep.subr.mxu0 0.0
    %3305 = vmatpush1.msra.mxu0 0.0
    %3306 = vmatprep.subr.mxu0 0.0
    %3307 = vmatpush1.msra.mxu0 0.0
    %3308 = vmatprep.subr.mxu0 0.0
    %3309 = vmatpush1.msra.mxu0 0.0
    %3310 = vmatprep.subr.mxu0 0.0
    %3311 = vmatpush1.msra.mxu0 0.0
    %3312 = vmatprep.subr.mxu0 0.0
    %3313 = vmatpush1.msra.mxu0 0.0
    %3314 = vmatprep.subr.mxu0 0.0
    %3315 = vmatpush1.msra.mxu0 0.0
    %3316 = vmatprep.subr.mxu0 0.0
    %3317 = vmatpush1.msra.mxu0 0.0
    %3318 = vmatprep.subr.mxu0 0.0
    %3319 = vmatpush1.msra.mxu0 0.0
    %3320 = vmatprep.subr.mxu0 0.0
    %3321 = vmatpush1.msra.mxu0 0.0
    %3322 = vmatprep.subr.mxu0 0.0
    %3323 = vmatpush1.msra.mxu0 0.0
    %3324 = vmatprep.subr.mxu0 0.0
    %3325 = vmatpush1.msra.mxu0 0.0
    %3326 = vmatprep.subr.mxu0 0.0
    %3327 = vmatpush1.msra.mxu0 0.0
    %3328 = vmatprep.subr.mxu0 0.0
    %3329 = vmatpush1.msra.mxu0 0.0
    %3330 = vmatprep.subr.mxu0 0.0
    %3331 = vmatpush1.msra.mxu0 0.0
    %3332 = vmatprep.subr.mxu0 0.0
    %3333 = vmatpush1.msra.mxu0 0.0
    %3334 = vmatprep.subr.mxu0 0.0
    %3335 = vmatpush1.msra.mxu0 0.0
    %3336 = vmatprep.subr.mxu0 0.0
    %3337 = vmatpush1.msra.mxu0 0.0
    %3338 = vmatprep.subr.mxu0 0.0
    %3339 = vmatpush1.msra.mxu0 0.0
    %3340 = vmatprep.subr.mxu0 0.0
    %3341 = vmatpush1.msra.mxu0 0.0
    %3342 = vmatprep.subr.mxu0 0.0
    %3343 = vmatpush1.msra.mxu0 0.0
    %3344 = vmatprep.subr.mxu0 0.0
    %3345 = vmatpush1.msra.mxu0 0.0
    %3346 = vmatprep.subr.mxu0 0.0
    %3347 = vmatpush1.msra.mxu0 0.0
    %3348 = vmatprep.subr.mxu0 0.0
    %3349 = vmatpush1.msra.mxu0 0.0
    %3350 = vmatprep.subr.mxu0 0.0
    %3351 = vmatpush1.msra.mxu0 0.0
    %3352 = vmatprep.subr.mxu0 0.0
    %3353 = vmatpush1.msra.mxu0 0.0
    %3354 = vmatprep.subr.mxu0 0.0
    %3355 = vmatpush1.msra.mxu0 0.0
    %3356 = vmatprep.subr.mxu0 0.0
    %3357 = vmatpush1.msra.mxu0 0.0
    %3358 = vmatprep.mubr.f32.mxu0 0.0
    %3359 = vmatmul.mubr.f32.gmra.mrb[0].mxu0 %v3292
    %v3360 = vpop.f32.mrb[0].mxu0
    %v3361 = vadd.f32 0.0, %v3360
    %v3362 = vpop.f32.mrb[0].mxu0
    %3363 = vdwg.mxu0
    %3365 = vrot.lane.b32.xlu0 %v3027, 8
    %v3366 = vpop.permute.xlu0 %3365
    %3369 = vrot.lane.b32.xlu0 %v3194, 16
    %v3370 = vpop.permute.xlu0 %3369
    %3373 = vrot.lane.b32.xlu0 %v3361, 24
    %v3374 = vpop.permute.xlu0 %3373
    %v3376 = vsel %vm396, %v2860, %v3366
    %v3377 = vsel %vm1074, %v3376, %v3370
    %v3378 = vsel %vm1076, %v3377, %v3374
    %v3380 = vlaneseq
    %v3381 = vshrl.u32 %v3380, 7
    %v3382 = vsub.s32 0, %v3381
    %v3383 = vrot.slane %v278, %v3382
    %v3386 = vsel %vm311, %v2694, 0
    %v3389 = vsel %vm311, %v3378, 0
    %3391 = vmatprep.subr.mxu0 0.0
    %3392 = vmatpush1.msra.mxu0 %v274
    %3393 = vmatprep.subr.mxu0 0.0
    %3394 = vmatpush1.msra.mxu0 %v275
    %3395 = vmatprep.subr.mxu0 0.0
    %3396 = vmatpush1.msra.mxu0 %v276
    %3397 = vmatprep.subr.mxu0 0.0
    %3398 = vmatpush1.msra.mxu0 %v277
    %3399 = vmatprep.subr.mxu0 0.0
    %3400 = vmatpush1.msra.mxu0 0.0
    %3401 = vmatprep.subr.mxu0 0.0
    %3402 = vmatpush1.msra.mxu0 0.0
    %3403 = vmatprep.subr.mxu0 0.0
    %3404 = vmatpush1.msra.mxu0 0.0
    %3405 = vmatprep.subr.mxu0 0.0
    %3406 = vmatpush1.msra.mxu0 0.0
    %3407 = vmatprep.subr.mxu0 0.0
    %3408 = vmatpush1.msra.mxu0 0.0
    %3409 = vmatprep.subr.mxu0 0.0
    %3410 = vmatpush1.msra.mxu0 0.0
    %3411 = vmatprep.subr.mxu0 0.0
    %3412 = vmatpush1.msra.mxu0 0.0
    %3413 = vmatprep.subr.mxu0 0.0
    %3414 = vmatpush1.msra.mxu0 0.0
    %3415 = vmatprep.subr.mxu0 0.0
    %3416 = vmatpush1.msra.mxu0 0.0
    %3417 = vmatprep.subr.mxu0 0.0
    %3418 = vmatpush1.msra.mxu0 0.0
    %3419 = vmatprep.subr.mxu0 0.0
    %3420 = vmatpush1.msra.mxu0 0.0
    %3421 = vmatprep.subr.mxu0 0.0
    %3422 = vmatpush1.msra.mxu0 0.0
    %3423 = vmatprep.subr.mxu0 0.0
    %3424 = vmatpush1.msra.mxu0 0.0
    %3425 = vmatprep.subr.mxu0 0.0
    %3426 = vmatpush1.msra.mxu0 0.0
    %3427 = vmatprep.subr.mxu0 0.0
    %3428 = vmatpush1.msra.mxu0 0.0
    %3429 = vmatprep.subr.mxu0 0.0
    %3430 = vmatpush1.msra.mxu0 0.0
    %3431 = vmatprep.subr.mxu0 0.0
    %3432 = vmatpush1.msra.mxu0 0.0
    %3433 = vmatprep.subr.mxu0 0.0
    %3434 = vmatpush1.msra.mxu0 0.0
    %3435 = vmatprep.subr.mxu0 0.0
    %3436 = vmatpush1.msra.mxu0 0.0
    %3437 = vmatprep.subr.mxu0 0.0
    %3438 = vmatpush1.msra.mxu0 0.0
    %3439 = vmatprep.subr.mxu0 0.0
    %3440 = vmatpush1.msra.mxu0 0.0
    %3441 = vmatprep.subr.mxu0 0.0
    %3442 = vmatpush1.msra.mxu0 0.0
    %3443 = vmatprep.subr.mxu0 0.0
    %3444 = vmatpush1.msra.mxu0 0.0
    %3445 = vmatprep.subr.mxu0 0.0
    %3446 = vmatpush1.msra.mxu0 0.0
    %3447 = vmatprep.subr.mxu0 0.0
    %3448 = vmatpush1.msra.mxu0 0.0
    %3449 = vmatprep.subr.mxu0 0.0
    %3450 = vmatpush1.msra.mxu0 0.0
    %3451 = vmatprep.subr.mxu0 0.0
    %3452 = vmatpush1.msra.mxu0 0.0
    %3453 = vmatprep.subr.mxu0 0.0
    %3454 = vmatpush1.msra.mxu0 0.0
    %3455 = vmatprep.mubr.f32.mxu0 0.0
    %3456 = vmatmul.mubr.f32.gmra.mrb[0].mxu0 %v3386
    %v3457 = vpop.f32.mrb[0].mxu0
    %v3458 = vadd.f32 %v3383, %v3457
    %v3459 = vpop.f32.mrb[0].mxu0
    %3460 = vmatprep.mubr.f32.mxu0 0.0
    %3461 = vmatmul.mubr.f32.gmra.mrb[0].mxu0 %v3389
    %v3462 = vpop.f32.mrb[0].mxu0
    %v3463 = vadd.f32 %v3383, %v3462
    %v3464 = vpop.f32.mrb[0].mxu0
    %3465 = vdwg.mxu0
    %v3466 = vadd.f32 %v3458, %v1890
    %v3467 = vadd.f32 %v3463, %v1891
    %v3468 = vsel %vm311, %v3466, 0.0
    %3469 = vadd.xlane.f32.xlu0 %v3468
    %v3470 = vpop.xlane.xlu0 %3469
    %v3471 = vsel %vm311, %v3467, 0.0
    %3472 = vadd.xlane.f32.xlu0 %v3471
    %v3473 = vpop.xlane.xlu0 %3472
    %v3474 = vmul.f32 %v3470, %v1855
    %v3475 = vmul.f32 %v3473, %v1855
    %v3476 = vsub.f32 %v3466, %v3474
    %v3477 = vsub.f32 %v3467, %v3475
    %v3478 = vmul.f32 %v3476, %v3476
    %v3479 = vmul.f32 %v3477, %v3477
    %v3480 = vsel %vm311, %v3478, 0.0
    %3481 = vadd.xlane.f32.xlu0 %v3480
    %v3482 = vpop.xlane.xlu0 %3481
    %v3483 = vsel %vm311, %v3479, 0.0
    %3484 = vadd.xlane.f32.xlu0 %v3483
    %v3485 = vpop.xlane.xlu0 %3484
    %v3486 = vmul.f32 %v3482, %v1855
    %v3487 = vmul.f32 %v3485, %v1855
    %v3488 = vadd.f32 %v3486, 1e-05
    %v3489 = vadd.f32 %v3487, 1e-05
    %v3490 = vrsqrt.pop %v3488
    %v3491 = vrsqrt.pop %v3489
    %v3492 = vmul.f32 %v3476, %v3490
    %v3493 = vmul.f32 %v3477, %v3491
    %v3495 = vlaneseq
    %v3496 = vshrl.u32 %v3495, 7
    %v3497 = vsub.s32 0, %v3496
    %v3498 = vrot.slane %v279, %v3497
    %v3500 = vmul.f32 %v3492, %v3498
    %v3501 = vmul.f32 %v3493, %v3498
    %v3503 = vlaneseq
    %v3504 = vshrl.u32 %v3503, 7
    %v3505 = vsub.s32 0, %v3504
    %v3506 = vrot.slane %v280, %v3505
    %v3508 = vadd.f32 %v3500, %v3506
    %v3509 = vadd.f32 %v3501, %v3506
    %v3511 = vlaneseq
    %v3512 = vshrl.u32 %v3511, 7
    %v3513 = vsub.s32 0, %v3512
    %v3514 = vrot.slane %v285, %v3513
    %v3517 = vsel %vm311, %v3508, 0
    %v3520 = vsel %vm311, %v3509, 0
    %3522 = vmatprep.subr.mxu0 0.0
    %3523 = vmatpush1.msra.mxu0 %v281
    %3524 = vmatprep.subr.mxu0 0.0
    %3525 = vmatpush1.msra.mxu0 %v282
    %3526 = vmatprep.subr.mxu0 0.0
    %3527 = vmatpush1.msra.mxu0 %v283
    %3528 = vmatprep.subr.mxu0 0.0
    %3529 = vmatpush1.msra.mxu0 %v284
    %3530 = vmatprep.subr.mxu0 0.0
    %3531 = vmatpush1.msra.mxu0 0.0
    %3532 = vmatprep.subr.mxu0 0.0
    %3533 = vmatpush1.msra.mxu0 0.0
    %3534 = vmatprep.subr.mxu0 0.0
    %3535 = vmatpush1.msra.mxu0 0.0
    %3536 = vmatprep.subr.mxu0 0.0
    %3537 = vmatpush1.msra.mxu0 0.0
    %3538 = vmatprep.subr.mxu0 0.0
    %3539 = vmatpush1.msra.mxu0 0.0
    %3540 = vmatprep.subr.mxu0 0.0
    %3541 = vmatpush1.msra.mxu0 0.0
    %3542 = vmatprep.subr.mxu0 0.0
    %3543 = vmatpush1.msra.mxu0 0.0
    %3544 = vmatprep.subr.mxu0 0.0
    %3545 = vmatpush1.msra.mxu0 0.0
    %3546 = vmatprep.subr.mxu0 0.0
    %3547 = vmatpush1.msra.mxu0 0.0
    %3548 = vmatprep.subr.mxu0 0.0
    %3549 = vmatpush1.msra.mxu0 0.0
    %3550 = vmatprep.subr.mxu0 0.0
    %3551 = vmatpush1.msra.mxu0 0.0
    %3552 = vmatprep.subr.mxu0 0.0
    %3553 = vmatpush1.msra.mxu0 0.0
    %3554 = vmatprep.subr.mxu0 0.0
    %3555 = vmatpush1.msra.mxu0 0.0
    %3556 = vmatprep.subr.mxu0 0.0
    %3557 = vmatpush1.msra.mxu0 0.0
    %3558 = vmatprep.subr.mxu0 0.0
    %3559 = vmatpush1.msra.mxu0 0.0
    %3560 = vmatprep.subr.mxu0 0.0
    %3561 = vmatpush1.msra.mxu0 0.0
    %3562 = vmatprep.subr.mxu0 0.0
    %3563 = vmatpush1.msra.mxu0 0.0
    %3564 = vmatprep.subr.mxu0 0.0
    %3565 = vmatpush1.msra.mxu0 0.0
    %3566 = vmatprep.subr.mxu0 0.0
    %3567 = vmatpush1.msra.mxu0 0.0
    %3568 = vmatprep.subr.mxu0 0.0
    %3569 = vmatpush1.msra.mxu0 0.0
    %3570 = vmatprep.subr.mxu0 0.0
    %3571 = vmatpush1.msra.mxu0 0.0
    %3572 = vmatprep.subr.mxu0 0.0
    %3573 = vmatpush1.msra.mxu0 0.0
    %3574 = vmatprep.subr.mxu0 0.0
    %3575 = vmatpush1.msra.mxu0 0.0
    %3576 = vmatprep.subr.mxu0 0.0
    %3577 = vmatpush1.msra.mxu0 0.0
    %3578 = vmatprep.subr.mxu0 0.0
    %3579 = vmatpush1.msra.mxu0 0.0
    %3580 = vmatprep.subr.mxu0 0.0
    %3581 = vmatpush1.msra.mxu0 0.0
    %3582 = vmatprep.subr.mxu0 0.0
    %3583 = vmatpush1.msra.mxu0 0.0
    %3584 = vmatprep.subr.mxu0 0.0
    %3585 = vmatpush1.msra.mxu0 0.0
    %3586 = vmatprep.mubr.f32.mxu0 0.0
    %3587 = vmatmul.mubr.f32.gmra.mrb[0].mxu0 %v3517
    %v3588 = vpop.f32.mrb[0].mxu0
    %v3589 = vadd.f32 %v3514, %v3588
    %v3590 = vpop.f32.mrb[0].mxu0
    %3591 = vmatprep.mubr.f32.mxu0 0.0
    %3592 = vmatmul.mubr.f32.gmra.mrb[0].mxu0 %v3520
    %v3593 = vpop.f32.mrb[0].mxu0
    %v3594 = vadd.f32 %v3514, %v3593
    %v3595 = vpop.f32.mrb[0].mxu0
    %3596 = vdwg.mxu0
    %v3597 = vmax.f32 %v3589, 0.0
    %v3598 = vmax.f32 %v3594, 0.0
    %v3600 = vlaneseq
    %v3601 = vshrl.u32 %v3600, 7
    %v3602 = vsub.s32 0, %v3601
    %v3603 = vrot.slane %v302, %v3602
    %3605 = vmatprep.subr.mxu0 0.0
    %3606 = vmatpush1.msra.mxu0 %v286
    %3607 = vmatprep.subr.mxu0 0.0
    %3608 = vmatpush1.msra.mxu0 %v287
    %3609 = vmatprep.subr.mxu0 0.0
    %3610 = vmatpush1.msra.mxu0 %v288
    %3611 = vmatprep.subr.mxu0 0.0
    %3612 = vmatpush1.msra.mxu0 %v289
    %3613 = vmatprep.subr.mxu0 0.0
    %3614 = vmatpush1.msra.mxu0 %v290
    %3615 = vmatprep.subr.mxu0 0.0
    %3616 = vmatpush1.msra.mxu0 %v291
    %3617 = vmatprep.subr.mxu0 0.0
    %3618 = vmatpush1.msra.mxu0 %v292
    %3619 = vmatprep.subr.mxu0 0.0
    %3620 = vmatpush1.msra.mxu0 %v293
    %3621 = vmatprep.subr.mxu0 0.0
    %3622 = vmatpush1.msra.mxu0 %v294
    %3623 = vmatprep.subr.mxu0 0.0
    %3624 = vmatpush1.msra.mxu0 %v295
    %3625 = vmatprep.subr.mxu0 0.0
    %3626 = vmatpush1.msra.mxu0 %v296
    %3627 = vmatprep.subr.mxu0 0.0
    %3628 = vmatpush1.msra.mxu0 %v297
    %3629 = vmatprep.subr.mxu0 0.0
    %3630 = vmatpush1.msra.mxu0 %v298
    %3631 = vmatprep.subr.mxu0 0.0
    %3632 = vmatpush1.msra.mxu0 %v299
    %3633 = vmatprep.subr.mxu0 0.0
    %3634 = vmatpush1.msra.mxu0 %v300
    %3635 = vmatprep.subr.mxu0 0.0
    %3636 = vmatpush1.msra.mxu0 %v301
    %3637 = vmatprep.subr.mxu0 0.0
    %3638 = vmatpush1.msra.mxu0 0.0
    %3639 = vmatprep.subr.mxu0 0.0
    %3640 = vmatpush1.msra.mxu0 0.0
    %3641 = vmatprep.subr.mxu0 0.0
    %3642 = vmatpush1.msra.mxu0 0.0
    %3643 = vmatprep.subr.mxu0 0.0
    %3644 = vmatpush1.msra.mxu0 0.0
    %3645 = vmatprep.subr.mxu0 0.0
    %3646 = vmatpush1.msra.mxu0 0.0
    %3647 = vmatprep.subr.mxu0 0.0
    %3648 = vmatpush1.msra.mxu0 0.0
    %3649 = vmatprep.subr.mxu0 0.0
    %3650 = vmatpush1.msra.mxu0 0.0
    %3651 = vmatprep.subr.mxu0 0.0
    %3652 = vmatpush1.msra.mxu0 0.0
    %3653 = vmatprep.subr.mxu0 0.0
    %3654 = vmatpush1.msra.mxu0 0.0
    %3655 = vmatprep.subr.mxu0 0.0
    %3656 = vmatpush1.msra.mxu0 0.0
    %3657 = vmatprep.subr.mxu0 0.0
    %3658 = vmatpush1.msra.mxu0 0.0
    %3659 = vmatprep.subr.mxu0 0.0
    %3660 = vmatpush1.msra.mxu0 0.0
    %3661 = vmatprep.subr.mxu0 0.0
    %3662 = vmatpush1.msra.mxu0 0.0
    %3663 = vmatprep.subr.mxu0 0.0
    %3664 = vmatpush1.msra.mxu0 0.0
    %3665 = vmatprep.subr.mxu0 0.0
    %3666 = vmatpush1.msra.mxu0 0.0
    %3667 = vmatprep.subr.mxu0 0.0
    %3668 = vmatpush1.msra.mxu0 0.0
    %3669 = vmatprep.mubr.f32.mxu0 0.0
    %3670 = vmatmul.mubr.f32.gmra.mrb[0].mxu0 %v3597
    %v3671 = vpop.f32.mrb[0].mxu0
    %v3672 = vadd.f32 %v3603, %v3671
    %v3673 = vpop.f32.mrb[0].mxu0
    %3674 = vmatprep.mubr.f32.mxu0 0.0
    %3675 = vmatmul.mubr.f32.gmra.mrb[0].mxu0 %v3598
    %v3676 = vpop.f32.mrb[0].mxu0
    %v3677 = vadd.f32 %v3603, %v3676
    %v3678 = vpop.f32.mrb[0].mxu0
    %3679 = vdwg.mxu0
    %v3680 = vadd.f32 %v3672, %v3508
    %v3681 = vadd.f32 %v3677, %v3509
    %v3682 = vsel %vm311, %v3680, 0.0
    %3683 = vadd.xlane.f32.xlu0 %v3682
    %v3684 = vpop.xlane.xlu0 %3683
    %v3685 = vsel %vm311, %v3681, 0.0
    %3686 = vadd.xlane.f32.xlu0 %v3685
    %v3687 = vpop.xlane.xlu0 %3686
    %v3688 = vmul.f32 %v3684, %v1855
    %v3689 = vmul.f32 %v3687, %v1855
    %v3690 = vsub.f32 %v3680, %v3688
    %v3691 = vsub.f32 %v3681, %v3689
    %v3692 = vmul.f32 %v3690, %v3690
    %v3693 = vmul.f32 %v3691, %v3691
    %v3694 = vsel %vm311, %v3692, 0.0
    %3695 = vadd.xlane.f32.xlu0 %v3694
    %v3696 = vpop.xlane.xlu0 %3695
    %v3697 = vsel %vm311, %v3693, 0.0
    %3698 = vadd.xlane.f32.xlu0 %v3697
    %v3699 = vpop.xlane.xlu0 %3698
    %v3700 = vmul.f32 %v3696, %v1855
    %v3701 = vmul.f32 %v3699, %v1855
    %v3702 = vadd.f32 %v3700, 1e-05
    %v3703 = vadd.f32 %v3701, 1e-05
    %v3704 = vrsqrt.pop %v3702
    %v3705 = vrsqrt.pop %v3703
    %v3706 = vmul.f32 %v3690, %v3704
    %v3707 = vmul.f32 %v3691, %v3705
    %v3709 = vlaneseq
    %v3710 = vshrl.u32 %v3709, 7
    %v3711 = vsub.s32 0, %v3710
    %v3712 = vrot.slane %v303, %v3711
    %v3714 = vmul.f32 %v3706, %v3712
    %v3715 = vmul.f32 %v3707, %v3712
    %v3717 = vlaneseq
    %v3718 = vshrl.u32 %v3717, 7
    %v3719 = vsub.s32 0, %v3718
    %v3720 = vrot.slane %v304, %v3719
    %v3722 = vadd.f32 %v3714, %v3720
    %v3723 = vadd.f32 %v3715, %v3720
    %3724 = vst.msk [vmem:[#allocation23] sm:$0xff] %vm311, %v3722
    %3725 = vst.msk [vmem:[#allocation23 + $0x8] sm:$0xff] %vm311, %v3723
    // Predicated region
    $region146: #{decoder_block.1} parent=1 // pred_check
      _
    $region147: #{decoder_block.1} parent=1 // pred_check_branch
      %3727 = sbr.rel (0) target = $region149
    $region148: #{decoder_block.1} parent=1 // pred_region
      %s3729 = ssub.s32 256, 256
      %3730 = vsyncadd [#allocation4], %s3729
      %s3731 = sshll.u32 [#allocation23], 4
      %s3732 = int_to_ptr.vmem [resolvable:$true] %s3731
      %3737 = dma.vmem_to_hbm [thread:$0]  %s3732, 256, %s23, [#allocation4], 128, 128, 8
    $region149: #{decoder_block.1} parent=1 // pred_fallthru
      _
    // Predicated region
    $region150: #{decoder_block.1} parent=1 // pred_check
      _
    $region151: #{decoder_block.1} parent=1 // pred_check_branch
      %3739 = sbr.rel (0) target = $region153
    $region152: #{decoder_block.1} parent=1 // pred_region
      %3740 = dma.done [#allocation4], 256
    $region153: #{decoder_block.1} parent=1 // pred_fallthru
      _
    %3741 = vsyncpa [#allocation3], 1
    %3742 = vsyncpa [#allocation6], 1
    %3743 = vsyncpa [#allocation9], 1
    %3744 = vsyncpa [#allocation12], 1
    %3745 = vsyncpa [#allocation15], 1
    %3746 = vsyncpa [#allocation18], 1
    %3747 = vsyncpa [#allocation21], 1
    %3748 = vsyncpa [#allocation4], 1

</llo_original>
